<compile_context>
chip_gen: v7x
topology: tpu7x:2x2x1
jax: 0.10.0
libtpu: 0.0.40
codegen_flags: <defaults>
</compile_context>

<pallas_src>
import functools
import math

import numpy as np
import jax
import jax.numpy as jnp
from jax.experimental import pallas as pl
from jax.experimental.pallas import tpu as pltpu

NEG_SLOPE = 0.01   # nn.LeakyReLU default
_LANE = 128
_SUBLANE = 8


def _round_up(x, m):
    return (x + m - 1) // m * m


def _vmem_limit_bytes():
    """Per-chip scoped VMEM budget: ~96 MiB on 128-MiB chips (v5e/v6e), ~48 MiB on v7x."""
    try:
        cap = int(pltpu.get_tpu_info().vmem_capacity_bytes)
        return min((cap * 3) // 4, 96 * 1024 * 1024)
    except Exception:
        return 64 * 1024 * 1024


def _pick_tm(n, c_pad, vmem_budget):
    """Largest row tile in {512, 256, 128} whose double-buffered (tm, n) streams plus
    resident k/v stay comfortably inside the scoped VMEM budget."""
    n_lane = _round_up(n, _LANE)
    for tm in (512, 256, 128):
        if n_lane % tm != 0:
            continue
        need = (2 * tm * n_lane * 4        # a_norm / alpha tiles (f32, double-buffered)
                + 2 * tm * n_lane          # int8 mask tiles
                + 2 * n_lane * c_pad * 4   # resident k + v
                + 10 * tm * c_pad * 4)     # q / skip / out tiles
        if need <= int(vmem_budget * 0.6):
            return tm
    return _LANE


# --------------------------------------------------------------------------
# Kernel 1 (tiled path): GCN aggregate -> LeakyReLU -> q/k/v/skip projections
# --------------------------------------------------------------------------
def _gcn_proj_kernel(xw_ref, an_ref, bg_ref,
                     wq_ref, bq_ref, wk_ref, bk_ref,
                     wv_ref, bv_ref, ws_ref, bs_ref,
                     q_ref, k_ref, v_ref, skip_ref):
    # h = LeakyReLU(A_norm @ (X Wg) + bg); Dropout(p=0) is identity.
    h = jnp.dot(an_ref[...], xw_ref[...],
                preferred_element_type=jnp.float32) + bg_ref[...]
    h = jnp.where(h >= 0, h, NEG_SLOPE * h)
    q_ref[...] = jnp.dot(h, wq_ref[...], preferred_element_type=jnp.float32) + bq_ref[...]
    k_ref[...] = jnp.dot(h, wk_ref[...], preferred_element_type=jnp.float32) + bk_ref[...]
    v_ref[...] = jnp.dot(h, wv_ref[...], preferred_element_type=jnp.float32) + bv_ref[...]
    skip_ref[...] = jnp.dot(h, ws_ref[...], preferred_element_type=jnp.float32) + bs_ref[...]


# --------------------------------------------------------------------------
# Kernel 2 (tiled path): global edge-score statistics -> coef = scale / std
# --------------------------------------------------------------------------
def _attn_stats_kernel(scale_param, out_channels, num_edges,
                       q_ref, k_ref, m_ref, coef_ref, acc_ref):
    t = pl.program_id(0)

    @pl.when(t == 0)
    def _init():
        acc_ref[0] = jnp.float32(0.0)
        acc_ref[1] = jnp.float32(0.0)

    # s[i, j] = (q_i . k_j) / sqrt(C)   (query_i * key_j in PyG message())
    s = jax.lax.dot_general(q_ref[...], k_ref[...], (((1,), (1,)), ((), ())),
                            preferred_element_type=jnp.float32)
    s = s * jnp.float32(1.0 / math.sqrt(out_channels))
    sm = s * m_ref[...].astype(jnp.float32)
    acc_ref[0] = acc_ref[0] + jnp.sum(sm)        # S1 = sum(s * m)
    acc_ref[1] = acc_ref[1] + jnp.sum(sm * s)    # S2 = sum(s^2 * m)

    @pl.when(t == pl.num_programs(0) - 1)
    def _finalize():
        # Unbiased variance over the E edge scores (single pass).
        # TODO(synk): cancellation-prone for very large E / large score mean;
        # switch to per-tile mean subtraction before scaling up.
        e = jnp.float32(max(num_edges, 1))
        denom = jnp.float32(max(num_edges - 1, 1))
        s1 = acc_ref[0]
        var = (acc_ref[1] - s1 * s1 / e) / denom
        coef = jnp.float32(scale_param) * jax.lax.rsqrt(jnp.maximum(var, jnp.float32(1e-30)))
        coef_ref[...] = jnp.full((1, 1), coef, jnp.float32)


# --------------------------------------------------------------------------
# Kernel 3 (tiled path): alpha = sigmoid(s * coef) * mask ; out = alpha @ v + skip
# --------------------------------------------------------------------------
def _attn_out_kernel(out_channels,
                     coef_ref, q_ref, k_ref, v_ref, skip_ref, m_ref,
                     out_ref, alpha_ref):
    coef = coef_ref[0, 0]                         # scale_param / std (SMEM scalar)
    m = m_ref[...].astype(jnp.float32)
    s = jax.lax.dot_general(q_ref[...], k_ref[...], (((1,), (1,)), ((), ())),
                            preferred_element_type=jnp.float32)
    s = s * jnp.float32(1.0 / math.sqrt(out_channels))
    # alpha = sigmoid(alpha / (1/scale_param * std)); Dropout(p=0) identity.
    alpha = jax.nn.sigmoid(s * coef) * m
    out_ref[...] = jnp.dot(alpha, v_ref[...],
                           preferred_element_type=jnp.float32) + skip_ref[...]
    alpha_ref[...] = alpha


# --------------------------------------------------------------------------
# Fused single-call kernel for small graphs (everything resident in VMEM)
# --------------------------------------------------------------------------
def _fused_kernel(scale_param, out_channels, num_edges,
                  xw_ref, an_ref, bg_ref,
                  wq_ref, bq_ref, wk_ref, bk_ref, wv_ref, bv_ref, ws_ref, bs_ref,
                  m_ref, out_ref, alpha_ref):
    h = jnp.dot(an_ref[...], xw_ref[...],
                preferred_element_type=jnp.float32) + bg_ref[...]
    h = jnp.where(h >= 0, h, NEG_SLOPE * h)
    q = jnp.dot(h, wq_ref[...], preferred_element_type=jnp.float32) + bq_ref[...]
    k = jnp.dot(h, wk_ref[...], preferred_element_type=jnp.float32) + bk_ref[...]
    v = jnp.dot(h, wv_ref[...], preferred_element_type=jnp.float32) + bv_ref[...]
    skip = jnp.dot(h, ws_ref[...], preferred_element_type=jnp.float32) + bs_ref[...]

    m = m_ref[...].astype(jnp.float32)
    s = jax.lax.dot_general(q, k, (((1,), (1,)), ((), ())),
                            preferred_element_type=jnp.float32)
    s = s * jnp.float32(1.0 / math.sqrt(out_channels))
    sm = s * m
    s1 = jnp.sum(sm)
    s2 = jnp.sum(sm * s)
    e = jnp.float32(max(num_edges, 1))
    denom = jnp.float32(max(num_edges - 1, 1))
    var = (s2 - s1 * s1 / e) / denom
    coef = jnp.float32(scale_param) * jax.lax.rsqrt(jnp.maximum(var, jnp.float32(1e-30)))
    alpha = jax.nn.sigmoid(s * coef) * m
    out_ref[...] = jnp.dot(alpha, v, preferred_element_type=jnp.float32) + skip
    alpha_ref[...] = alpha


# --------------------------------------------------------------------------
# Host-side densification / padding helpers
# --------------------------------------------------------------------------
def build_dense(edge_index, n_pad):
    """GCN-normalized adjacency (f32) + edge mask (int8), zero-padded to n_pad."""
    src, dst = edge_index[0], edge_index[1]
    mask = jnp.zeros((n_pad, n_pad), jnp.float32).at[dst, src].set(1.0)
    idx = jnp.arange(n_pad)
    a_hat = mask.at[idx, idx].set(1.0)       # GCN self loops (pad nodes: self loop only)
    deg = jnp.sum(a_hat, axis=1)
    dinv = jax.lax.rsqrt(deg)
    a_norm = dinv[:, None] * a_hat * dinv[None, :]
    return a_norm, mask.astype(jnp.int8)


def _pad2(a, rows, cols):
    out = jnp.zeros((rows, cols), jnp.float32)
    return out.at[:a.shape[0], :a.shape[1]].set(a.astype(jnp.float32))


def _check_simple_graph(edge_index, num_nodes):
    """Dense-mask kernel assumes no duplicate edges (PyG multigraph would differ)."""
    try:
        ei = np.asarray(edge_index)
    except Exception:
        return  # traced under jit: skip host-side check
    pair = ei[1].astype(np.int64) * np.int64(num_nodes) + ei[0].astype(np.int64)
    if np.unique(pair).size != pair.size:
        raise ValueError(
            "DimEncoder Pallas kernel: duplicate edges found; dense-mask aggregation "
            "and the std denominator would diverge from PyG multigraph semantics.")


# --------------------------------------------------------------------------
# Forward wrapper
# --------------------------------------------------------------------------
def dim_encoder_forward(x, edge_index, params, scale_param=1.5,
                        force_tiled=False, tm_override=None):
    n, _ = x.shape
    inter = params["wg"].shape[1]
    embd = params["wq"].shape[1]
    num_edges = int(edge_index.shape[1])
    _check_simple_graph(edge_index, n)

    i_pad = _round_up(inter, _LANE)
    c_pad = _round_up(embd, _LANE)
    vmem_limit = _vmem_limit_bytes()

    fused = (not force_tiled) and _round_up(n, _LANE) <= 1024
    if fused:
        tm = n_pad = _round_up(n, _LANE)
    else:
        tm = tm_override if tm_override is not None else _pick_tm(n, c_pad, vmem_limit)
        n_pad = _round_up(n, tm)
    n_tiles = n_pad // tm

    a_norm, mask = build_dense(edge_index, n_pad)

    # Hoisted prologue: XW = X @ Wg computed once (plain XLA matmul), fed resident.
    xw = _pad2(jnp.dot(x.astype(jnp.float32), params["wg"].astype(jnp.float32)),
               n_pad, i_pad)
    bg = _pad2(params["bg"], 1, i_pad)
    wq = _pad2(params["wq"], i_pad, c_pad); bq = _pad2(params["bq"], 1, c_pad)
    wk = _pad2(params["wk"], i_pad, c_pad); bk = _pad2(params["bk"], 1, c_pad)
    wv = _pad2(params["wv"], i_pad, c_pad); bv = _pad2(params["bv"], 1, c_pad)
    ws = _pad2(params["ws"], i_pad, c_pad); bs = _pad2(params["bs"], 1, c_pad)

    # ---------------- fused small-graph path ----------------
    if fused:
        full = lambda shape: pl.BlockSpec(shape, lambda i: (0, 0))
        cost = pl.CostEstimate(
            flops=(2 * n_pad * n_pad * i_pad + 8 * n_pad * i_pad * c_pad
                   + 4 * n_pad * n_pad * c_pad + 10 * n_pad * n_pad),
            transcendentals=n_pad * n_pad,
            bytes_accessed=(4 * (2 * n_pad * n_pad + n_pad * i_pad + 4 * i_pad * c_pad
                                 + n_pad * c_pad) + n_pad * n_pad))
        out_p, alpha = pl.pallas_call(
            functools.partial(_fused_kernel, float(scale_param), int(embd), num_edges),
            out_shape=(jax.ShapeDtypeStruct((n_pad, c_pad), jnp.float32),
                       jax.ShapeDtypeStruct((n_pad, n_pad), jnp.float32)),
            grid_spec=pltpu.PrefetchScalarGridSpec(
                num_scalar_prefetch=0,
                grid=(1,),
                in_specs=[full((n_pad, i_pad)),            # xw
                          full((n_pad, n_pad)),            # a_norm
                          full((1, i_pad)),                # bg
                          full((i_pad, c_pad)), full((1, c_pad)),   # wq, bq
                          full((i_pad, c_pad)), full((1, c_pad)),   # wk, bk
                          full((i_pad, c_pad)), full((1, c_pad)),   # wv, bv
                          full((i_pad, c_pad)), full((1, c_pad)),   # ws, bs
                          full((n_pad, n_pad))],           # int8 edge mask
                out_specs=(full((n_pad, c_pad)), full((n_pad, n_pad)))),
            compiler_params=pltpu.CompilerParams(
                dimension_semantics=("arbitrary",),
                vmem_limit_bytes=vmem_limit),
            cost_estimate=cost,
        )(xw, a_norm, bg, wq, bq, wk, bk, wv, bv, ws, bs, mask)
        return out_p[:n, :embd], alpha[:n, :n]

    # ---------------- row-tiled three-kernel path ----------------
    full = lambda shape: pl.BlockSpec(shape, lambda t: (0, 0))
    row_nc = pl.BlockSpec((tm, c_pad), lambda t: (t, 0))
    row_nn = pl.BlockSpec((tm, n_pad), lambda t: (t, 0))

    # kernel 1: GCN aggregate + projections (row-parallel)
    cost1 = pl.CostEstimate(
        flops=2 * n_pad * n_pad * i_pad + 8 * n_pad * i_pad * c_pad,
        transcendentals=0,
        bytes_accessed=4 * (n_pad * n_pad + n_pad * i_pad + 4 * i_pad * c_pad
                            + 4 * n_pad * c_pad))
    qkvs_shape = jax.ShapeDtypeStruct((n_pad, c_pad), jnp.float32)
    q, k, v, skip = pl.pallas_call(
        _gcn_proj_kernel,
        out_shape=(qkvs_shape,) * 4,
        grid_spec=pltpu.PrefetchScalarGridSpec(
            num_scalar_prefetch=0,
            grid=(n_tiles,),
            in_specs=[full((n_pad, i_pad)),                # xw (resident)
                      row_nn,                              # a_norm row tile
                      full((1, i_pad)),                    # bg
                      full((i_pad, c_pad)), full((1, c_pad)),
                      full((i_pad, c_pad)), full((1, c_pad)),
                      full((i_pad, c_pad)), full((1, c_pad)),
                      full((i_pad, c_pad)), full((1, c_pad))],
            out_specs=(row_nc,) * 4),
        compiler_params=pltpu.CompilerParams(
            dimension_semantics=("parallel",),
            vmem_limit_bytes=vmem_limit),
        cost_estimate=cost1,
    )(xw, a_norm, bg, wq, bq, wk, bk, wv, bv, ws, bs)

    # kernel 2: edge-score statistics -> coef = scale_param / std (SMEM accumulators)
    cost2 = pl.CostEstimate(
        flops=2 * n_pad * n_pad * c_pad + 4 * n_pad * n_pad,
        transcendentals=0,
        bytes_accessed=4 * 2 * n_pad * c_pad + n_pad * n_pad + 4)
    coef = pl.pallas_call(
        functools.partial(_attn_stats_kernel, float(scale_param), int(embd), num_edges),
        out_shape=jax.ShapeDtypeStruct((1, 1), jnp.float32),
        grid_spec=pltpu.PrefetchScalarGridSpec(
            num_scalar_prefetch=0,
            grid=(n_tiles,),
            in_specs=[row_nc,                              # q row tile
                      full((n_pad, c_pad)),                # k (resident)
                      row_nn],                             # int8 mask row tile
            out_specs=pl.BlockSpec((1, 1), lambda t: (0, 0)),
            scratch_shapes=[pltpu.SMEM((2,), jnp.float32)]),
        compiler_params=pltpu.CompilerParams(
            dimension_semantics=("arbitrary",),
            vmem_limit_bytes=vmem_limit),
        cost_estimate=cost2,
    )(q, k, mask)

    # kernel 3: attention output + dense alpha (row-parallel; megacore on v7x)
    cost3 = pl.CostEstimate(
        flops=4 * n_pad * n_pad * c_pad + 8 * n_pad * n_pad,
        transcendentals=n_pad * n_pad,
        bytes_accessed=(4 * 4 * n_pad * c_pad + n_pad * n_pad
                        + 4 * n_pad * n_pad + 4 * n_pad * c_pad))
    out_p, alpha = pl.pallas_call(
        functools.partial(_attn_out_kernel, int(embd)),
        out_shape=(jax.ShapeDtypeStruct((n_pad, c_pad), jnp.float32),
                   jax.ShapeDtypeStruct((n_pad, n_pad), jnp.float32)),
        grid_spec=pltpu.PrefetchScalarGridSpec(
            num_scalar_prefetch=0,
            grid=(n_tiles,),
            in_specs=[pl.BlockSpec(memory_space=pltpu.MemorySpace.SMEM),  # coef scalar
                      row_nc,                              # q row tile
                      full((n_pad, c_pad)),                # k (resident)
                      full((n_pad, c_pad)),                # v (resident)
                      row_nc,                              # skip row tile
                      row_nn],                             # int8 mask row tile
            out_specs=(row_nc, row_nn)),
        compiler_params=pltpu.CompilerParams(
            dimension_semantics=("parallel",),
            vmem_limit_bytes=vmem_limit),
        cost_estimate=cost3,
    )(coef, q, k, v, skip, mask)

    return out_p[:n, :embd], alpha[:n, :n]


# --------------------------------------------------------------------------
# Pure-JAX edge-wise reference matching PyG semantics (gather/scatter)
# --------------------------------------------------------------------------
def ref_forward(x, edge_index, params, scale_param=1.5):
    src, dst = edge_index[0], edge_index[1]
    num_nodes = x.shape[0]
    idx = jnp.arange(num_nodes)

    # GCNConv with self loops
    src_sl = jnp.concatenate([src, idx])
    dst_sl = jnp.concatenate([dst, idx])
    deg = jnp.zeros((num_nodes,), jnp.float32).at[dst_sl].add(1.0)
    dinv = 1.0 / jnp.sqrt(deg)
    norm = dinv[src_sl] * dinv[dst_sl]
    xw = x @ params["wg"]
    h = jnp.zeros((num_nodes, xw.shape[1]), jnp.float32).at[dst_sl].add(
        xw[src_sl] * norm[:, None]) + params["bg"]
    h = jnp.where(h >= 0, h, NEG_SLOPE * h)

    # TransformerConvReducrLayer
    q = h @ params["wq"] + params["bq"]
    k = h @ params["wk"] + params["bk"]
    v = h @ params["wv"] + params["bv"]
    C = q.shape[-1]
    s = jnp.sum(q[dst] * k[src], axis=-1) / math.sqrt(C)
    std = jnp.std(s, ddof=1)
    alpha = jax.nn.sigmoid(s / (1.0 / scale_param * std))
    out = jnp.zeros((num_nodes, C), jnp.float32).at[dst].add(alpha[:, None] * v[src])
    out = out + h @ params["ws"] + params["bs"]
    return out, alpha


if __name__ == "__main__":
    N, FEAT, INTER, EMBD = 256, 16, 32, 32
    SCALE = 1.5

    key = jax.random.PRNGKey(0)
    ks = jax.random.split(key, 12)
    x = jax.random.normal(ks[0], (N, FEAT), jnp.float32)

    # deterministic directed graph: each node i sends edges to i+1, i+3, i+5 (mod N)
    base = jnp.arange(N)
    src = jnp.concatenate([base, base, base])
    dst = jnp.concatenate([(base + 1) % N, (base + 3) % N, (base + 5) % N])
    edge_index = jnp.stack([src, dst]).astype(jnp.int32)

    params = {
        "wg": 0.2 * jax.random.normal(ks[1], (FEAT, INTER), jnp.float32),
        "bg": 0.1 * jax.random.normal(ks[2], (1, INTER), jnp.float32),
        "wq": 0.2 * jax.random.normal(ks[3], (INTER, EMBD), jnp.float32),
        "bq": 0.1 * jax.random.normal(ks[4], (1, EMBD), jnp.float32),
        "wk": 0.2 * jax.random.normal(ks[5], (INTER, EMBD), jnp.float32),
        "bk": 0.1 * jax.random.normal(ks[6], (1, EMBD), jnp.float32),
        "wv": 0.2 * jax.random.normal(ks[7], (INTER, EMBD), jnp.float32),
        "bv": 0.1 * jax.random.normal(ks[8], (1, EMBD), jnp.float32),
        "ws": 0.2 * jax.random.normal(ks[9], (INTER, EMBD), jnp.float32),
        "bs": 0.1 * jax.random.normal(ks[10], (1, EMBD), jnp.float32),
    }

    ref_out, ref_alpha = ref_forward(x, edge_index, params, SCALE)

    # --- fused small-graph path ---
    out, alpha_dense = dim_encoder_forward(x, edge_index, params, SCALE)
    out = jax.block_until_ready(out)
    alpha_dense = jax.block_until_ready(alpha_dense)
    assert jnp.allclose(out, ref_out, rtol=5e-3, atol=5e-3), (
        f"fused out max diff {jnp.max(jnp.abs(out - ref_out))}")
    assert jnp.allclose(alpha_dense[dst, src], ref_alpha, rtol=5e-3, atol=5e-3), (
        f"fused alpha max diff {jnp.max(jnp.abs(alpha_dense[dst, src] - ref_alpha))}")

    # --- row-tiled three-kernel path (forced, 2 row tiles) ---
    out_t, alpha_t = dim_encoder_forward(x, edge_index, params, SCALE,
                                         force_tiled=True, tm_override=128)
    out_t = jax.block_until_ready(out_t)
    alpha_t = jax.block_until_ready(alpha_t)
    assert jnp.allclose(out_t, ref_out, rtol=5e-3, atol=5e-3), (
        f"tiled out max diff {jnp.max(jnp.abs(out_t - ref_out))}")
    assert jnp.allclose(alpha_t[dst, src], ref_alpha, rtol=5e-3, atol=5e-3), (
        f"tiled alpha max diff {jnp.max(jnp.abs(alpha_t[dst, src] - ref_alpha))}")

    print("KERNEL_OK")
</pallas_src>

<mosaic_0001>
module attributes {stable_mosaic.version = 11 : i64} {
  func.func @_fused_kernel(%arg0: i32, %arg1: memref<256x128xf32, #tpu.memory_space<vmem>>, %arg2: memref<256x256xf32, #tpu.memory_space<vmem>>, %arg3: memref<1x128xf32, #tpu.memory_space<vmem>>, %arg4: memref<128x128xf32, #tpu.memory_space<vmem>>, %arg5: memref<1x128xf32, #tpu.memory_space<vmem>>, %arg6: memref<128x128xf32, #tpu.memory_space<vmem>>, %arg7: memref<1x128xf32, #tpu.memory_space<vmem>>, %arg8: memref<128x128xf32, #tpu.memory_space<vmem>>, %arg9: memref<1x128xf32, #tpu.memory_space<vmem>>, %arg10: memref<128x128xf32, #tpu.memory_space<vmem>>, %arg11: memref<1x128xf32, #tpu.memory_space<vmem>>, %arg12: memref<256x256xi8, #tpu.memory_space<vmem>>, %arg13: memref<256x128xf32, #tpu.memory_space<vmem>>, %arg14: memref<256x256xf32, #tpu.memory_space<vmem>>) attributes {dimension_semantics = [#tpu.dimension_semantics<arbitrary>], iteration_bounds = array<i64: 1>, scalar_prefetch = 0 : i64, scratch_operands = 0 : i64, tpu.core_type = #tpu.core_type<tc>, window_params = [{pipeline_mode = #tpu.pipeline_mode<synchronous>, transform_indices = @transform_0, window_bounds = array<i64: 256, 128>}, {pipeline_mode = #tpu.pipeline_mode<synchronous>, transform_indices = @transform_1, window_bounds = array<i64: 256, 256>}, {pipeline_mode = #tpu.pipeline_mode<synchronous>, transform_indices = @transform_2, window_bounds = array<i64: 1, 128>}, {pipeline_mode = #tpu.pipeline_mode<synchronous>, transform_indices = @transform_3, window_bounds = array<i64: 128, 128>}, {pipeline_mode = #tpu.pipeline_mode<synchronous>, transform_indices = @transform_4, window_bounds = array<i64: 1, 128>}, {pipeline_mode = #tpu.pipeline_mode<synchronous>, transform_indices = @transform_5, window_bounds = array<i64: 128, 128>}, {pipeline_mode = #tpu.pipeline_mode<synchronous>, transform_indices = @transform_6, window_bounds = array<i64: 1, 128>}, {pipeline_mode = #tpu.pipeline_mode<synchronous>, transform_indices = @transform_7, window_bounds = array<i64: 128, 128>}, {pipeline_mode = #tpu.pipeline_mode<synchronous>, transform_indices = @transform_8, window_bounds = array<i64: 1, 128>}, {pipeline_mode = #tpu.pipeline_mode<synchronous>, transform_indices = @transform_9, window_bounds = array<i64: 128, 128>}, {pipeline_mode = #tpu.pipeline_mode<synchronous>, transform_indices = @transform_10, window_bounds = array<i64: 1, 128>}, {pipeline_mode = #tpu.pipeline_mode<synchronous>, transform_indices = @transform_11, window_bounds = array<i64: 256, 256>}, {pipeline_mode = #tpu.pipeline_mode<synchronous>, transform_indices = @transform_12, window_bounds = array<i64: 256, 128>}, {pipeline_mode = #tpu.pipeline_mode<synchronous>, transform_indices = @transform_13, window_bounds = array<i64: 256, 256>}]} {
    %c0 = arith.constant 0 : index
    %c0_0 = arith.constant 0 : index
    %0 = vector.load %arg2[%c0, %c0_0] : memref<256x256xf32, #tpu.memory_space<vmem>>, vector<256x256xf32>
    %c0_1 = arith.constant 0 : index
    %c0_2 = arith.constant 0 : index
    %1 = vector.load %arg1[%c0_1, %c0_2] : memref<256x128xf32, #tpu.memory_space<vmem>>, vector<256x128xf32>
    %cst = arith.constant dense<0.000000e+00> : vector<256x128xf32>
    %2 = tpu.matmul %0, %1, %cst {dimension_numbers = #tpu.dot_dimension_numbers<[1], [0], [0], [1], [0, 0, 1, 1], [], []>} : vector<256x256xf32>, vector<256x128xf32>, vector<256x128xf32> -> vector<256x128xf32>
    %c0_3 = arith.constant 0 : index
    %c0_4 = arith.constant 0 : index
    %3 = vector.load %arg3[%c0_3, %c0_4] : memref<1x128xf32, #tpu.memory_space<vmem>>, vector<1x128xf32>
    %4 = vector.broadcast %3 : vector<1x128xf32> to vector<256x128xf32>
    %5 = arith.addf %2, %4 : vector<256x128xf32>
    %cst_5 = arith.constant 0.000000e+00 : f32
    %6 = vector.broadcast %cst_5 : f32 to vector<256x128xf32>
    %7 = arith.cmpf oge, %5, %6 : vector<256x128xf32>
    %cst_6 = arith.constant 0.00999999977 : f32
    %8 = vector.broadcast %cst_6 : f32 to vector<256x128xf32>
    %9 = arith.mulf %8, %5 : vector<256x128xf32>
    %10 = arith.select %7, %5, %9 : vector<256x128xi1>, vector<256x128xf32>
    %c0_7 = arith.constant 0 : index
    %c0_8 = arith.constant 0 : index
    %11 = vector.load %arg4[%c0_7, %c0_8] : memref<128x128xf32, #tpu.memory_space<vmem>>, vector<128x128xf32>
    %cst_9 = arith.constant dense<0.000000e+00> : vector<256x128xf32>
    %12 = tpu.matmul %10, %11, %cst_9 {dimension_numbers = #tpu.dot_dimension_numbers<[1], [0], [0], [1], [0, 0, 1, 1], [], []>} : vector<256x128xf32>, vector<128x128xf32>, vector<256x128xf32> -> vector<256x128xf32>
    %c0_10 = arith.constant 0 : index
    %c0_11 = arith.constant 0 : index
    %13 = vector.load %arg5[%c0_10, %c0_11] : memref<1x128xf32, #tpu.memory_space<vmem>>, vector<1x128xf32>
    %14 = vector.broadcast %13 : vector<1x128xf32> to vector<256x128xf32>
    %15 = arith.addf %12, %14 : vector<256x128xf32>
    %c0_12 = arith.constant 0 : index
    %c0_13 = arith.constant 0 : index
    %16 = vector.load %arg6[%c0_12, %c0_13] : memref<128x128xf32, #tpu.memory_space<vmem>>, vector<128x128xf32>
    %cst_14 = arith.constant dense<0.000000e+00> : vector<256x128xf32>
    %17 = tpu.matmul %10, %16, %cst_14 {dimension_numbers = #tpu.dot_dimension_numbers<[1], [0], [0], [1], [0, 0, 1, 1], [], []>} : vector<256x128xf32>, vector<128x128xf32>, vector<256x128xf32> -> vector<256x128xf32>
    %c0_15 = arith.constant 0 : index
    %c0_16 = arith.constant 0 : index
    %18 = vector.load %arg7[%c0_15, %c0_16] : memref<1x128xf32, #tpu.memory_space<vmem>>, vector<1x128xf32>
    %19 = vector.broadcast %18 : vector<1x128xf32> to vector<256x128xf32>
    %20 = arith.addf %17, %19 : vector<256x128xf32>
    %c0_17 = arith.constant 0 : index
    %c0_18 = arith.constant 0 : index
    %21 = vector.load %arg8[%c0_17, %c0_18] : memref<128x128xf32, #tpu.memory_space<vmem>>, vector<128x128xf32>
    %cst_19 = arith.constant dense<0.000000e+00> : vector<256x128xf32>
    %22 = tpu.matmul %10, %21, %cst_19 {dimension_numbers = #tpu.dot_dimension_numbers<[1], [0], [0], [1], [0, 0, 1, 1], [], []>} : vector<256x128xf32>, vector<128x128xf32>, vector<256x128xf32> -> vector<256x128xf32>
    %c0_20 = arith.constant 0 : index
    %c0_21 = arith.constant 0 : index
    %23 = vector.load %arg9[%c0_20, %c0_21] : memref<1x128xf32, #tpu.memory_space<vmem>>, vector<1x128xf32>
    %24 = vector.broadcast %23 : vector<1x128xf32> to vector<256x128xf32>
    %25 = arith.addf %22, %24 : vector<256x128xf32>
    %c0_22 = arith.constant 0 : index
    %c0_23 = arith.constant 0 : index
    %26 = vector.load %arg10[%c0_22, %c0_23] : memref<128x128xf32, #tpu.memory_space<vmem>>, vector<128x128xf32>
    %cst_24 = arith.constant dense<0.000000e+00> : vector<256x128xf32>
    %27 = tpu.matmul %10, %26, %cst_24 {dimension_numbers = #tpu.dot_dimension_numbers<[1], [0], [0], [1], [0, 0, 1, 1], [], []>} : vector<256x128xf32>, vector<128x128xf32>, vector<256x128xf32> -> vector<256x128xf32>
    %c0_25 = arith.constant 0 : index
    %c0_26 = arith.constant 0 : index
    %28 = vector.load %arg11[%c0_25, %c0_26] : memref<1x128xf32, #tpu.memory_space<vmem>>, vector<1x128xf32>
    %29 = vector.broadcast %28 : vector<1x128xf32> to vector<256x128xf32>
    %30 = arith.addf %27, %29 : vector<256x128xf32>
    %c0_27 = arith.constant 0 : index
    %c0_28 = arith.constant 0 : index
    %31 = vector.load %arg12[%c0_27, %c0_28] : memref<256x256xi8, #tpu.memory_space<vmem>>, vector<256x256xi8>
    %32 = arith.sitofp %31 : vector<256x256xi8> to vector<256x256xf32>
    %cst_29 = arith.constant dense<0.000000e+00> : vector<256x256xf32>
    %33 = tpu.matmul %15, %20, %cst_29 {dimension_numbers = #tpu.dot_dimension_numbers<[1], [1], [0], [0], [0, 0, 1, 0], [], []>} : vector<256x128xf32>, vector<256x128xf32>, vector<256x256xf32> -> vector<256x256xf32>
    %cst_30 = arith.constant 0.176776692 : f32
    %34 = vector.broadcast %cst_30 : f32 to vector<256x256xf32>
    %35 = arith.mulf %33, %34 : vector<256x256xf32>
    %36 = arith.mulf %35, %32 : vector<256x256xf32>
    %37 = vector.shape_cast %36 : vector<256x256xf32> to vector<1x256x256xf32>
    %cst_31 = arith.constant dense<0.000000e+00> : vector<1xf32>
    %38 = vector.multi_reduction <add>, %37, %cst_31 [1, 2] : vector<1x256x256xf32> to vector<1xf32>
    %39 = vector.shape_cast %38 : vector<1xf32> to vector<1x1x1xf32>
    %40 = vector.extract %39[0, 0, 0] : f32 from vector<1x1x1xf32>
    %41 = arith.mulf %36, %35 : vector<256x256xf32>
    %42 = vector.shape_cast %41 : vector<256x256xf32> to vector<1x256x256xf32>
    %cst_32 = arith.constant dense<0.000000e+00> : vector<1xf32>
    %43 = vector.multi_reduction <add>, %42, %cst_32 [1, 2] : vector<1x256x256xf32> to vector<1xf32>
    %44 = vector.shape_cast %43 : vector<1xf32> to vector<1x1x1xf32>
    %45 = vector.extract %44[0, 0, 0] : f32 from vector<1x1x1xf32>
    %46 = arith.mulf %40, %40 : f32
    %cst_33 = arith.constant 7.680000e+02 : f32
    %47 = arith.divf %46, %cst_33 : f32
    %48 = arith.subf %45, %47 : f32
    %cst_34 = arith.constant 7.670000e+02 : f32
    %49 = arith.divf %48, %cst_34 : f32
    %cst_35 = arith.constant 1.000000e-30 : f32
    %50 = arith.maximumf %49, %cst_35 : f32
    %51 = math.rsqrt %50 : f32
    %cst_36 = arith.constant 1.500000e+00 : f32
    %52 = arith.mulf %cst_36, %51 : f32
    %53 = vector.broadcast %52 : f32 to vector<256x256xf32>
    %54 = arith.mulf %35, %53 : vector<256x256xf32>
    %55 = arith.negf %54 : vector<256x256xf32>
    %56 = math.exp %55 : vector<256x256xf32>
    %cst_37 = arith.constant 1.000000e+00 : f32
    %57 = vector.broadcast %cst_37 : f32 to vector<256x256xf32>
    %58 = arith.addf %57, %56 : vector<256x256xf32>
    %59 = arith.divf %57, %58 : vector<256x256xf32>
    %60 = arith.mulf %59, %32 : vector<256x256xf32>
    %cst_38 = arith.constant dense<0.000000e+00> : vector<256x128xf32>
    %61 = tpu.matmul %60, %25, %cst_38 {dimension_numbers = #tpu.dot_dimension_numbers<[1], [0], [0], [1], [0, 0, 1, 1], [], []>} : vector<256x256xf32>, vector<256x128xf32>, vector<256x128xf32> -> vector<256x128xf32>
    %62 = arith.addf %61, %30 : vector<256x128xf32>
    %c0_39 = arith.constant 0 : index
    %c0_40 = arith.constant 0 : index
    %63 = vector.load %arg13[%c0_39, %c0_40] : memref<256x128xf32, #tpu.memory_space<vmem>>, vector<256x128xf32>
    tpu.vector_store %arg13[%c0_39, %c0_40], %62 {strides = array<i32>} : memref<256x128xf32, #tpu.memory_space<vmem>>, vector<256x128xf32>,
    %c0_41 = arith.constant 0 : index
    %c0_42 = arith.constant 0 : index
    %64 = vector.load %arg14[%c0_41, %c0_42] : memref<256x256xf32, #tpu.memory_space<vmem>>, vector<256x256xf32>
    tpu.vector_store %arg14[%c0_41, %c0_42], %60 {strides = array<i32>} : memref<256x256xf32, #tpu.memory_space<vmem>>, vector<256x256xf32>,
    return
  }
  func.func @transform_0(%arg0: i32) -> (i32, i32) {
    %c0_i32 = arith.constant 0 : i32
    %c0_i32_0 = arith.constant 0 : i32
    %c0_i32_1 = arith.constant 0 : i32
    return %c0_i32, %c0_i32_0 : i32, i32
  }
  func.func @transform_1(%arg0: i32) -> (i32, i32) {
    %c0_i32 = arith.constant 0 : i32
    %c0_i32_0 = arith.constant 0 : i32
    %c0_i32_1 = arith.constant 0 : i32
    return %c0_i32, %c0_i32_0 : i32, i32
  }
  func.func @transform_2(%arg0: i32) -> (i32, i32) {
    %c0_i32 = arith.constant 0 : i32
    %c0_i32_0 = arith.constant 0 : i32
    %c0_i32_1 = arith.constant 0 : i32
    return %c0_i32, %c0_i32_0 : i32, i32
  }
  func.func @transform_3(%arg0: i32) -> (i32, i32) {
    %c0_i32 = arith.constant 0 : i32
    %c0_i32_0 = arith.constant 0 : i32
    %c0_i32_1 = arith.constant 0 : i32
    return %c0_i32, %c0_i32_0 : i32, i32
  }
  func.func @transform_4(%arg0: i32) -> (i32, i32) {
    %c0_i32 = arith.constant 0 : i32
    %c0_i32_0 = arith.constant 0 : i32
    %c0_i32_1 = arith.constant 0 : i32
    return %c0_i32, %c0_i32_0 : i32, i32
  }
  func.func @transform_5(%arg0: i32) -> (i32, i32) {
    %c0_i32 = arith.constant 0 : i32
    %c0_i32_0 = arith.constant 0 : i32
    %c0_i32_1 = arith.constant 0 : i32
    return %c0_i32, %c0_i32_0 : i32, i32
  }
  func.func @transform_6(%arg0: i32) -> (i32, i32) {
    %c0_i32 = arith.constant 0 : i32
    %c0_i32_0 = arith.constant 0 : i32
    %c0_i32_1 = arith.constant 0 : i32
    return %c0_i32, %c0_i32_0 : i32, i32
  }
  func.func @transform_7(%arg0: i32) -> (i32, i32) {
    %c0_i32 = arith.constant 0 : i32
    %c0_i32_0 = arith.constant 0 : i32
    %c0_i32_1 = arith.constant 0 : i32
    return %c0_i32, %c0_i32_0 : i32, i32
  }
  func.func @transform_8(%arg0: i32) -> (i32, i32) {
    %c0_i32 = arith.constant 0 : i32
    %c0_i32_0 = arith.constant 0 : i32
    %c0_i32_1 = arith.constant 0 : i32
    return %c0_i32, %c0_i32_0 : i32, i32
  }
  func.func @transform_9(%arg0: i32) -> (i32, i32) {
    %c0_i32 = arith.constant 0 : i32
    %c0_i32_0 = arith.constant 0 : i32
    %c0_i32_1 = arith.constant 0 : i32
    return %c0_i32, %c0_i32_0 : i32, i32
  }
  func.func @transform_10(%arg0: i32) -> (i32, i32) {
    %c0_i32 = arith.constant 0 : i32
    %c0_i32_0 = arith.constant 0 : i32
    %c0_i32_1 = arith.constant 0 : i32
    return %c0_i32, %c0_i32_0 : i32, i32
  }
  func.func @transform_11(%arg0: i32) -> (i32, i32) {
    %c0_i32 = arith.constant 0 : i32
    %c0_i32_0 = arith.constant 0 : i32
    %c0_i32_1 = arith.constant 0 : i32
    return %c0_i32, %c0_i32_0 : i32, i32
  }
  func.func @transform_12(%arg0: i32) -> (i32, i32) {
    %c0_i32 = arith.constant 0 : i32
    %c0_i32_0 = arith.constant 0 : i32
    %c0_i32_1 = arith.constant 0 : i32
    return %c0_i32, %c0_i32_0 : i32, i32
  }
  func.func @transform_13(%arg0: i32) -> (i32, i32) {
    %c0_i32 = arith.constant 0 : i32
    %c0_i32_0 = arith.constant 0 : i32
    %c0_i32_1 = arith.constant 0 : i32
    return %c0_i32, %c0_i32_0 : i32, i32
  }
}

</mosaic_0001>

<llo_original>
// kernel: tpu_custom_call.1
$region0: #{tpu_custom_call.1}
  #allocation0 [shape = 'u32[]', space=smem, size = 0x4, offset = 0x4, fixed_abs, tag = 'smem constant byte address 0x4 - core index']
  #allocation1 [shape = 'u32[144,128]{1,0:T(1,128)}', space=vmem, size = 0x12000, scoped, tag = 'internal scratch']
  %s0 = inlined_call_operand.hbm [shape: f32[256,128], index: 0, kind: input, shape index: {}]
  %s1 = inlined_call_operand.hbm [shape: f32[256,256], index: 1, kind: input, shape index: {}]
  %s2 = inlined_call_operand.hbm [shape: f32[1,128], index: 2, kind: input, shape index: {}]
  %s3 = inlined_call_operand.hbm [shape: f32[128,128], index: 3, kind: input, shape index: {}]
  %s4 = inlined_call_operand.hbm [shape: f32[1,128], index: 4, kind: input, shape index: {}]
  %s5 = inlined_call_operand.hbm [shape: f32[128,128], index: 5, kind: input, shape index: {}]
  %s6 = inlined_call_operand.hbm [shape: f32[1,128], index: 6, kind: input, shape index: {}]
  %s7 = inlined_call_operand.hbm [shape: f32[128,128], index: 7, kind: input, shape index: {}]
  %s8 = inlined_call_operand.hbm [shape: f32[1,128], index: 8, kind: input, shape index: {}]
  %s9 = inlined_call_operand.hbm [shape: f32[128,128], index: 9, kind: input, shape index: {}]
  %s10 = inlined_call_operand.hbm [shape: f32[1,128], index: 10, kind: input, shape index: {}]
  %s11 = inlined_call_operand.hbm [shape: s8[256,256], index: 11, kind: input, shape index: {}]
  %s12 = inlined_call_operand.hbm [shape: f32[256,128], index: 12, kind: output, shape index: {0}]
  %s13 = inlined_call_operand.hbm [shape: f32[256,256], index: 13, kind: output, shape index: {1}]
  %14 = xla_tuple %s12, %s13
  %s15 = sld [smem:[#allocation0]]
  $region114: #{tpu_custom_call.1} parent=0
    _
  %s17 = ssub.s32 1, %s15
  %s18 = scalar_select 0, %s17, %s15
  $region1: #{tpu_custom_call.1} parent=0
    #allocation2 [shape = 'u8[131072]{0}', space=vmem, size = 0x20000, scoped, tag = 'input window, operand 0, single buffered']
    #allocation3 [shape = 's32[1]{0}', space=sflag, size = 0x4, scoped, tag = 'scoped memory for tpu_custom_call.1']
    #allocation4 [shape = 's32[1]{0}', space=sflag, size = 0x4, scoped, tag = 'scoped memory for tpu_custom_call.1']
    #allocation5 [shape = 'u8[262144]{0}', space=vmem, size = 0x40000, scoped, tag = 'input window, operand 1, single buffered']
    #allocation6 [shape = 's32[1]{0}', space=sflag, size = 0x4, scoped, tag = 'scoped memory for tpu_custom_call.1']
    #allocation7 [shape = 'u8[512]{0}', space=vmem, size = 0x400, scoped, tag = 'input window, operand 2, single buffered']
    #allocation8 [shape = 'u8[65536]{0}', space=vmem, size = 0x10000, scoped, tag = 'input window, operand 3, single buffered']
    #allocation9 [shape = 's32[1]{0}', space=sflag, size = 0x4, scoped, tag = 'scoped memory for tpu_custom_call.1']
    #allocation10 [shape = 'u8[512]{0}', space=vmem, size = 0x400, scoped, tag = 'input window, operand 4, single buffered']
    #allocation11 [shape = 'u8[65536]{0}', space=vmem, size = 0x10000, scoped, tag = 'input window, operand 5, single buffered']
    #allocation12 [shape = 's32[1]{0}', space=sflag, size = 0x4, scoped, tag = 'scoped memory for tpu_custom_call.1']
    #allocation13 [shape = 'u8[512]{0}', space=vmem, size = 0x400, scoped, tag = 'input window, operand 6, single buffered']
    #allocation14 [shape = 'u8[65536]{0}', space=vmem, size = 0x10000, scoped, tag = 'input window, operand 7, single buffered']
    #allocation15 [shape = 's32[1]{0}', space=sflag, size = 0x4, scoped, tag = 'scoped memory for tpu_custom_call.1']
    #allocation16 [shape = 'u8[512]{0}', space=vmem, size = 0x400, scoped, tag = 'input window, operand 8, single buffered']
    #allocation17 [shape = 'u8[65536]{0}', space=vmem, size = 0x10000, scoped, tag = 'input window, operand 9, single buffered']
    #allocation18 [shape = 's32[1]{0}', space=sflag, size = 0x4, scoped, tag = 'scoped memory for tpu_custom_call.1']
    #allocation19 [shape = 'u8[512]{0}', space=vmem, size = 0x400, scoped, tag = 'input window, operand 10, single buffered']
    #allocation20 [shape = 'u8[65536]{0}', space=vmem, size = 0x10000, scoped, tag = 'input window, operand 11, single buffered']
    #allocation21 [shape = 's32[1]{0}', space=sflag, size = 0x4, scoped, tag = 'scoped memory for tpu_custom_call.1']
    #allocation22 [shape = 'u8[131072]{0}', space=vmem, size = 0x20000, scoped, tag = 'output window, operand 0, single buffered']
    #allocation23 [shape = 'u8[262144]{0}', space=vmem, size = 0x40000, scoped, tag = 'output window, operand 1, single buffered']
    #allocation24 [shape = 's32[1]{0}', space=sflag, size = 0x4, scoped, tag = 'scoped memory for tpu_custom_call.1']
    %19 = vsyncpa [#allocation3], 0
    %20 = vsyncpa [#allocation6], 0
    %21 = vsyncpa [#allocation9], 0
    %22 = vsyncpa [#allocation12], 0
    %23 = vsyncpa [#allocation15], 0
    %24 = vsyncpa [#allocation18], 0
    %25 = vsyncpa [#allocation21], 0
    %26 = vsyncpa [#allocation4], 0
    %27 = vsyncpa [#allocation24], 0
    // Predicated region
    $region2: #{tpu_custom_call.1} parent=1 // pred_check
      _
    $region3: #{tpu_custom_call.1} parent=1 // pred_check_branch
      %29 = sbr.rel (0) target = $region5
    $region4: #{tpu_custom_call.1} parent=1 // pred_region
      %s31 = ssub.s32 4096, 4096
      %32 = vsyncadd [#allocation3], %s31
      %s33 = sshll.u32 [#allocation2], 4
      %s34 = int_to_ptr.vmem [resolvable:$true] %s33
      %39 = dma.hbm_to_vmem [thread:$0]  %s0, 4096, %s34, [#allocation3], 128, 128, 8
    $region5: #{tpu_custom_call.1} parent=1 // pred_fallthru
      _
    // Predicated region
    $region6: #{tpu_custom_call.1} parent=1 // pred_check
      _
    $region7: #{tpu_custom_call.1} parent=1 // pred_check_branch
      %41 = sbr.rel (0) target = $region9
    $region8: #{tpu_custom_call.1} parent=1 // pred_region
      %s43 = ssub.s32 8192, 8192
      %44 = vsyncadd [#allocation6], %s43
      %s45 = sshll.u32 [#allocation5], 4
      %s46 = int_to_ptr.vmem [resolvable:$true] %s45
      %51 = dma.hbm_to_vmem [thread:$0]  %s1, 8192, %s46, [#allocation6], 256, 256, 16
    $region9: #{tpu_custom_call.1} parent=1 // pred_fallthru
      _
    // Predicated region
    $region10: #{tpu_custom_call.1} parent=1 // pred_check
      _
    $region11: #{tpu_custom_call.1} parent=1 // pred_check_branch
      %53 = sbr.rel (0) target = $region13
    $region12: #{tpu_custom_call.1} parent=1 // pred_region
      %s55 = ssub.s32 16, 16
      %56 = vsyncadd [#allocation6], %s55
      %s58 = sshll.u32 [#allocation7], 4
      %s59 = int_to_ptr.vmem [resolvable:$true] %s58
      %61 = dma.hbm_to_vmem [thread:$0]  %s2, 16, %s59, [#allocation6]
    $region13: #{tpu_custom_call.1} parent=1 // pred_fallthru
      _
    // Predicated region
    $region14: #{tpu_custom_call.1} parent=1 // pred_check
      _
    $region15: #{tpu_custom_call.1} parent=1 // pred_check_branch
      %63 = sbr.rel (0) target = $region17
    $region16: #{tpu_custom_call.1} parent=1 // pred_region
      %s65 = ssub.s32 2048, 2048
      %66 = vsyncadd [#allocation9], %s65
      %s67 = sshll.u32 [#allocation8], 4
      %s68 = int_to_ptr.vmem [resolvable:$true] %s67
      %73 = dma.hbm_to_vmem [thread:$0]  %s3, 2048, %s68, [#allocation9], 128, 128, 8
    $region17: #{tpu_custom_call.1} parent=1 // pred_fallthru
      _
    // Predicated region
    $region18: #{tpu_custom_call.1} parent=1 // pred_check
      _
    $region19: #{tpu_custom_call.1} parent=1 // pred_check_branch
      %75 = sbr.rel (0) target = $region21
    $region20: #{tpu_custom_call.1} parent=1 // pred_region
      %s77 = ssub.s32 16, 16
      %78 = vsyncadd [#allocation9], %s77
      %s80 = sshll.u32 [#allocation10], 4
      %s81 = int_to_ptr.vmem [resolvable:$true] %s80
      %83 = dma.hbm_to_vmem [thread:$0]  %s4, 16, %s81, [#allocation9]
    $region21: #{tpu_custom_call.1} parent=1 // pred_fallthru
      _
    // Predicated region
    $region22: #{tpu_custom_call.1} parent=1 // pred_check
      _
    $region23: #{tpu_custom_call.1} parent=1 // pred_check_branch
      %85 = sbr.rel (0) target = $region25
    $region24: #{tpu_custom_call.1} parent=1 // pred_region
      %s87 = ssub.s32 2048, 2048
      %88 = vsyncadd [#allocation12], %s87
      %s89 = sshll.u32 [#allocation11], 4
      %s90 = int_to_ptr.vmem [resolvable:$true] %s89
      %95 = dma.hbm_to_vmem [thread:$0]  %s5, 2048, %s90, [#allocation12], 128, 128, 8
    $region25: #{tpu_custom_call.1} parent=1 // pred_fallthru
      _
    // Predicated region
    $region26: #{tpu_custom_call.1} parent=1 // pred_check
      _
    $region27: #{tpu_custom_call.1} parent=1 // pred_check_branch
      %97 = sbr.rel (0) target = $region29
    $region28: #{tpu_custom_call.1} parent=1 // pred_region
      %s99 = ssub.s32 16, 16
      %100 = vsyncadd [#allocation12], %s99
      %s102 = sshll.u32 [#allocation13], 4
      %s103 = int_to_ptr.vmem [resolvable:$true] %s102
      %105 = dma.hbm_to_vmem [thread:$0]  %s6, 16, %s103, [#allocation12]
    $region29: #{tpu_custom_call.1} parent=1 // pred_fallthru
      _
    // Predicated region
    $region30: #{tpu_custom_call.1} parent=1 // pred_check
      _
    $region31: #{tpu_custom_call.1} parent=1 // pred_check_branch
      %107 = sbr.rel (0) target = $region33
    $region32: #{tpu_custom_call.1} parent=1 // pred_region
      %s109 = ssub.s32 2048, 2048
      %110 = vsyncadd [#allocation15], %s109
      %s111 = sshll.u32 [#allocation14], 4
      %s112 = int_to_ptr.vmem [resolvable:$true] %s111
      %117 = dma.hbm_to_vmem [thread:$0]  %s7, 2048, %s112, [#allocation15], 128, 128, 8
    $region33: #{tpu_custom_call.1} parent=1 // pred_fallthru
      _
    // Predicated region
    $region34: #{tpu_custom_call.1} parent=1 // pred_check
      _
    $region35: #{tpu_custom_call.1} parent=1 // pred_check_branch
      %119 = sbr.rel (0) target = $region37
    $region36: #{tpu_custom_call.1} parent=1 // pred_region
      %s121 = ssub.s32 16, 16
      %122 = vsyncadd [#allocation15], %s121
      %s124 = sshll.u32 [#allocation16], 4
      %s125 = int_to_ptr.vmem [resolvable:$true] %s124
      %127 = dma.hbm_to_vmem [thread:$0]  %s8, 16, %s125, [#allocation15]
    $region37: #{tpu_custom_call.1} parent=1 // pred_fallthru
      _
    // Predicated region
    $region38: #{tpu_custom_call.1} parent=1 // pred_check
      _
    $region39: #{tpu_custom_call.1} parent=1 // pred_check_branch
      %129 = sbr.rel (0) target = $region41
    $region40: #{tpu_custom_call.1} parent=1 // pred_region
      %s131 = ssub.s32 2048, 2048
      %132 = vsyncadd [#allocation18], %s131
      %s133 = sshll.u32 [#allocation17], 4
      %s134 = int_to_ptr.vmem [resolvable:$true] %s133
      %139 = dma.hbm_to_vmem [thread:$0]  %s9, 2048, %s134, [#allocation18], 128, 128, 8
    $region41: #{tpu_custom_call.1} parent=1 // pred_fallthru
      _
    // Predicated region
    $region42: #{tpu_custom_call.1} parent=1 // pred_check
      _
    $region43: #{tpu_custom_call.1} parent=1 // pred_check_branch
      %141 = sbr.rel (0) target = $region45
    $region44: #{tpu_custom_call.1} parent=1 // pred_region
      %s143 = ssub.s32 16, 16
      %144 = vsyncadd [#allocation18], %s143
      %s146 = sshll.u32 [#allocation19], 4
      %s147 = int_to_ptr.vmem [resolvable:$true] %s146
      %149 = dma.hbm_to_vmem [thread:$0]  %s10, 16, %s147, [#allocation18]
    $region45: #{tpu_custom_call.1} parent=1 // pred_fallthru
      _
    // Predicated region
    $region46: #{tpu_custom_call.1} parent=1 // pred_check
      _
    $region47: #{tpu_custom_call.1} parent=1 // pred_check_branch
      %151 = sbr.rel (0) target = $region49
    $region48: #{tpu_custom_call.1} parent=1 // pred_region
      %s153 = ssub.s32 2048, 2048
      %154 = vsyncadd [#allocation21], %s153
      %s155 = sshll.u32 [#allocation20], 4
      %s156 = int_to_ptr.vmem [resolvable:$true] %s155
      %161 = dma.hbm_to_vmem [thread:$0]  %s11, 2048, %s156, [#allocation21], 256, 256, 16
    $region49: #{tpu_custom_call.1} parent=1 // pred_fallthru
      _
    // Predicated region
    $region50: #{tpu_custom_call.1} parent=1 // pred_check
      _
    $region51: #{tpu_custom_call.1} parent=1 // pred_check_branch
      %163 = sbr.rel (0) target = $region53
    $region52: #{tpu_custom_call.1} parent=1 // pred_region
      %164 = dma.done [#allocation3], 4096
    $region53: #{tpu_custom_call.1} parent=1 // pred_fallthru
      _
    // Predicated region
    $region54: #{tpu_custom_call.1} parent=1 // pred_check
      _
    $region55: #{tpu_custom_call.1} parent=1 // pred_check_branch
      %166 = sbr.rel (0) target = $region57
    $region56: #{tpu_custom_call.1} parent=1 // pred_region
      %167 = dma.done [#allocation6], 8192
    $region57: #{tpu_custom_call.1} parent=1 // pred_fallthru
      _
    // Predicated region
    $region58: #{tpu_custom_call.1} parent=1 // pred_check
      _
    $region59: #{tpu_custom_call.1} parent=1 // pred_check_branch
      %169 = sbr.rel (0) target = $region61
    $region60: #{tpu_custom_call.1} parent=1 // pred_region
      %170 = dma.done [#allocation6], 16
    $region61: #{tpu_custom_call.1} parent=1 // pred_fallthru
      _
    // Predicated region
    $region62: #{tpu_custom_call.1} parent=1 // pred_check
      _
    $region63: #{tpu_custom_call.1} parent=1 // pred_check_branch
      %172 = sbr.rel (0) target = $region65
    $region64: #{tpu_custom_call.1} parent=1 // pred_region
      %173 = dma.done [#allocation9], 2048
    $region65: #{tpu_custom_call.1} parent=1 // pred_fallthru
      _
    // Predicated region
    $region66: #{tpu_custom_call.1} parent=1 // pred_check
      _
    $region67: #{tpu_custom_call.1} parent=1 // pred_check_branch
      %175 = sbr.rel (0) target = $region69
    $region68: #{tpu_custom_call.1} parent=1 // pred_region
      %176 = dma.done [#allocation9], 16
    $region69: #{tpu_custom_call.1} parent=1 // pred_fallthru
      _
    // Predicated region
    $region70: #{tpu_custom_call.1} parent=1 // pred_check
      _
    $region71: #{tpu_custom_call.1} parent=1 // pred_check_branch
      %178 = sbr.rel (0) target = $region73
    $region72: #{tpu_custom_call.1} parent=1 // pred_region
      %179 = dma.done [#allocation12], 2048
    $region73: #{tpu_custom_call.1} parent=1 // pred_fallthru
      _
    // Predicated region
    $region74: #{tpu_custom_call.1} parent=1 // pred_check
      _
    $region75: #{tpu_custom_call.1} parent=1 // pred_check_branch
      %181 = sbr.rel (0) target = $region77
    $region76: #{tpu_custom_call.1} parent=1 // pred_region
      %182 = dma.done [#allocation12], 16
    $region77: #{tpu_custom_call.1} parent=1 // pred_fallthru
      _
    // Predicated region
    $region78: #{tpu_custom_call.1} parent=1 // pred_check
      _
    $region79: #{tpu_custom_call.1} parent=1 // pred_check_branch
      %184 = sbr.rel (0) target = $region81
    $region80: #{tpu_custom_call.1} parent=1 // pred_region
      %185 = dma.done [#allocation15], 2048
    $region81: #{tpu_custom_call.1} parent=1 // pred_fallthru
      _
    // Predicated region
    $region82: #{tpu_custom_call.1} parent=1 // pred_check
      _
    $region83: #{tpu_custom_call.1} parent=1 // pred_check_branch
      %187 = sbr.rel (0) target = $region85
    $region84: #{tpu_custom_call.1} parent=1 // pred_region
      %188 = dma.done [#allocation15], 16
    $region85: #{tpu_custom_call.1} parent=1 // pred_fallthru
      _
    // Predicated region
    $region86: #{tpu_custom_call.1} parent=1 // pred_check
      _
    $region87: #{tpu_custom_call.1} parent=1 // pred_check_branch
      %190 = sbr.rel (0) target = $region89
    $region88: #{tpu_custom_call.1} parent=1 // pred_region
      %191 = dma.done [#allocation18], 2048
    $region89: #{tpu_custom_call.1} parent=1 // pred_fallthru
      _
    // Predicated region
    $region90: #{tpu_custom_call.1} parent=1 // pred_check
      _
    $region91: #{tpu_custom_call.1} parent=1 // pred_check_branch
      %193 = sbr.rel (0) target = $region93
    $region92: #{tpu_custom_call.1} parent=1 // pred_region
      %194 = dma.done [#allocation18], 16
    $region93: #{tpu_custom_call.1} parent=1 // pred_fallthru
      _
    // Predicated region
    $region94: #{tpu_custom_call.1} parent=1 // pred_check
      _
    $region95: #{tpu_custom_call.1} parent=1 // pred_check_branch
      %196 = sbr.rel (0) target = $region97
    $region96: #{tpu_custom_call.1} parent=1 // pred_region
      %197 = dma.done [#allocation21], 2048
    $region97: #{tpu_custom_call.1} parent=1 // pred_fallthru
      _
    %v198 = vld [vmem:[#allocation5] sm:$0xff]
    %v199 = vld [vmem:[#allocation5 + $0x8] sm:$0xff]
    %v200 = vld [vmem:[#allocation5 + $0x10] sm:$0xff]
    %v201 = vld [vmem:[#allocation5 + $0x18] sm:$0xff]
    %v202 = vld [vmem:[#allocation5 + $0x20] sm:$0xff]
    %v203 = vld [vmem:[#allocation5 + $0x28] sm:$0xff]
    %v204 = vld [vmem:[#allocation5 + $0x30] sm:$0xff]
    %v205 = vld [vmem:[#allocation5 + $0x38] sm:$0xff]
    %v206 = vld [vmem:[#allocation5 + $0x40] sm:$0xff]
    %v207 = vld [vmem:[#allocation5 + $0x48] sm:$0xff]
    %v208 = vld [vmem:[#allocation5 + $0x50] sm:$0xff]
    %v209 = vld [vmem:[#allocation5 + $0x58] sm:$0xff]
    %v210 = vld [vmem:[#allocation5 + $0x60] sm:$0xff]
    %v211 = vld [vmem:[#allocation5 + $0x68] sm:$0xff]
    %v212 = vld [vmem:[#allocation5 + $0x70] sm:$0xff]
    %v213 = vld [vmem:[#allocation5 + $0x78] sm:$0xff]
    %v214 = vld [vmem:[#allocation5 + $0x80] sm:$0xff]
    %v215 = vld [vmem:[#allocation5 + $0x88] sm:$0xff]
    %v216 = vld [vmem:[#allocation5 + $0x90] sm:$0xff]
    %v217 = vld [vmem:[#allocation5 + $0x98] sm:$0xff]
    %v218 = vld [vmem:[#allocation5 + $0xa0] sm:$0xff]
    %v219 = vld [vmem:[#allocation5 + $0xa8] sm:$0xff]
    %v220 = vld [vmem:[#allocation5 + $0xb0] sm:$0xff]
    %v221 = vld [vmem:[#allocation5 + $0xb8] sm:$0xff]
    %v222 = vld [vmem:[#allocation5 + $0xc0] sm:$0xff]
    %v223 = vld [vmem:[#allocation5 + $0xc8] sm:$0xff]
    %v224 = vld [vmem:[#allocation5 + $0xd0] sm:$0xff]
    %v225 = vld [vmem:[#allocation5 + $0xd8] sm:$0xff]
    %v226 = vld [vmem:[#allocation5 + $0xe0] sm:$0xff]
    %v227 = vld [vmem:[#allocation5 + $0xe8] sm:$0xff]
    %v228 = vld [vmem:[#allocation5 + $0xf0] sm:$0xff]
    %v229 = vld [vmem:[#allocation5 + $0xf8] sm:$0xff]
    %v230 = vld [vmem:[#allocation5 + $0x100] sm:$0xff]
    %v231 = vld [vmem:[#allocation5 + $0x108] sm:$0xff]
    %v232 = vld [vmem:[#allocation5 + $0x110] sm:$0xff]
    %v233 = vld [vmem:[#allocation5 + $0x118] sm:$0xff]
    %v234 = vld [vmem:[#allocation5 + $0x120] sm:$0xff]
    %v235 = vld [vmem:[#allocation5 + $0x128] sm:$0xff]
    %v236 = vld [vmem:[#allocation5 + $0x130] sm:$0xff]
    %v237 = vld [vmem:[#allocation5 + $0x138] sm:$0xff]
    %v238 = vld [vmem:[#allocation5 + $0x140] sm:$0xff]
    %v239 = vld [vmem:[#allocation5 + $0x148] sm:$0xff]
    %v240 = vld [vmem:[#allocation5 + $0x150] sm:$0xff]
    %v241 = vld [vmem:[#allocation5 + $0x158] sm:$0xff]
    %v242 = vld [vmem:[#allocation5 + $0x160] sm:$0xff]
    %v243 = vld [vmem:[#allocation5 + $0x168] sm:$0xff]
    %v244 = vld [vmem:[#allocation5 + $0x170] sm:$0xff]
    %v245 = vld [vmem:[#allocation5 + $0x178] sm:$0xff]
    %v246 = vld [vmem:[#allocation5 + $0x180] sm:$0xff]
    %v247 = vld [vmem:[#allocation5 + $0x188] sm:$0xff]
    %v248 = vld [vmem:[#allocation5 + $0x190] sm:$0xff]
    %v249 = vld [vmem:[#allocation5 + $0x198] sm:$0xff]
    %v250 = vld [vmem:[#allocation5 + $0x1a0] sm:$0xff]
    %v251 = vld [vmem:[#allocation5 + $0x1a8] sm:$0xff]
    %v252 = vld [vmem:[#allocation5 + $0x1b0] sm:$0xff]
    %v253 = vld [vmem:[#allocation5 + $0x1b8] sm:$0xff]
    %v254 = vld [vmem:[#allocation5 + $0x1c0] sm:$0xff]
    %v255 = vld [vmem:[#allocation5 + $0x1c8] sm:$0xff]
    %v256 = vld [vmem:[#allocation5 + $0x1d0] sm:$0xff]
    %v257 = vld [vmem:[#allocation5 + $0x1d8] sm:$0xff]
    %v258 = vld [vmem:[#allocation5 + $0x1e0] sm:$0xff]
    %v259 = vld [vmem:[#allocation5 + $0x1e8] sm:$0xff]
    %v260 = vld [vmem:[#allocation5 + $0x1f0] sm:$0xff]
    %v261 = vld [vmem:[#allocation5 + $0x1f8] sm:$0xff]
    %v262 = vld [vmem:[#allocation2] sm:$0xff]
    %v263 = vld [vmem:[#allocation2 + $0x8] sm:$0xff]
    %v264 = vld [vmem:[#allocation2 + $0x10] sm:$0xff]
    %v265 = vld [vmem:[#allocation2 + $0x18] sm:$0xff]
    %v266 = vld [vmem:[#allocation2 + $0x20] sm:$0xff]
    %v267 = vld [vmem:[#allocation2 + $0x28] sm:$0xff]
    %v268 = vld [vmem:[#allocation2 + $0x30] sm:$0xff]
    %v269 = vld [vmem:[#allocation2 + $0x38] sm:$0xff]
    %v270 = vld [vmem:[#allocation2 + $0x40] sm:$0xff]
    %v271 = vld [vmem:[#allocation2 + $0x48] sm:$0xff]
    %v272 = vld [vmem:[#allocation2 + $0x50] sm:$0xff]
    %v273 = vld [vmem:[#allocation2 + $0x58] sm:$0xff]
    %v274 = vld [vmem:[#allocation2 + $0x60] sm:$0xff]
    %v275 = vld [vmem:[#allocation2 + $0x68] sm:$0xff]
    %v276 = vld [vmem:[#allocation2 + $0x70] sm:$0xff]
    %v277 = vld [vmem:[#allocation2 + $0x78] sm:$0xff]
    %v278 = vld [vmem:[#allocation2 + $0x80] sm:$0xff]
    %v279 = vld [vmem:[#allocation2 + $0x88] sm:$0xff]
    %v280 = vld [vmem:[#allocation2 + $0x90] sm:$0xff]
    %v281 = vld [vmem:[#allocation2 + $0x98] sm:$0xff]
    %v282 = vld [vmem:[#allocation2 + $0xa0] sm:$0xff]
    %v283 = vld [vmem:[#allocation2 + $0xa8] sm:$0xff]
    %v284 = vld [vmem:[#allocation2 + $0xb0] sm:$0xff]
    %v285 = vld [vmem:[#allocation2 + $0xb8] sm:$0xff]
    %v286 = vld [vmem:[#allocation2 + $0xc0] sm:$0xff]
    %v287 = vld [vmem:[#allocation2 + $0xc8] sm:$0xff]
    %v288 = vld [vmem:[#allocation2 + $0xd0] sm:$0xff]
    %v289 = vld [vmem:[#allocation2 + $0xd8] sm:$0xff]
    %v290 = vld [vmem:[#allocation2 + $0xe0] sm:$0xff]
    %v291 = vld [vmem:[#allocation2 + $0xe8] sm:$0xff]
    %v292 = vld [vmem:[#allocation2 + $0xf0] sm:$0xff]
    %v293 = vld [vmem:[#allocation2 + $0xf8] sm:$0xff]
    %v294 = vld [vmem:[#allocation7] sm:$0x1]
    %v296 = vlaneseq
    %v297 = vshrl.u32 %v296, 7
    %v298 = vsub.s32 0, %v297
    %v299 = vrot.slane %v294, %v298
    %301 = vmatprep.subr.mxu0 0.0
    %302 = vmatpush1.msra.mxu0 %v262
    %303 = vmatprep.subr.mxu0 0.0
    %304 = vmatpush1.msra.mxu0 %v263
    %305 = vmatprep.subr.mxu0 0.0
    %306 = vmatpush1.msra.mxu0 %v264
    %307 = vmatprep.subr.mxu0 0.0
    %308 = vmatpush1.msra.mxu0 %v265
    %309 = vmatprep.subr.mxu0 0.0
    %310 = vmatpush1.msra.mxu0 %v266
    %311 = vmatprep.subr.mxu0 0.0
    %312 = vmatpush1.msra.mxu0 %v267
    %313 = vmatprep.subr.mxu0 0.0
    %314 = vmatpush1.msra.mxu0 %v268
    %315 = vmatprep.subr.mxu0 0.0
    %316 = vmatpush1.msra.mxu0 %v269
    %317 = vmatprep.subr.mxu0 0.0
    %318 = vmatpush1.msra.mxu0 %v270
    %319 = vmatprep.subr.mxu0 0.0
    %320 = vmatpush1.msra.mxu0 %v271
    %321 = vmatprep.subr.mxu0 0.0
    %322 = vmatpush1.msra.mxu0 %v272
    %323 = vmatprep.subr.mxu0 0.0
    %324 = vmatpush1.msra.mxu0 %v273
    %325 = vmatprep.subr.mxu0 0.0
    %326 = vmatpush1.msra.mxu0 %v274
    %327 = vmatprep.subr.mxu0 0.0
    %328 = vmatpush1.msra.mxu0 %v275
    %329 = vmatprep.subr.mxu0 0.0
    %330 = vmatpush1.msra.mxu0 %v276
    %331 = vmatprep.subr.mxu0 0.0
    %332 = vmatpush1.msra.mxu0 %v277
    %333 = vmatprep.subr.mxu0 0.0
    %334 = vmatpush1.msra.mxu0 %v278
    %335 = vmatprep.subr.mxu0 0.0
    %336 = vmatpush1.msra.mxu0 %v279
    %337 = vmatprep.subr.mxu0 0.0
    %338 = vmatpush1.msra.mxu0 %v280
    %339 = vmatprep.subr.mxu0 0.0
    %340 = vmatpush1.msra.mxu0 %v281
    %341 = vmatprep.subr.mxu0 0.0
    %342 = vmatpush1.msra.mxu0 %v282
    %343 = vmatprep.subr.mxu0 0.0
    %344 = vmatpush1.msra.mxu0 %v283
    %345 = vmatprep.subr.mxu0 0.0
    %346 = vmatpush1.msra.mxu0 %v284
    %347 = vmatprep.subr.mxu0 0.0
    %348 = vmatpush1.msra.mxu0 %v285
    %349 = vmatprep.subr.mxu0 0.0
    %350 = vmatpush1.msra.mxu0 %v286
    %351 = vmatprep.subr.mxu0 0.0
    %352 = vmatpush1.msra.mxu0 %v287
    %353 = vmatprep.subr.mxu0 0.0
    %354 = vmatpush1.msra.mxu0 %v288
    %355 = vmatprep.subr.mxu0 0.0
    %356 = vmatpush1.msra.mxu0 %v289
    %357 = vmatprep.subr.mxu0 0.0
    %358 = vmatpush1.msra.mxu0 %v290
    %359 = vmatprep.subr.mxu0 0.0
    %360 = vmatpush1.msra.mxu0 %v291
    %361 = vmatprep.subr.mxu0 0.0
    %362 = vmatpush1.msra.mxu0 %v292
    %363 = vmatprep.subr.mxu0 0.0
    %364 = vmatpush1.msra.mxu0 %v293
    %365 = vmatprep.mubr.f32.mxu0 %v199
    %366 = vmatmul.mubr.f32.gmra.mrb[0].mxu0 %v198
    %v367 = vpop.f32.mrb[0].mxu0
    %v368 = vadd.f32 %v299, %v367
    %v369 = vpop.f32.mrb[0].mxu0
    %370 = vmatprep.mubr.f32.mxu0 %v201
    %371 = vmatmul.mubr.f32.gmra.mrb[0].mxu0 %v200
    %v372 = vpop.f32.mrb[0].mxu0
    %v373 = vadd.f32 %v299, %v372
    %v374 = vpop.f32.mrb[0].mxu0
    %375 = vmatprep.mubr.f32.mxu0 %v203
    %376 = vmatmul.mubr.f32.gmra.mrb[0].mxu0 %v202
    %v377 = vpop.f32.mrb[0].mxu0
    %v378 = vadd.f32 %v299, %v377
    %v379 = vpop.f32.mrb[0].mxu0
    %380 = vmatprep.mubr.f32.mxu0 %v205
    %381 = vmatmul.mubr.f32.gmra.mrb[0].mxu0 %v204
    %v382 = vpop.f32.mrb[0].mxu0
    %v383 = vadd.f32 %v299, %v382
    %v384 = vpop.f32.mrb[0].mxu0
    %385 = vmatprep.mubr.f32.mxu0 %v207
    %386 = vmatmul.mubr.f32.gmra.mrb[0].mxu0 %v206
    %v387 = vpop.f32.mrb[0].mxu0
    %v388 = vadd.f32 %v299, %v387
    %v389 = vpop.f32.mrb[0].mxu0
    %390 = vmatprep.mubr.f32.mxu0 %v209
    %391 = vmatmul.mubr.f32.gmra.mrb[0].mxu0 %v208
    %v392 = vpop.f32.mrb[0].mxu0
    %v393 = vadd.f32 %v299, %v392
    %v394 = vpop.f32.mrb[0].mxu0
    %395 = vmatprep.mubr.f32.mxu0 %v211
    %396 = vmatmul.mubr.f32.gmra.mrb[0].mxu0 %v210
    %v397 = vpop.f32.mrb[0].mxu0
    %v398 = vadd.f32 %v299, %v397
    %v399 = vpop.f32.mrb[0].mxu0
    %400 = vmatprep.mubr.f32.mxu0 %v213
    %401 = vmatmul.mubr.f32.gmra.mrb[0].mxu0 %v212
    %v402 = vpop.f32.mrb[0].mxu0
    %v403 = vadd.f32 %v299, %v402
    %v404 = vpop.f32.mrb[0].mxu0
    %405 = vmatprep.mubr.f32.mxu0 %v215
    %406 = vmatmul.mubr.f32.gmra.mrb[0].mxu0 %v214
    %v407 = vpop.f32.mrb[0].mxu0
    %v408 = vadd.f32 %v299, %v407
    %v409 = vpop.f32.mrb[0].mxu0
    %410 = vmatprep.mubr.f32.mxu0 %v217
    %411 = vmatmul.mubr.f32.gmra.mrb[0].mxu0 %v216
    %v412 = vpop.f32.mrb[0].mxu0
    %v413 = vadd.f32 %v299, %v412
    %v414 = vpop.f32.mrb[0].mxu0
    %415 = vmatprep.mubr.f32.mxu0 %v219
    %416 = vmatmul.mubr.f32.gmra.mrb[0].mxu0 %v218
    %v417 = vpop.f32.mrb[0].mxu0
    %v418 = vadd.f32 %v299, %v417
    %v419 = vpop.f32.mrb[0].mxu0
    %420 = vmatprep.mubr.f32.mxu0 %v221
    %421 = vmatmul.mubr.f32.gmra.mrb[0].mxu0 %v220
    %v422 = vpop.f32.mrb[0].mxu0
    %v423 = vadd.f32 %v299, %v422
    %v424 = vpop.f32.mrb[0].mxu0
    %425 = vmatprep.mubr.f32.mxu0 %v223
    %426 = vmatmul.mubr.f32.gmra.mrb[0].mxu0 %v222
    %v427 = vpop.f32.mrb[0].mxu0
    %v428 = vadd.f32 %v299, %v427
    %v429 = vpop.f32.mrb[0].mxu0
    %430 = vmatprep.mubr.f32.mxu0 %v225
    %431 = vmatmul.mubr.f32.gmra.mrb[0].mxu0 %v224
    %v432 = vpop.f32.mrb[0].mxu0
    %v433 = vadd.f32 %v299, %v432
    %v434 = vpop.f32.mrb[0].mxu0
    %435 = vmatprep.mubr.f32.mxu0 %v227
    %436 = vmatmul.mubr.f32.gmra.mrb[0].mxu0 %v226
    %v437 = vpop.f32.mrb[0].mxu0
    %v438 = vadd.f32 %v299, %v437
    %v439 = vpop.f32.mrb[0].mxu0
    %440 = vmatprep.mubr.f32.mxu0 %v229
    %441 = vmatmul.mubr.f32.gmra.mrb[0].mxu0 %v228
    %v442 = vpop.f32.mrb[0].mxu0
    %v443 = vadd.f32 %v299, %v442
    %v444 = vpop.f32.mrb[0].mxu0
    %445 = vmatprep.mubr.f32.mxu0 %v231
    %446 = vmatmul.mubr.f32.gmra.mrb[0].mxu0 %v230
    %v447 = vpop.f32.mrb[0].mxu0
    %v448 = vadd.f32 %v299, %v447
    %v449 = vpop.f32.mrb[0].mxu0
    %450 = vmatprep.mubr.f32.mxu0 %v233
    %451 = vmatmul.mubr.f32.gmra.mrb[0].mxu0 %v232
    %v452 = vpop.f32.mrb[0].mxu0
    %v453 = vadd.f32 %v299, %v452
    %v454 = vpop.f32.mrb[0].mxu0
    %455 = vmatprep.mubr.f32.mxu0 %v235
    %456 = vmatmul.mubr.f32.gmra.mrb[0].mxu0 %v234
    %v457 = vpop.f32.mrb[0].mxu0
    %v458 = vadd.f32 %v299, %v457
    %v459 = vpop.f32.mrb[0].mxu0
    %460 = vmatprep.mubr.f32.mxu0 %v237
    %461 = vmatmul.mubr.f32.gmra.mrb[0].mxu0 %v236
    %v462 = vpop.f32.mrb[0].mxu0
    %v463 = vadd.f32 %v299, %v462
    %v464 = vpop.f32.mrb[0].mxu0
    %465 = vmatprep.mubr.f32.mxu0 %v239
    %466 = vmatmul.mubr.f32.gmra.mrb[0].mxu0 %v238
    %v467 = vpop.f32.mrb[0].mxu0
    %v468 = vadd.f32 %v299, %v467
    %v469 = vpop.f32.mrb[0].mxu0
    %470 = vmatprep.mubr.f32.mxu0 %v241
    %471 = vmatmul.mubr.f32.gmra.mrb[0].mxu0 %v240
    %v472 = vpop.f32.mrb[0].mxu0
    %v473 = vadd.f32 %v299, %v472
    %v474 = vpop.f32.mrb[0].mxu0
    %475 = vmatprep.mubr.f32.mxu0 %v243
    %476 = vmatmul.mubr.f32.gmra.mrb[0].mxu0 %v242
    %v477 = vpop.f32.mrb[0].mxu0
    %v478 = vadd.f32 %v299, %v477
    %v479 = vpop.f32.mrb[0].mxu0
    %480 = vmatprep.mubr.f32.mxu0 %v245
    %481 = vmatmul.mubr.f32.gmra.mrb[0].mxu0 %v244
    %v482 = vpop.f32.mrb[0].mxu0
    %v483 = vadd.f32 %v299, %v482
    %v484 = vpop.f32.mrb[0].mxu0
    %485 = vmatprep.mubr.f32.mxu0 %v247
    %486 = vmatmul.mubr.f32.gmra.mrb[0].mxu0 %v246
    %v487 = vpop.f32.mrb[0].mxu0
    %v488 = vadd.f32 %v299, %v487
    %v489 = vpop.f32.mrb[0].mxu0
    %490 = vmatprep.mubr.f32.mxu0 %v249
    %491 = vmatmul.mubr.f32.gmra.mrb[0].mxu0 %v248
    %v492 = vpop.f32.mrb[0].mxu0
    %v493 = vadd.f32 %v299, %v492
    %v494 = vpop.f32.mrb[0].mxu0
    %495 = vmatprep.mubr.f32.mxu0 %v251
    %496 = vmatmul.mubr.f32.gmra.mrb[0].mxu0 %v250
    %v497 = vpop.f32.mrb[0].mxu0
    %v498 = vadd.f32 %v299, %v497
    %v499 = vpop.f32.mrb[0].mxu0
    %500 = vmatprep.mubr.f32.mxu0 %v253
    %501 = vmatmul.mubr.f32.gmra.mrb[0].mxu0 %v252
    %v502 = vpop.f32.mrb[0].mxu0
    %v503 = vadd.f32 %v299, %v502
    %v504 = vpop.f32.mrb[0].mxu0
    %505 = vmatprep.mubr.f32.mxu0 %v255
    %506 = vmatmul.mubr.f32.gmra.mrb[0].mxu0 %v254
    %v507 = vpop.f32.mrb[0].mxu0
    %v508 = vadd.f32 %v299, %v507
    %v509 = vpop.f32.mrb[0].mxu0
    %510 = vmatprep.mubr.f32.mxu0 %v257
    %511 = vmatmul.mubr.f32.gmra.mrb[0].mxu0 %v256
    %v512 = vpop.f32.mrb[0].mxu0
    %v513 = vadd.f32 %v299, %v512
    %v514 = vpop.f32.mrb[0].mxu0
    %515 = vmatprep.mubr.f32.mxu0 %v259
    %516 = vmatmul.mubr.f32.gmra.mrb[0].mxu0 %v258
    %v517 = vpop.f32.mrb[0].mxu0
    %v518 = vadd.f32 %v299, %v517
    %v519 = vpop.f32.mrb[0].mxu0
    %520 = vmatprep.mubr.f32.mxu0 %v261
    %521 = vmatmul.mubr.f32.gmra.mrb[0].mxu0 %v260
    %v522 = vpop.f32.mrb[0].mxu0
    %v523 = vadd.f32 %v299, %v522
    %v524 = vpop.f32.mrb[0].mxu0
    %525 = vdwg.mxu0
    %vm526 = vcmp.ge.f32.partialorder %v368, 0.0
    %vm527 = vcmp.ge.f32.partialorder %v373, 0.0
    %vm528 = vcmp.ge.f32.partialorder %v378, 0.0
    %vm529 = vcmp.ge.f32.partialorder %v383, 0.0
    %vm530 = vcmp.ge.f32.partialorder %v388, 0.0
    %vm531 = vcmp.ge.f32.partialorder %v393, 0.0
    %vm532 = vcmp.ge.f32.partialorder %v398, 0.0
    %vm533 = vcmp.ge.f32.partialorder %v403, 0.0
    %vm534 = vcmp.ge.f32.partialorder %v408, 0.0
    %vm535 = vcmp.ge.f32.partialorder %v413, 0.0
    %vm536 = vcmp.ge.f32.partialorder %v418, 0.0
    %vm537 = vcmp.ge.f32.partialorder %v423, 0.0
    %vm538 = vcmp.ge.f32.partialorder %v428, 0.0
    %vm539 = vcmp.ge.f32.partialorder %v433, 0.0
    %vm540 = vcmp.ge.f32.partialorder %v438, 0.0
    %vm541 = vcmp.ge.f32.partialorder %v443, 0.0
    %vm542 = vcmp.ge.f32.partialorder %v448, 0.0
    %vm543 = vcmp.ge.f32.partialorder %v453, 0.0
    %vm544 = vcmp.ge.f32.partialorder %v458, 0.0
    %vm545 = vcmp.ge.f32.partialorder %v463, 0.0
    %vm546 = vcmp.ge.f32.partialorder %v468, 0.0
    %vm547 = vcmp.ge.f32.partialorder %v473, 0.0
    %vm548 = vcmp.ge.f32.partialorder %v478, 0.0
    %vm549 = vcmp.ge.f32.partialorder %v483, 0.0
    %vm550 = vcmp.ge.f32.partialorder %v488, 0.0
    %vm551 = vcmp.ge.f32.partialorder %v493, 0.0
    %vm552 = vcmp.ge.f32.partialorder %v498, 0.0
    %vm553 = vcmp.ge.f32.partialorder %v503, 0.0
    %vm554 = vcmp.ge.f32.partialorder %v508, 0.0
    %vm555 = vcmp.ge.f32.partialorder %v513, 0.0
    %vm556 = vcmp.ge.f32.partialorder %v518, 0.0
    %vm557 = vcmp.ge.f32.partialorder %v523, 0.0
    %v558 = vmul.f32 %v368, 0.01
    %v559 = vmul.f32 %v373, 0.01
    %v560 = vmul.f32 %v378, 0.01
    %v561 = vmul.f32 %v383, 0.01
    %v562 = vmul.f32 %v388, 0.01
    %v563 = vmul.f32 %v393, 0.01
    %v564 = vmul.f32 %v398, 0.01
    %v565 = vmul.f32 %v403, 0.01
    %v566 = vmul.f32 %v408, 0.01
    %v567 = vmul.f32 %v413, 0.01
    %v568 = vmul.f32 %v418, 0.01
    %v569 = vmul.f32 %v423, 0.01
    %v570 = vmul.f32 %v428, 0.01
    %v571 = vmul.f32 %v433, 0.01
    %v572 = vmul.f32 %v438, 0.01
    %v573 = vmul.f32 %v443, 0.01
    %v574 = vmul.f32 %v448, 0.01
    %v575 = vmul.f32 %v453, 0.01
    %v576 = vmul.f32 %v458, 0.01
    %v577 = vmul.f32 %v463, 0.01
    %v578 = vmul.f32 %v468, 0.01
    %v579 = vmul.f32 %v473, 0.01
    %v580 = vmul.f32 %v478, 0.01
    %v581 = vmul.f32 %v483, 0.01
    %v582 = vmul.f32 %v488, 0.01
    %v583 = vmul.f32 %v493, 0.01
    %v584 = vmul.f32 %v498, 0.01
    %v585 = vmul.f32 %v503, 0.01
    %v586 = vmul.f32 %v508, 0.01
    %v587 = vmul.f32 %v513, 0.01
    %v588 = vmul.f32 %v518, 0.01
    %v589 = vmul.f32 %v523, 0.01
    %v590 = vsel %vm526, %v368, %v558
    %v591 = vsel %vm527, %v373, %v559
    %v592 = vsel %vm528, %v378, %v560
    %v593 = vsel %vm529, %v383, %v561
    %v594 = vsel %vm530, %v388, %v562
    %v595 = vsel %vm531, %v393, %v563
    %v596 = vsel %vm532, %v398, %v564
    %v597 = vsel %vm533, %v403, %v565
    %v598 = vsel %vm534, %v408, %v566
    %v599 = vsel %vm535, %v413, %v567
    %v600 = vsel %vm536, %v418, %v568
    %v601 = vsel %vm537, %v423, %v569
    %v602 = vsel %vm538, %v428, %v570
    %v603 = vsel %vm539, %v433, %v571
    %v604 = vsel %vm540, %v438, %v572
    %v605 = vsel %vm541, %v443, %v573
    %v606 = vsel %vm542, %v448, %v574
    %v607 = vsel %vm543, %v453, %v575
    %v608 = vsel %vm544, %v458, %v576
    %v609 = vsel %vm545, %v463, %v577
    %v610 = vsel %vm546, %v468, %v578
    %v611 = vsel %vm547, %v473, %v579
    %v612 = vsel %vm548, %v478, %v580
    %v613 = vsel %vm549, %v483, %v581
    %v614 = vsel %vm550, %v488, %v582
    %v615 = vsel %vm551, %v493, %v583
    %v616 = vsel %vm552, %v498, %v584
    %v617 = vsel %vm553, %v503, %v585
    %v618 = vsel %vm554, %v508, %v586
    %v619 = vsel %vm555, %v513, %v587
    %v620 = vsel %vm556, %v518, %v588
    %v621 = vsel %vm557, %v523, %v589
    %v622 = vld [vmem:[#allocation8] sm:$0xff]
    %v623 = vld [vmem:[#allocation8 + $0x8] sm:$0xff]
    %v624 = vld [vmem:[#allocation8 + $0x10] sm:$0xff]
    %v625 = vld [vmem:[#allocation8 + $0x18] sm:$0xff]
    %v626 = vld [vmem:[#allocation8 + $0x20] sm:$0xff]
    %v627 = vld [vmem:[#allocation8 + $0x28] sm:$0xff]
    %v628 = vld [vmem:[#allocation8 + $0x30] sm:$0xff]
    %v629 = vld [vmem:[#allocation8 + $0x38] sm:$0xff]
    %v630 = vld [vmem:[#allocation8 + $0x40] sm:$0xff]
    %v631 = vld [vmem:[#allocation8 + $0x48] sm:$0xff]
    %v632 = vld [vmem:[#allocation8 + $0x50] sm:$0xff]
    %v633 = vld [vmem:[#allocation8 + $0x58] sm:$0xff]
    %v634 = vld [vmem:[#allocation8 + $0x60] sm:$0xff]
    %v635 = vld [vmem:[#allocation8 + $0x68] sm:$0xff]
    %v636 = vld [vmem:[#allocation8 + $0x70] sm:$0xff]
    %v637 = vld [vmem:[#allocation8 + $0x78] sm:$0xff]
    %v638 = vld [vmem:[#allocation10] sm:$0x1]
    %v640 = vlaneseq
    %v641 = vshrl.u32 %v640, 7
    %v642 = vsub.s32 0, %v641
    %v643 = vrot.slane %v638, %v642
    %645 = vmatprep.subr.mxu0 0.0
    %646 = vmatpush1.msra.mxu0 %v622
    %647 = vmatprep.subr.mxu0 0.0
    %648 = vmatpush1.msra.mxu0 %v623
    %649 = vmatprep.subr.mxu0 0.0
    %650 = vmatpush1.msra.mxu0 %v624
    %651 = vmatprep.subr.mxu0 0.0
    %652 = vmatpush1.msra.mxu0 %v625
    %653 = vmatprep.subr.mxu0 0.0
    %654 = vmatpush1.msra.mxu0 %v626
    %655 = vmatprep.subr.mxu0 0.0
    %656 = vmatpush1.msra.mxu0 %v627
    %657 = vmatprep.subr.mxu0 0.0
    %658 = vmatpush1.msra.mxu0 %v628
    %659 = vmatprep.subr.mxu0 0.0
    %660 = vmatpush1.msra.mxu0 %v629
    %661 = vmatprep.subr.mxu0 0.0
    %662 = vmatpush1.msra.mxu0 %v630
    %663 = vmatprep.subr.mxu0 0.0
    %664 = vmatpush1.msra.mxu0 %v631
    %665 = vmatprep.subr.mxu0 0.0
    %666 = vmatpush1.msra.mxu0 %v632
    %667 = vmatprep.subr.mxu0 0.0
    %668 = vmatpush1.msra.mxu0 %v633
    %669 = vmatprep.subr.mxu0 0.0
    %670 = vmatpush1.msra.mxu0 %v634
    %671 = vmatprep.subr.mxu0 0.0
    %672 = vmatpush1.msra.mxu0 %v635
    %673 = vmatprep.subr.mxu0 0.0
    %674 = vmatpush1.msra.mxu0 %v636
    %675 = vmatprep.subr.mxu0 0.0
    %676 = vmatpush1.msra.mxu0 %v637
    %677 = vmatprep.subr.mxu0 0.0
    %678 = vmatpush1.msra.mxu0 0.0
    %679 = vmatprep.subr.mxu0 0.0
    %680 = vmatpush1.msra.mxu0 0.0
    %681 = vmatprep.subr.mxu0 0.0
    %682 = vmatpush1.msra.mxu0 0.0
    %683 = vmatprep.subr.mxu0 0.0
    %684 = vmatpush1.msra.mxu0 0.0
    %685 = vmatprep.subr.mxu0 0.0
    %686 = vmatpush1.msra.mxu0 0.0
    %687 = vmatprep.subr.mxu0 0.0
    %688 = vmatpush1.msra.mxu0 0.0
    %689 = vmatprep.subr.mxu0 0.0
    %690 = vmatpush1.msra.mxu0 0.0
    %691 = vmatprep.subr.mxu0 0.0
    %692 = vmatpush1.msra.mxu0 0.0
    %693 = vmatprep.subr.mxu0 0.0
    %694 = vmatpush1.msra.mxu0 0.0
    %695 = vmatprep.subr.mxu0 0.0
    %696 = vmatpush1.msra.mxu0 0.0
    %697 = vmatprep.subr.mxu0 0.0
    %698 = vmatpush1.msra.mxu0 0.0
    %699 = vmatprep.subr.mxu0 0.0
    %700 = vmatpush1.msra.mxu0 0.0
    %701 = vmatprep.subr.mxu0 0.0
    %702 = vmatpush1.msra.mxu0 0.0
    %703 = vmatprep.subr.mxu0 0.0
    %704 = vmatpush1.msra.mxu0 0.0
    %705 = vmatprep.subr.mxu0 0.0
    %706 = vmatpush1.msra.mxu0 0.0
    %707 = vmatprep.subr.mxu0 0.0
    %708 = vmatpush1.msra.mxu0 0.0
    %709 = vmatprep.mubr.f32.mxu0 0.0
    %710 = vmatmul.mubr.f32.gmra.mrb[0].mxu0 %v590
    %v711 = vpop.f32.mrb[0].mxu0
    %v712 = vadd.f32 %v643, %v711
    %v713 = vpop.f32.mrb[0].mxu0
    %714 = vmatprep.mubr.f32.mxu0 0.0
    %715 = vmatmul.mubr.f32.gmra.mrb[0].mxu0 %v591
    %v716 = vpop.f32.mrb[0].mxu0
    %v717 = vadd.f32 %v643, %v716
    %v718 = vpop.f32.mrb[0].mxu0
    %719 = vmatprep.mubr.f32.mxu0 0.0
    %720 = vmatmul.mubr.f32.gmra.mrb[0].mxu0 %v592
    %v721 = vpop.f32.mrb[0].mxu0
    %v722 = vadd.f32 %v643, %v721
    %v723 = vpop.f32.mrb[0].mxu0
    %724 = vmatprep.mubr.f32.mxu0 0.0
    %725 = vmatmul.mubr.f32.gmra.mrb[0].mxu0 %v593
    %v726 = vpop.f32.mrb[0].mxu0
    %v727 = vadd.f32 %v643, %v726
    %v728 = vpop.f32.mrb[0].mxu0
    %729 = vmatprep.mubr.f32.mxu0 0.0
    %730 = vmatmul.mubr.f32.gmra.mrb[0].mxu0 %v594
    %v731 = vpop.f32.mrb[0].mxu0
    %v732 = vadd.f32 %v643, %v731
    %v733 = vpop.f32.mrb[0].mxu0
    %734 = vmatprep.mubr.f32.mxu0 0.0
    %735 = vmatmul.mubr.f32.gmra.mrb[0].mxu0 %v595
    %v736 = vpop.f32.mrb[0].mxu0
    %v737 = vadd.f32 %v643, %v736
    %v738 = vpop.f32.mrb[0].mxu0
    %739 = vmatprep.mubr.f32.mxu0 0.0
    %740 = vmatmul.mubr.f32.gmra.mrb[0].mxu0 %v596
    %v741 = vpop.f32.mrb[0].mxu0
    %v742 = vadd.f32 %v643, %v741
    %v743 = vpop.f32.mrb[0].mxu0
    %744 = vmatprep.mubr.f32.mxu0 0.0
    %745 = vmatmul.mubr.f32.gmra.mrb[0].mxu0 %v597
    %v746 = vpop.f32.mrb[0].mxu0
    %v747 = vadd.f32 %v643, %v746
    %v748 = vpop.f32.mrb[0].mxu0
    %749 = vmatprep.mubr.f32.mxu0 0.0
    %750 = vmatmul.mubr.f32.gmra.mrb[0].mxu0 %v598
    %v751 = vpop.f32.mrb[0].mxu0
    %v752 = vadd.f32 %v643, %v751
    %v753 = vpop.f32.mrb[0].mxu0
    %754 = vmatprep.mubr.f32.mxu0 0.0
    %755 = vmatmul.mubr.f32.gmra.mrb[0].mxu0 %v599
    %v756 = vpop.f32.mrb[0].mxu0
    %v757 = vadd.f32 %v643, %v756
    %v758 = vpop.f32.mrb[0].mxu0
    %759 = vmatprep.mubr.f32.mxu0 0.0
    %760 = vmatmul.mubr.f32.gmra.mrb[0].mxu0 %v600
    %v761 = vpop.f32.mrb[0].mxu0
    %v762 = vadd.f32 %v643, %v761
    %v763 = vpop.f32.mrb[0].mxu0
    %764 = vmatprep.mubr.f32.mxu0 0.0
    %765 = vmatmul.mubr.f32.gmra.mrb[0].mxu0 %v601
    %v766 = vpop.f32.mrb[0].mxu0
    %v767 = vadd.f32 %v643, %v766
    %v768 = vpop.f32.mrb[0].mxu0
    %769 = vmatprep.mubr.f32.mxu0 0.0
    %770 = vmatmul.mubr.f32.gmra.mrb[0].mxu0 %v602
    %v771 = vpop.f32.mrb[0].mxu0
    %v772 = vadd.f32 %v643, %v771
    %v773 = vpop.f32.mrb[0].mxu0
    %774 = vmatprep.mubr.f32.mxu0 0.0
    %775 = vmatmul.mubr.f32.gmra.mrb[0].mxu0 %v603
    %v776 = vpop.f32.mrb[0].mxu0
    %v777 = vadd.f32 %v643, %v776
    %v778 = vpop.f32.mrb[0].mxu0
    %779 = vmatprep.mubr.f32.mxu0 0.0
    %780 = vmatmul.mubr.f32.gmra.mrb[0].mxu0 %v604
    %v781 = vpop.f32.mrb[0].mxu0
    %v782 = vadd.f32 %v643, %v781
    %v783 = vpop.f32.mrb[0].mxu0
    %784 = vmatprep.mubr.f32.mxu0 0.0
    %785 = vmatmul.mubr.f32.gmra.mrb[0].mxu0 %v605
    %v786 = vpop.f32.mrb[0].mxu0
    %v787 = vadd.f32 %v643, %v786
    %v788 = vpop.f32.mrb[0].mxu0
    %789 = vmatprep.mubr.f32.mxu0 0.0
    %790 = vmatmul.mubr.f32.gmra.mrb[0].mxu0 %v606
    %v791 = vpop.f32.mrb[0].mxu0
    %v792 = vadd.f32 %v643, %v791
    %v793 = vpop.f32.mrb[0].mxu0
    %794 = vmatprep.mubr.f32.mxu0 0.0
    %795 = vmatmul.mubr.f32.gmra.mrb[0].mxu0 %v607
    %v796 = vpop.f32.mrb[0].mxu0
    %v797 = vadd.f32 %v643, %v796
    %v798 = vpop.f32.mrb[0].mxu0
    %799 = vmatprep.mubr.f32.mxu0 0.0
    %800 = vmatmul.mubr.f32.gmra.mrb[0].mxu0 %v608
    %v801 = vpop.f32.mrb[0].mxu0
    %v802 = vadd.f32 %v643, %v801
    %v803 = vpop.f32.mrb[0].mxu0
    %804 = vmatprep.mubr.f32.mxu0 0.0
    %805 = vmatmul.mubr.f32.gmra.mrb[0].mxu0 %v609
    %v806 = vpop.f32.mrb[0].mxu0
    %v807 = vadd.f32 %v643, %v806
    %v808 = vpop.f32.mrb[0].mxu0
    %809 = vmatprep.mubr.f32.mxu0 0.0
    %810 = vmatmul.mubr.f32.gmra.mrb[0].mxu0 %v610
    %v811 = vpop.f32.mrb[0].mxu0
    %v812 = vadd.f32 %v643, %v811
    %v813 = vpop.f32.mrb[0].mxu0
    %814 = vmatprep.mubr.f32.mxu0 0.0
    %815 = vmatmul.mubr.f32.gmra.mrb[0].mxu0 %v611
    %v816 = vpop.f32.mrb[0].mxu0
    %v817 = vadd.f32 %v643, %v816
    %v818 = vpop.f32.mrb[0].mxu0
    %819 = vmatprep.mubr.f32.mxu0 0.0
    %820 = vmatmul.mubr.f32.gmra.mrb[0].mxu0 %v612
    %v821 = vpop.f32.mrb[0].mxu0
    %v822 = vadd.f32 %v643, %v821
    %v823 = vpop.f32.mrb[0].mxu0
    %824 = vmatprep.mubr.f32.mxu0 0.0
    %825 = vmatmul.mubr.f32.gmra.mrb[0].mxu0 %v613
    %v826 = vpop.f32.mrb[0].mxu0
    %v827 = vadd.f32 %v643, %v826
    %v828 = vpop.f32.mrb[0].mxu0
    %829 = vmatprep.mubr.f32.mxu0 0.0
    %830 = vmatmul.mubr.f32.gmra.mrb[0].mxu0 %v614
    %v831 = vpop.f32.mrb[0].mxu0
    %v832 = vadd.f32 %v643, %v831
    %v833 = vpop.f32.mrb[0].mxu0
    %834 = vmatprep.mubr.f32.mxu0 0.0
    %835 = vmatmul.mubr.f32.gmra.mrb[0].mxu0 %v615
    %v836 = vpop.f32.mrb[0].mxu0
    %v837 = vadd.f32 %v643, %v836
    %v838 = vpop.f32.mrb[0].mxu0
    %839 = vmatprep.mubr.f32.mxu0 0.0
    %840 = vmatmul.mubr.f32.gmra.mrb[0].mxu0 %v616
    %v841 = vpop.f32.mrb[0].mxu0
    %v842 = vadd.f32 %v643, %v841
    %v843 = vpop.f32.mrb[0].mxu0
    %844 = vmatprep.mubr.f32.mxu0 0.0
    %845 = vmatmul.mubr.f32.gmra.mrb[0].mxu0 %v617
    %v846 = vpop.f32.mrb[0].mxu0
    %v847 = vadd.f32 %v643, %v846
    %v848 = vpop.f32.mrb[0].mxu0
    %849 = vmatprep.mubr.f32.mxu0 0.0
    %850 = vmatmul.mubr.f32.gmra.mrb[0].mxu0 %v618
    %v851 = vpop.f32.mrb[0].mxu0
    %v852 = vadd.f32 %v643, %v851
    %v853 = vpop.f32.mrb[0].mxu0
    %854 = vmatprep.mubr.f32.mxu0 0.0
    %855 = vmatmul.mubr.f32.gmra.mrb[0].mxu0 %v619
    %v856 = vpop.f32.mrb[0].mxu0
    %v857 = vadd.f32 %v643, %v856
    %v858 = vpop.f32.mrb[0].mxu0
    %859 = vmatprep.mubr.f32.mxu0 0.0
    %860 = vmatmul.mubr.f32.gmra.mrb[0].mxu0 %v620
    %v861 = vpop.f32.mrb[0].mxu0
    %v862 = vadd.f32 %v643, %v861
    %v863 = vpop.f32.mrb[0].mxu0
    %864 = vmatprep.mubr.f32.mxu0 0.0
    %865 = vmatmul.mubr.f32.gmra.mrb[0].mxu0 %v621
    %v866 = vpop.f32.mrb[0].mxu0
    %v867 = vadd.f32 %v643, %v866
    %v868 = vpop.f32.mrb[0].mxu0
    %869 = vdwg.mxu0
    %v870 = vld [vmem:[#allocation11] sm:$0xff]
    %v871 = vld [vmem:[#allocation11 + $0x8] sm:$0xff]
    %v872 = vld [vmem:[#allocation11 + $0x10] sm:$0xff]
    %v873 = vld [vmem:[#allocation11 + $0x18] sm:$0xff]
    %v874 = vld [vmem:[#allocation11 + $0x20] sm:$0xff]
    %v875 = vld [vmem:[#allocation11 + $0x28] sm:$0xff]
    %v876 = vld [vmem:[#allocation11 + $0x30] sm:$0xff]
    %v877 = vld [vmem:[#allocation11 + $0x38] sm:$0xff]
    %v878 = vld [vmem:[#allocation11 + $0x40] sm:$0xff]
    %v879 = vld [vmem:[#allocation11 + $0x48] sm:$0xff]
    %v880 = vld [vmem:[#allocation11 + $0x50] sm:$0xff]
    %v881 = vld [vmem:[#allocation11 + $0x58] sm:$0xff]
    %v882 = vld [vmem:[#allocation11 + $0x60] sm:$0xff]
    %v883 = vld [vmem:[#allocation11 + $0x68] sm:$0xff]
    %v884 = vld [vmem:[#allocation11 + $0x70] sm:$0xff]
    %v885 = vld [vmem:[#allocation11 + $0x78] sm:$0xff]
    %v886 = vld [vmem:[#allocation13] sm:$0x1]
    %v888 = vlaneseq
    %v889 = vshrl.u32 %v888, 7
    %v890 = vsub.s32 0, %v889
    %v891 = vrot.slane %v886, %v890
    %893 = vmatprep.subr.mxu0 0.0
    %894 = vmatpush1.msra.mxu0 %v870
    %895 = vmatprep.subr.mxu0 0.0
    %896 = vmatpush1.msra.mxu0 %v871
    %897 = vmatprep.subr.mxu0 0.0
    %898 = vmatpush1.msra.mxu0 %v872
    %899 = vmatprep.subr.mxu0 0.0
    %900 = vmatpush1.msra.mxu0 %v873
    %901 = vmatprep.subr.mxu0 0.0
    %902 = vmatpush1.msra.mxu0 %v874
    %903 = vmatprep.subr.mxu0 0.0
    %904 = vmatpush1.msra.mxu0 %v875
    %905 = vmatprep.subr.mxu0 0.0
    %906 = vmatpush1.msra.mxu0 %v876
    %907 = vmatprep.subr.mxu0 0.0
    %908 = vmatpush1.msra.mxu0 %v877
    %909 = vmatprep.subr.mxu0 0.0
    %910 = vmatpush1.msra.mxu0 %v878
    %911 = vmatprep.subr.mxu0 0.0
    %912 = vmatpush1.msra.mxu0 %v879
    %913 = vmatprep.subr.mxu0 0.0
    %914 = vmatpush1.msra.mxu0 %v880
    %915 = vmatprep.subr.mxu0 0.0
    %916 = vmatpush1.msra.mxu0 %v881
    %917 = vmatprep.subr.mxu0 0.0
    %918 = vmatpush1.msra.mxu0 %v882
    %919 = vmatprep.subr.mxu0 0.0
    %920 = vmatpush1.msra.mxu0 %v883
    %921 = vmatprep.subr.mxu0 0.0
    %922 = vmatpush1.msra.mxu0 %v884
    %923 = vmatprep.subr.mxu0 0.0
    %924 = vmatpush1.msra.mxu0 %v885
    %925 = vmatprep.subr.mxu0 0.0
    %926 = vmatpush1.msra.mxu0 0.0
    %927 = vmatprep.subr.mxu0 0.0
    %928 = vmatpush1.msra.mxu0 0.0
    %929 = vmatprep.subr.mxu0 0.0
    %930 = vmatpush1.msra.mxu0 0.0
    %931 = vmatprep.subr.mxu0 0.0
    %932 = vmatpush1.msra.mxu0 0.0
    %933 = vmatprep.subr.mxu0 0.0
    %934 = vmatpush1.msra.mxu0 0.0
    %935 = vmatprep.subr.mxu0 0.0
    %936 = vmatpush1.msra.mxu0 0.0
    %937 = vmatprep.subr.mxu0 0.0
    %938 = vmatpush1.msra.mxu0 0.0
    %939 = vmatprep.subr.mxu0 0.0
    %940 = vmatpush1.msra.mxu0 0.0
    %941 = vmatprep.subr.mxu0 0.0
    %942 = vmatpush1.msra.mxu0 0.0
    %943 = vmatprep.subr.mxu0 0.0
    %944 = vmatpush1.msra.mxu0 0.0
    %945 = vmatprep.subr.mxu0 0.0
    %946 = vmatpush1.msra.mxu0 0.0
    %947 = vmatprep.subr.mxu0 0.0
    %948 = vmatpush1.msra.mxu0 0.0
    %949 = vmatprep.subr.mxu0 0.0
    %950 = vmatpush1.msra.mxu0 0.0
    %951 = vmatprep.subr.mxu0 0.0
    %952 = vmatpush1.msra.mxu0 0.0
    %953 = vmatprep.subr.mxu0 0.0
    %954 = vmatpush1.msra.mxu0 0.0
    %955 = vmatprep.subr.mxu0 0.0
    %956 = vmatpush1.msra.mxu0 0.0
    %957 = vmatprep.mubr.f32.mxu0 0.0
    %958 = vmatmul.mubr.f32.gmra.mrb[0].mxu0 %v590
    %v959 = vpop.f32.mrb[0].mxu0
    %v960 = vadd.f32 %v891, %v959
    %v961 = vpop.f32.mrb[0].mxu0
    %962 = vmatprep.mubr.f32.mxu0 0.0
    %963 = vmatmul.mubr.f32.gmra.mrb[0].mxu0 %v591
    %v964 = vpop.f32.mrb[0].mxu0
    %v965 = vadd.f32 %v891, %v964
    %v966 = vpop.f32.mrb[0].mxu0
    %967 = vmatprep.mubr.f32.mxu0 0.0
    %968 = vmatmul.mubr.f32.gmra.mrb[0].mxu0 %v592
    %v969 = vpop.f32.mrb[0].mxu0
    %v970 = vadd.f32 %v891, %v969
    %v971 = vpop.f32.mrb[0].mxu0
    %972 = vmatprep.mubr.f32.mxu0 0.0
    %973 = vmatmul.mubr.f32.gmra.mrb[0].mxu0 %v593
    %v974 = vpop.f32.mrb[0].mxu0
    %v975 = vadd.f32 %v891, %v974
    %v976 = vpop.f32.mrb[0].mxu0
    %977 = vmatprep.mubr.f32.mxu0 0.0
    %978 = vmatmul.mubr.f32.gmra.mrb[0].mxu0 %v594
    %v979 = vpop.f32.mrb[0].mxu0
    %v980 = vadd.f32 %v891, %v979
    %v981 = vpop.f32.mrb[0].mxu0
    %982 = vmatprep.mubr.f32.mxu0 0.0
    %983 = vmatmul.mubr.f32.gmra.mrb[0].mxu0 %v595
    %v984 = vpop.f32.mrb[0].mxu0
    %v985 = vadd.f32 %v891, %v984
    %v986 = vpop.f32.mrb[0].mxu0
    %987 = vmatprep.mubr.f32.mxu0 0.0
    %988 = vmatmul.mubr.f32.gmra.mrb[0].mxu0 %v596
    %v989 = vpop.f32.mrb[0].mxu0
    %v990 = vadd.f32 %v891, %v989
    %v991 = vpop.f32.mrb[0].mxu0
    %992 = vmatprep.mubr.f32.mxu0 0.0
    %993 = vmatmul.mubr.f32.gmra.mrb[0].mxu0 %v597
    %v994 = vpop.f32.mrb[0].mxu0
    %v995 = vadd.f32 %v891, %v994
    %v996 = vpop.f32.mrb[0].mxu0
    %997 = vmatprep.mubr.f32.mxu0 0.0
    %998 = vmatmul.mubr.f32.gmra.mrb[0].mxu0 %v598
    %v999 = vpop.f32.mrb[0].mxu0
    %v1000 = vadd.f32 %v891, %v999
    %v1001 = vpop.f32.mrb[0].mxu0
    %1002 = vmatprep.mubr.f32.mxu0 0.0
    %1003 = vmatmul.mubr.f32.gmra.mrb[0].mxu0 %v599
    %v1004 = vpop.f32.mrb[0].mxu0
    %v1005 = vadd.f32 %v891, %v1004
    %v1006 = vpop.f32.mrb[0].mxu0
    %1007 = vmatprep.mubr.f32.mxu0 0.0
    %1008 = vmatmul.mubr.f32.gmra.mrb[0].mxu0 %v600
    %v1009 = vpop.f32.mrb[0].mxu0
    %v1010 = vadd.f32 %v891, %v1009
    %v1011 = vpop.f32.mrb[0].mxu0
    %1012 = vmatprep.mubr.f32.mxu0 0.0
    %1013 = vmatmul.mubr.f32.gmra.mrb[0].mxu0 %v601
    %v1014 = vpop.f32.mrb[0].mxu0
    %v1015 = vadd.f32 %v891, %v1014
    %v1016 = vpop.f32.mrb[0].mxu0
    %1017 = vmatprep.mubr.f32.mxu0 0.0
    %1018 = vmatmul.mubr.f32.gmra.mrb[0].mxu0 %v602
    %v1019 = vpop.f32.mrb[0].mxu0
    %v1020 = vadd.f32 %v891, %v1019
    %v1021 = vpop.f32.mrb[0].mxu0
    %1022 = vmatprep.mubr.f32.mxu0 0.0
    %1023 = vmatmul.mubr.f32.gmra.mrb[0].mxu0 %v603
    %v1024 = vpop.f32.mrb[0].mxu0
    %v1025 = vadd.f32 %v891, %v1024
    %v1026 = vpop.f32.mrb[0].mxu0
    %1027 = vmatprep.mubr.f32.mxu0 0.0
    %1028 = vmatmul.mubr.f32.gmra.mrb[0].mxu0 %v604
    %v1029 = vpop.f32.mrb[0].mxu0
    %v1030 = vadd.f32 %v891, %v1029
    %v1031 = vpop.f32.mrb[0].mxu0
    %1032 = vmatprep.mubr.f32.mxu0 0.0
    %1033 = vmatmul.mubr.f32.gmra.mrb[0].mxu0 %v605
    %v1034 = vpop.f32.mrb[0].mxu0
    %v1035 = vadd.f32 %v891, %v1034
    %v1036 = vpop.f32.mrb[0].mxu0
    %1037 = vmatprep.mubr.f32.mxu0 0.0
    %1038 = vmatmul.mubr.f32.gmra.mrb[0].mxu0 %v606
    %v1039 = vpop.f32.mrb[0].mxu0
    %v1040 = vadd.f32 %v891, %v1039
    %v1041 = vpop.f32.mrb[0].mxu0
    %1042 = vmatprep.mubr.f32.mxu0 0.0
    %1043 = vmatmul.mubr.f32.gmra.mrb[0].mxu0 %v607
    %v1044 = vpop.f32.mrb[0].mxu0
    %v1045 = vadd.f32 %v891, %v1044
    %v1046 = vpop.f32.mrb[0].mxu0
    %1047 = vmatprep.mubr.f32.mxu0 0.0
    %1048 = vmatmul.mubr.f32.gmra.mrb[0].mxu0 %v608
    %v1049 = vpop.f32.mrb[0].mxu0
    %v1050 = vadd.f32 %v891, %v1049
    %v1051 = vpop.f32.mrb[0].mxu0
    %1052 = vmatprep.mubr.f32.mxu0 0.0
    %1053 = vmatmul.mubr.f32.gmra.mrb[0].mxu0 %v609
    %v1054 = vpop.f32.mrb[0].mxu0
    %v1055 = vadd.f32 %v891, %v1054
    %v1056 = vpop.f32.mrb[0].mxu0
    %1057 = vmatprep.mubr.f32.mxu0 0.0
    %1058 = vmatmul.mubr.f32.gmra.mrb[0].mxu0 %v610
    %v1059 = vpop.f32.mrb[0].mxu0
    %v1060 = vadd.f32 %v891, %v1059
    %v1061 = vpop.f32.mrb[0].mxu0
    %1062 = vmatprep.mubr.f32.mxu0 0.0
    %1063 = vmatmul.mubr.f32.gmra.mrb[0].mxu0 %v611
    %v1064 = vpop.f32.mrb[0].mxu0
    %v1065 = vadd.f32 %v891, %v1064
    %v1066 = vpop.f32.mrb[0].mxu0
    %1067 = vmatprep.mubr.f32.mxu0 0.0
    %1068 = vmatmul.mubr.f32.gmra.mrb[0].mxu0 %v612
    %v1069 = vpop.f32.mrb[0].mxu0
    %v1070 = vadd.f32 %v891, %v1069
    %v1071 = vpop.f32.mrb[0].mxu0
    %1072 = vmatprep.mubr.f32.mxu0 0.0
    %1073 = vmatmul.mubr.f32.gmra.mrb[0].mxu0 %v613
    %v1074 = vpop.f32.mrb[0].mxu0
    %v1075 = vadd.f32 %v891, %v1074
    %v1076 = vpop.f32.mrb[0].mxu0
    %1077 = vmatprep.mubr.f32.mxu0 0.0
    %1078 = vmatmul.mubr.f32.gmra.mrb[0].mxu0 %v614
    %v1079 = vpop.f32.mrb[0].mxu0
    %v1080 = vadd.f32 %v891, %v1079
    %v1081 = vpop.f32.mrb[0].mxu0
    %1082 = vmatprep.mubr.f32.mxu0 0.0
    %1083 = vmatmul.mubr.f32.gmra.mrb[0].mxu0 %v615
    %v1084 = vpop.f32.mrb[0].mxu0
    %v1085 = vadd.f32 %v891, %v1084
    %v1086 = vpop.f32.mrb[0].mxu0
    %1087 = vmatprep.mubr.f32.mxu0 0.0
    %1088 = vmatmul.mubr.f32.gmra.mrb[0].mxu0 %v616
    %v1089 = vpop.f32.mrb[0].mxu0
    %v1090 = vadd.f32 %v891, %v1089
    %v1091 = vpop.f32.mrb[0].mxu0
    %1092 = vmatprep.mubr.f32.mxu0 0.0
    %1093 = vmatmul.mubr.f32.gmra.mrb[0].mxu0 %v617
    %v1094 = vpop.f32.mrb[0].mxu0
    %v1095 = vadd.f32 %v891, %v1094
    %v1096 = vpop.f32.mrb[0].mxu0
    %1097 = vmatprep.mubr.f32.mxu0 0.0
    %1098 = vmatmul.mubr.f32.gmra.mrb[0].mxu0 %v618
    %v1099 = vpop.f32.mrb[0].mxu0
    %v1100 = vadd.f32 %v891, %v1099
    %v1101 = vpop.f32.mrb[0].mxu0
    %1102 = vmatprep.mubr.f32.mxu0 0.0
    %1103 = vmatmul.mubr.f32.gmra.mrb[0].mxu0 %v619
    %v1104 = vpop.f32.mrb[0].mxu0
    %v1105 = vadd.f32 %v891, %v1104
    %v1106 = vpop.f32.mrb[0].mxu0
    %1107 = vmatprep.mubr.f32.mxu0 0.0
    %1108 = vmatmul.mubr.f32.gmra.mrb[0].mxu0 %v620
    %v1109 = vpop.f32.mrb[0].mxu0
    %v1110 = vadd.f32 %v891, %v1109
    %v1111 = vpop.f32.mrb[0].mxu0
    %1112 = vmatprep.mubr.f32.mxu0 0.0
    %1113 = vmatmul.mubr.f32.gmra.mrb[0].mxu0 %v621
    %v1114 = vpop.f32.mrb[0].mxu0
    %v1115 = vadd.f32 %v891, %v1114
    %v1116 = vpop.f32.mrb[0].mxu0
    %1117 = vdwg.mxu0
    %v1118 = vld [vmem:[#allocation14] sm:$0xff]
    %v1119 = vld [vmem:[#allocation14 + $0x8] sm:$0xff]
    %v1120 = vld [vmem:[#allocation14 + $0x10] sm:$0xff]
    %v1121 = vld [vmem:[#allocation14 + $0x18] sm:$0xff]
    %v1122 = vld [vmem:[#allocation14 + $0x20] sm:$0xff]
    %v1123 = vld [vmem:[#allocation14 + $0x28] sm:$0xff]
    %v1124 = vld [vmem:[#allocation14 + $0x30] sm:$0xff]
    %v1125 = vld [vmem:[#allocation14 + $0x38] sm:$0xff]
    %v1126 = vld [vmem:[#allocation14 + $0x40] sm:$0xff]
    %v1127 = vld [vmem:[#allocation14 + $0x48] sm:$0xff]
    %v1128 = vld [vmem:[#allocation14 + $0x50] sm:$0xff]
    %v1129 = vld [vmem:[#allocation14 + $0x58] sm:$0xff]
    %v1130 = vld [vmem:[#allocation14 + $0x60] sm:$0xff]
    %v1131 = vld [vmem:[#allocation14 + $0x68] sm:$0xff]
    %v1132 = vld [vmem:[#allocation14 + $0x70] sm:$0xff]
    %v1133 = vld [vmem:[#allocation14 + $0x78] sm:$0xff]
    %v1134 = vld [vmem:[#allocation16] sm:$0x1]
    %v1136 = vlaneseq
    %v1137 = vshrl.u32 %v1136, 7
    %v1138 = vsub.s32 0, %v1137
    %v1139 = vrot.slane %v1134, %v1138
    %1141 = vmatprep.subr.mxu0 0.0
    %1142 = vmatpush1.msra.mxu0 %v1118
    %1143 = vmatprep.subr.mxu0 0.0
    %1144 = vmatpush1.msra.mxu0 %v1119
    %1145 = vmatprep.subr.mxu0 0.0
    %1146 = vmatpush1.msra.mxu0 %v1120
    %1147 = vmatprep.subr.mxu0 0.0
    %1148 = vmatpush1.msra.mxu0 %v1121
    %1149 = vmatprep.subr.mxu0 0.0
    %1150 = vmatpush1.msra.mxu0 %v1122
    %1151 = vmatprep.subr.mxu0 0.0
    %1152 = vmatpush1.msra.mxu0 %v1123
    %1153 = vmatprep.subr.mxu0 0.0
    %1154 = vmatpush1.msra.mxu0 %v1124
    %1155 = vmatprep.subr.mxu0 0.0
    %1156 = vmatpush1.msra.mxu0 %v1125
    %1157 = vmatprep.subr.mxu0 0.0
    %1158 = vmatpush1.msra.mxu0 %v1126
    %1159 = vmatprep.subr.mxu0 0.0
    %1160 = vmatpush1.msra.mxu0 %v1127
    %1161 = vmatprep.subr.mxu0 0.0
    %1162 = vmatpush1.msra.mxu0 %v1128
    %1163 = vmatprep.subr.mxu0 0.0
    %1164 = vmatpush1.msra.mxu0 %v1129
    %1165 = vmatprep.subr.mxu0 0.0
    %1166 = vmatpush1.msra.mxu0 %v1130
    %1167 = vmatprep.subr.mxu0 0.0
    %1168 = vmatpush1.msra.mxu0 %v1131
    %1169 = vmatprep.subr.mxu0 0.0
    %1170 = vmatpush1.msra.mxu0 %v1132
    %1171 = vmatprep.subr.mxu0 0.0
    %1172 = vmatpush1.msra.mxu0 %v1133
    %1173 = vmatprep.subr.mxu0 0.0
    %1174 = vmatpush1.msra.mxu0 0.0
    %1175 = vmatprep.subr.mxu0 0.0
    %1176 = vmatpush1.msra.mxu0 0.0
    %1177 = vmatprep.subr.mxu0 0.0
    %1178 = vmatpush1.msra.mxu0 0.0
    %1179 = vmatprep.subr.mxu0 0.0
    %1180 = vmatpush1.msra.mxu0 0.0
    %1181 = vmatprep.subr.mxu0 0.0
    %1182 = vmatpush1.msra.mxu0 0.0
    %1183 = vmatprep.subr.mxu0 0.0
    %1184 = vmatpush1.msra.mxu0 0.0
    %1185 = vmatprep.subr.mxu0 0.0
    %1186 = vmatpush1.msra.mxu0 0.0
    %1187 = vmatprep.subr.mxu0 0.0
    %1188 = vmatpush1.msra.mxu0 0.0
    %1189 = vmatprep.subr.mxu0 0.0
    %1190 = vmatpush1.msra.mxu0 0.0
    %1191 = vmatprep.subr.mxu0 0.0
    %1192 = vmatpush1.msra.mxu0 0.0
    %1193 = vmatprep.subr.mxu0 0.0
    %1194 = vmatpush1.msra.mxu0 0.0
    %1195 = vmatprep.subr.mxu0 0.0
    %1196 = vmatpush1.msra.mxu0 0.0
    %1197 = vmatprep.subr.mxu0 0.0
    %1198 = vmatpush1.msra.mxu0 0.0
    %1199 = vmatprep.subr.mxu0 0.0
    %1200 = vmatpush1.msra.mxu0 0.0
    %1201 = vmatprep.subr.mxu0 0.0
    %1202 = vmatpush1.msra.mxu0 0.0
    %1203 = vmatprep.subr.mxu0 0.0
    %1204 = vmatpush1.msra.mxu0 0.0
    %1205 = vmatprep.mubr.f32.mxu0 0.0
    %1206 = vmatmul.mubr.f32.gmra.mrb[0].mxu0 %v590
    %v1207 = vpop.f32.mrb[0].mxu0
    %v1208 = vadd.f32 %v1139, %v1207
    %v1209 = vpop.f32.mrb[0].mxu0
    %1210 = vmatprep.mubr.f32.mxu0 0.0
    %1211 = vmatmul.mubr.f32.gmra.mrb[0].mxu0 %v591
    %v1212 = vpop.f32.mrb[0].mxu0
    %v1213 = vadd.f32 %v1139, %v1212
    %v1214 = vpop.f32.mrb[0].mxu0
    %1215 = vmatprep.mubr.f32.mxu0 0.0
    %1216 = vmatmul.mubr.f32.gmra.mrb[0].mxu0 %v592
    %v1217 = vpop.f32.mrb[0].mxu0
    %v1218 = vadd.f32 %v1139, %v1217
    %v1219 = vpop.f32.mrb[0].mxu0
    %1220 = vmatprep.mubr.f32.mxu0 0.0
    %1221 = vmatmul.mubr.f32.gmra.mrb[0].mxu0 %v593
    %v1222 = vpop.f32.mrb[0].mxu0
    %v1223 = vadd.f32 %v1139, %v1222
    %v1224 = vpop.f32.mrb[0].mxu0
    %1225 = vmatprep.mubr.f32.mxu0 0.0
    %1226 = vmatmul.mubr.f32.gmra.mrb[0].mxu0 %v594
    %v1227 = vpop.f32.mrb[0].mxu0
    %v1228 = vadd.f32 %v1139, %v1227
    %v1229 = vpop.f32.mrb[0].mxu0
    %1230 = vmatprep.mubr.f32.mxu0 0.0
    %1231 = vmatmul.mubr.f32.gmra.mrb[0].mxu0 %v595
    %v1232 = vpop.f32.mrb[0].mxu0
    %v1233 = vadd.f32 %v1139, %v1232
    %v1234 = vpop.f32.mrb[0].mxu0
    %1235 = vmatprep.mubr.f32.mxu0 0.0
    %1236 = vmatmul.mubr.f32.gmra.mrb[0].mxu0 %v596
    %v1237 = vpop.f32.mrb[0].mxu0
    %v1238 = vadd.f32 %v1139, %v1237
    %v1239 = vpop.f32.mrb[0].mxu0
    %1240 = vmatprep.mubr.f32.mxu0 0.0
    %1241 = vmatmul.mubr.f32.gmra.mrb[0].mxu0 %v597
    %v1242 = vpop.f32.mrb[0].mxu0
    %v1243 = vadd.f32 %v1139, %v1242
    %v1244 = vpop.f32.mrb[0].mxu0
    %1245 = vmatprep.mubr.f32.mxu0 0.0
    %1246 = vmatmul.mubr.f32.gmra.mrb[0].mxu0 %v598
    %v1247 = vpop.f32.mrb[0].mxu0
    %v1248 = vadd.f32 %v1139, %v1247
    %v1249 = vpop.f32.mrb[0].mxu0
    %1250 = vmatprep.mubr.f32.mxu0 0.0
    %1251 = vmatmul.mubr.f32.gmra.mrb[0].mxu0 %v599
    %v1252 = vpop.f32.mrb[0].mxu0
    %v1253 = vadd.f32 %v1139, %v1252
    %v1254 = vpop.f32.mrb[0].mxu0
    %1255 = vmatprep.mubr.f32.mxu0 0.0
    %1256 = vmatmul.mubr.f32.gmra.mrb[0].mxu0 %v600
    %v1257 = vpop.f32.mrb[0].mxu0
    %v1258 = vadd.f32 %v1139, %v1257
    %v1259 = vpop.f32.mrb[0].mxu0
    %1260 = vmatprep.mubr.f32.mxu0 0.0
    %1261 = vmatmul.mubr.f32.gmra.mrb[0].mxu0 %v601
    %v1262 = vpop.f32.mrb[0].mxu0
    %v1263 = vadd.f32 %v1139, %v1262
    %v1264 = vpop.f32.mrb[0].mxu0
    %1265 = vmatprep.mubr.f32.mxu0 0.0
    %1266 = vmatmul.mubr.f32.gmra.mrb[0].mxu0 %v602
    %v1267 = vpop.f32.mrb[0].mxu0
    %v1268 = vadd.f32 %v1139, %v1267
    %v1269 = vpop.f32.mrb[0].mxu0
    %1270 = vmatprep.mubr.f32.mxu0 0.0
    %1271 = vmatmul.mubr.f32.gmra.mrb[0].mxu0 %v603
    %v1272 = vpop.f32.mrb[0].mxu0
    %v1273 = vadd.f32 %v1139, %v1272
    %v1274 = vpop.f32.mrb[0].mxu0
    %1275 = vmatprep.mubr.f32.mxu0 0.0
    %1276 = vmatmul.mubr.f32.gmra.mrb[0].mxu0 %v604
    %v1277 = vpop.f32.mrb[0].mxu0
    %v1278 = vadd.f32 %v1139, %v1277
    %v1279 = vpop.f32.mrb[0].mxu0
    %1280 = vmatprep.mubr.f32.mxu0 0.0
    %1281 = vmatmul.mubr.f32.gmra.mrb[0].mxu0 %v605
    %v1282 = vpop.f32.mrb[0].mxu0
    %v1283 = vadd.f32 %v1139, %v1282
    %v1284 = vpop.f32.mrb[0].mxu0
    %1285 = vmatprep.mubr.f32.mxu0 0.0
    %1286 = vmatmul.mubr.f32.gmra.mrb[0].mxu0 %v606
    %v1287 = vpop.f32.mrb[0].mxu0
    %v1288 = vadd.f32 %v1139, %v1287
    %v1289 = vpop.f32.mrb[0].mxu0
    %1290 = vmatprep.mubr.f32.mxu0 0.0
    %1291 = vmatmul.mubr.f32.gmra.mrb[0].mxu0 %v607
    %v1292 = vpop.f32.mrb[0].mxu0
    %v1293 = vadd.f32 %v1139, %v1292
    %v1294 = vpop.f32.mrb[0].mxu0
    %1295 = vmatprep.mubr.f32.mxu0 0.0
    %1296 = vmatmul.mubr.f32.gmra.mrb[0].mxu0 %v608
    %v1297 = vpop.f32.mrb[0].mxu0
    %v1298 = vadd.f32 %v1139, %v1297
    %v1299 = vpop.f32.mrb[0].mxu0
    %1300 = vmatprep.mubr.f32.mxu0 0.0
    %1301 = vmatmul.mubr.f32.gmra.mrb[0].mxu0 %v609
    %v1302 = vpop.f32.mrb[0].mxu0
    %v1303 = vadd.f32 %v1139, %v1302
    %v1304 = vpop.f32.mrb[0].mxu0
    %1305 = vmatprep.mubr.f32.mxu0 0.0
    %1306 = vmatmul.mubr.f32.gmra.mrb[0].mxu0 %v610
    %v1307 = vpop.f32.mrb[0].mxu0
    %v1308 = vadd.f32 %v1139, %v1307
    %v1309 = vpop.f32.mrb[0].mxu0
    %1310 = vmatprep.mubr.f32.mxu0 0.0
    %1311 = vmatmul.mubr.f32.gmra.mrb[0].mxu0 %v611
    %v1312 = vpop.f32.mrb[0].mxu0
    %v1313 = vadd.f32 %v1139, %v1312
    %v1314 = vpop.f32.mrb[0].mxu0
    %1315 = vmatprep.mubr.f32.mxu0 0.0
    %1316 = vmatmul.mubr.f32.gmra.mrb[0].mxu0 %v612
    %v1317 = vpop.f32.mrb[0].mxu0
    %v1318 = vadd.f32 %v1139, %v1317
    %v1319 = vpop.f32.mrb[0].mxu0
    %1320 = vmatprep.mubr.f32.mxu0 0.0
    %1321 = vmatmul.mubr.f32.gmra.mrb[0].mxu0 %v613
    %v1322 = vpop.f32.mrb[0].mxu0
    %v1323 = vadd.f32 %v1139, %v1322
    %v1324 = vpop.f32.mrb[0].mxu0
    %1325 = vmatprep.mubr.f32.mxu0 0.0
    %1326 = vmatmul.mubr.f32.gmra.mrb[0].mxu0 %v614
    %v1327 = vpop.f32.mrb[0].mxu0
    %v1328 = vadd.f32 %v1139, %v1327
    %v1329 = vpop.f32.mrb[0].mxu0
    %1330 = vmatprep.mubr.f32.mxu0 0.0
    %1331 = vmatmul.mubr.f32.gmra.mrb[0].mxu0 %v615
    %v1332 = vpop.f32.mrb[0].mxu0
    %v1333 = vadd.f32 %v1139, %v1332
    %v1334 = vpop.f32.mrb[0].mxu0
    %1335 = vmatprep.mubr.f32.mxu0 0.0
    %1336 = vmatmul.mubr.f32.gmra.mrb[0].mxu0 %v616
    %v1337 = vpop.f32.mrb[0].mxu0
    %v1338 = vadd.f32 %v1139, %v1337
    %v1339 = vpop.f32.mrb[0].mxu0
    %1340 = vmatprep.mubr.f32.mxu0 0.0
    %1341 = vmatmul.mubr.f32.gmra.mrb[0].mxu0 %v617
    %v1342 = vpop.f32.mrb[0].mxu0
    %v1343 = vadd.f32 %v1139, %v1342
    %v1344 = vpop.f32.mrb[0].mxu0
    %1345 = vmatprep.mubr.f32.mxu0 0.0
    %1346 = vmatmul.mubr.f32.gmra.mrb[0].mxu0 %v618
    %v1347 = vpop.f32.mrb[0].mxu0
    %v1348 = vadd.f32 %v1139, %v1347
    %v1349 = vpop.f32.mrb[0].mxu0
    %1350 = vmatprep.mubr.f32.mxu0 0.0
    %1351 = vmatmul.mubr.f32.gmra.mrb[0].mxu0 %v619
    %v1352 = vpop.f32.mrb[0].mxu0
    %v1353 = vadd.f32 %v1139, %v1352
    %v1354 = vpop.f32.mrb[0].mxu0
    %1355 = vmatprep.mubr.f32.mxu0 0.0
    %1356 = vmatmul.mubr.f32.gmra.mrb[0].mxu0 %v620
    %v1357 = vpop.f32.mrb[0].mxu0
    %v1358 = vadd.f32 %v1139, %v1357
    %v1359 = vpop.f32.mrb[0].mxu0
    %1360 = vmatprep.mubr.f32.mxu0 0.0
    %1361 = vmatmul.mubr.f32.gmra.mrb[0].mxu0 %v621
    %v1362 = vpop.f32.mrb[0].mxu0
    %v1363 = vadd.f32 %v1139, %v1362
    %v1364 = vpop.f32.mrb[0].mxu0
    %1365 = vdwg.mxu0
    %v1366 = vld [vmem:[#allocation17] sm:$0xff]
    %v1367 = vld [vmem:[#allocation17 + $0x8] sm:$0xff]
    %v1368 = vld [vmem:[#allocation17 + $0x10] sm:$0xff]
    %v1369 = vld [vmem:[#allocation17 + $0x18] sm:$0xff]
    %v1370 = vld [vmem:[#allocation17 + $0x20] sm:$0xff]
    %v1371 = vld [vmem:[#allocation17 + $0x28] sm:$0xff]
    %v1372 = vld [vmem:[#allocation17 + $0x30] sm:$0xff]
    %v1373 = vld [vmem:[#allocation17 + $0x38] sm:$0xff]
    %v1374 = vld [vmem:[#allocation17 + $0x40] sm:$0xff]
    %v1375 = vld [vmem:[#allocation17 + $0x48] sm:$0xff]
    %v1376 = vld [vmem:[#allocation17 + $0x50] sm:$0xff]
    %v1377 = vld [vmem:[#allocation17 + $0x58] sm:$0xff]
    %v1378 = vld [vmem:[#allocation17 + $0x60] sm:$0xff]
    %v1379 = vld [vmem:[#allocation17 + $0x68] sm:$0xff]
    %v1380 = vld [vmem:[#allocation17 + $0x70] sm:$0xff]
    %v1381 = vld [vmem:[#allocation17 + $0x78] sm:$0xff]
    %v1382 = vld [vmem:[#allocation19] sm:$0x1]
    %v1384 = vlaneseq
    %v1385 = vshrl.u32 %v1384, 7
    %v1386 = vsub.s32 0, %v1385
    %v1387 = vrot.slane %v1382, %v1386
    %1389 = vmatprep.subr.mxu0 0.0
    %1390 = vmatpush1.msra.mxu0 %v1366
    %1391 = vmatprep.subr.mxu0 0.0
    %1392 = vmatpush1.msra.mxu0 %v1367
    %1393 = vmatprep.subr.mxu0 0.0
    %1394 = vmatpush1.msra.mxu0 %v1368
    %1395 = vmatprep.subr.mxu0 0.0
    %1396 = vmatpush1.msra.mxu0 %v1369
    %1397 = vmatprep.subr.mxu0 0.0
    %1398 = vmatpush1.msra.mxu0 %v1370
    %1399 = vmatprep.subr.mxu0 0.0
    %1400 = vmatpush1.msra.mxu0 %v1371
    %1401 = vmatprep.subr.mxu0 0.0
    %1402 = vmatpush1.msra.mxu0 %v1372
    %1403 = vmatprep.subr.mxu0 0.0
    %1404 = vmatpush1.msra.mxu0 %v1373
    %1405 = vmatprep.subr.mxu0 0.0
    %1406 = vmatpush1.msra.mxu0 %v1374
    %1407 = vmatprep.subr.mxu0 0.0
    %1408 = vmatpush1.msra.mxu0 %v1375
    %1409 = vmatprep.subr.mxu0 0.0
    %1410 = vmatpush1.msra.mxu0 %v1376
    %1411 = vmatprep.subr.mxu0 0.0
    %1412 = vmatpush1.msra.mxu0 %v1377
    %1413 = vmatprep.subr.mxu0 0.0
    %1414 = vmatpush1.msra.mxu0 %v1378
    %1415 = vmatprep.subr.mxu0 0.0
    %1416 = vmatpush1.msra.mxu0 %v1379
    %1417 = vmatprep.subr.mxu0 0.0
    %1418 = vmatpush1.msra.mxu0 %v1380
    %1419 = vmatprep.subr.mxu0 0.0
    %1420 = vmatpush1.msra.mxu0 %v1381
    %1421 = vmatprep.subr.mxu0 0.0
    %1422 = vmatpush1.msra.mxu0 0.0
    %1423 = vmatprep.subr.mxu0 0.0
    %1424 = vmatpush1.msra.mxu0 0.0
    %1425 = vmatprep.subr.mxu0 0.0
    %1426 = vmatpush1.msra.mxu0 0.0
    %1427 = vmatprep.subr.mxu0 0.0
    %1428 = vmatpush1.msra.mxu0 0.0
    %1429 = vmatprep.subr.mxu0 0.0
    %1430 = vmatpush1.msra.mxu0 0.0
    %1431 = vmatprep.subr.mxu0 0.0
    %1432 = vmatpush1.msra.mxu0 0.0
    %1433 = vmatprep.subr.mxu0 0.0
    %1434 = vmatpush1.msra.mxu0 0.0
    %1435 = vmatprep.subr.mxu0 0.0
    %1436 = vmatpush1.msra.mxu0 0.0
    %1437 = vmatprep.subr.mxu0 0.0
    %1438 = vmatpush1.msra.mxu0 0.0
    %1439 = vmatprep.subr.mxu0 0.0
    %1440 = vmatpush1.msra.mxu0 0.0
    %1441 = vmatprep.subr.mxu0 0.0
    %1442 = vmatpush1.msra.mxu0 0.0
    %1443 = vmatprep.subr.mxu0 0.0
    %1444 = vmatpush1.msra.mxu0 0.0
    %1445 = vmatprep.subr.mxu0 0.0
    %1446 = vmatpush1.msra.mxu0 0.0
    %1447 = vmatprep.subr.mxu0 0.0
    %1448 = vmatpush1.msra.mxu0 0.0
    %1449 = vmatprep.subr.mxu0 0.0
    %1450 = vmatpush1.msra.mxu0 0.0
    %1451 = vmatprep.subr.mxu0 0.0
    %1452 = vmatpush1.msra.mxu0 0.0
    %1453 = vmatprep.mubr.f32.mxu0 0.0
    %1454 = vmatmul.mubr.f32.gmra.mrb[0].mxu0 %v590
    %v1455 = vpop.f32.mrb[0].mxu0
    %v1456 = vadd.f32 %v1387, %v1455
    %v1457 = vpop.f32.mrb[0].mxu0
    %1458 = vmatprep.mubr.f32.mxu0 0.0
    %1459 = vmatmul.mubr.f32.gmra.mrb[0].mxu0 %v591
    %v1460 = vpop.f32.mrb[0].mxu0
    %v1461 = vadd.f32 %v1387, %v1460
    %v1462 = vpop.f32.mrb[0].mxu0
    %1463 = vmatprep.mubr.f32.mxu0 0.0
    %1464 = vmatmul.mubr.f32.gmra.mrb[0].mxu0 %v592
    %v1465 = vpop.f32.mrb[0].mxu0
    %v1466 = vadd.f32 %v1387, %v1465
    %v1467 = vpop.f32.mrb[0].mxu0
    %1468 = vmatprep.mubr.f32.mxu0 0.0
    %1469 = vmatmul.mubr.f32.gmra.mrb[0].mxu0 %v593
    %v1470 = vpop.f32.mrb[0].mxu0
    %v1471 = vadd.f32 %v1387, %v1470
    %v1472 = vpop.f32.mrb[0].mxu0
    %1473 = vmatprep.mubr.f32.mxu0 0.0
    %1474 = vmatmul.mubr.f32.gmra.mrb[0].mxu0 %v594
    %v1475 = vpop.f32.mrb[0].mxu0
    %v1476 = vadd.f32 %v1387, %v1475
    %v1477 = vpop.f32.mrb[0].mxu0
    %1478 = vmatprep.mubr.f32.mxu0 0.0
    %1479 = vmatmul.mubr.f32.gmra.mrb[0].mxu0 %v595
    %v1480 = vpop.f32.mrb[0].mxu0
    %v1481 = vadd.f32 %v1387, %v1480
    %v1482 = vpop.f32.mrb[0].mxu0
    %1483 = vmatprep.mubr.f32.mxu0 0.0
    %1484 = vmatmul.mubr.f32.gmra.mrb[0].mxu0 %v596
    %v1485 = vpop.f32.mrb[0].mxu0
    %v1486 = vadd.f32 %v1387, %v1485
    %v1487 = vpop.f32.mrb[0].mxu0
    %1488 = vmatprep.mubr.f32.mxu0 0.0
    %1489 = vmatmul.mubr.f32.gmra.mrb[0].mxu0 %v597
    %v1490 = vpop.f32.mrb[0].mxu0
    %v1491 = vadd.f32 %v1387, %v1490
    %v1492 = vpop.f32.mrb[0].mxu0
    %1493 = vmatprep.mubr.f32.mxu0 0.0
    %1494 = vmatmul.mubr.f32.gmra.mrb[0].mxu0 %v598
    %v1495 = vpop.f32.mrb[0].mxu0
    %v1496 = vadd.f32 %v1387, %v1495
    %v1497 = vpop.f32.mrb[0].mxu0
    %1498 = vmatprep.mubr.f32.mxu0 0.0
    %1499 = vmatmul.mubr.f32.gmra.mrb[0].mxu0 %v599
    %v1500 = vpop.f32.mrb[0].mxu0
    %v1501 = vadd.f32 %v1387, %v1500
    %v1502 = vpop.f32.mrb[0].mxu0
    %1503 = vmatprep.mubr.f32.mxu0 0.0
    %1504 = vmatmul.mubr.f32.gmra.mrb[0].mxu0 %v600
    %v1505 = vpop.f32.mrb[0].mxu0
    %v1506 = vadd.f32 %v1387, %v1505
    %v1507 = vpop.f32.mrb[0].mxu0
    %1508 = vmatprep.mubr.f32.mxu0 0.0
    %1509 = vmatmul.mubr.f32.gmra.mrb[0].mxu0 %v601
    %v1510 = vpop.f32.mrb[0].mxu0
    %v1511 = vadd.f32 %v1387, %v1510
    %v1512 = vpop.f32.mrb[0].mxu0
    %1513 = vmatprep.mubr.f32.mxu0 0.0
    %1514 = vmatmul.mubr.f32.gmra.mrb[0].mxu0 %v602
    %v1515 = vpop.f32.mrb[0].mxu0
    %v1516 = vadd.f32 %v1387, %v1515
    %v1517 = vpop.f32.mrb[0].mxu0
    %1518 = vmatprep.mubr.f32.mxu0 0.0
    %1519 = vmatmul.mubr.f32.gmra.mrb[0].mxu0 %v603
    %v1520 = vpop.f32.mrb[0].mxu0
    %v1521 = vadd.f32 %v1387, %v1520
    %v1522 = vpop.f32.mrb[0].mxu0
    %1523 = vmatprep.mubr.f32.mxu0 0.0
    %1524 = vmatmul.mubr.f32.gmra.mrb[0].mxu0 %v604
    %v1525 = vpop.f32.mrb[0].mxu0
    %v1526 = vadd.f32 %v1387, %v1525
    %v1527 = vpop.f32.mrb[0].mxu0
    %1528 = vmatprep.mubr.f32.mxu0 0.0
    %1529 = vmatmul.mubr.f32.gmra.mrb[0].mxu0 %v605
    %v1530 = vpop.f32.mrb[0].mxu0
    %v1531 = vadd.f32 %v1387, %v1530
    %v1532 = vpop.f32.mrb[0].mxu0
    %1533 = vmatprep.mubr.f32.mxu0 0.0
    %1534 = vmatmul.mubr.f32.gmra.mrb[0].mxu0 %v606
    %v1535 = vpop.f32.mrb[0].mxu0
    %v1536 = vadd.f32 %v1387, %v1535
    %v1537 = vpop.f32.mrb[0].mxu0
    %1538 = vmatprep.mubr.f32.mxu0 0.0
    %1539 = vmatmul.mubr.f32.gmra.mrb[0].mxu0 %v607
    %v1540 = vpop.f32.mrb[0].mxu0
    %v1541 = vadd.f32 %v1387, %v1540
    %v1542 = vpop.f32.mrb[0].mxu0
    %1543 = vmatprep.mubr.f32.mxu0 0.0
    %1544 = vmatmul.mubr.f32.gmra.mrb[0].mxu0 %v608
    %v1545 = vpop.f32.mrb[0].mxu0
    %v1546 = vadd.f32 %v1387, %v1545
    %v1547 = vpop.f32.mrb[0].mxu0
    %1548 = vmatprep.mubr.f32.mxu0 0.0
    %1549 = vmatmul.mubr.f32.gmra.mrb[0].mxu0 %v609
    %v1550 = vpop.f32.mrb[0].mxu0
    %v1551 = vadd.f32 %v1387, %v1550
    %v1552 = vpop.f32.mrb[0].mxu0
    %1553 = vmatprep.mubr.f32.mxu0 0.0
    %1554 = vmatmul.mubr.f32.gmra.mrb[0].mxu0 %v610
    %v1555 = vpop.f32.mrb[0].mxu0
    %v1556 = vadd.f32 %v1387, %v1555
    %v1557 = vpop.f32.mrb[0].mxu0
    %1558 = vmatprep.mubr.f32.mxu0 0.0
    %1559 = vmatmul.mubr.f32.gmra.mrb[0].mxu0 %v611
    %v1560 = vpop.f32.mrb[0].mxu0
    %v1561 = vadd.f32 %v1387, %v1560
    %v1562 = vpop.f32.mrb[0].mxu0
    %1563 = vmatprep.mubr.f32.mxu0 0.0
    %1564 = vmatmul.mubr.f32.gmra.mrb[0].mxu0 %v612
    %v1565 = vpop.f32.mrb[0].mxu0
    %v1566 = vadd.f32 %v1387, %v1565
    %v1567 = vpop.f32.mrb[0].mxu0
    %1568 = vmatprep.mubr.f32.mxu0 0.0
    %1569 = vmatmul.mubr.f32.gmra.mrb[0].mxu0 %v613
    %v1570 = vpop.f32.mrb[0].mxu0
    %v1571 = vadd.f32 %v1387, %v1570
    %v1572 = vpop.f32.mrb[0].mxu0
    %1573 = vmatprep.mubr.f32.mxu0 0.0
    %1574 = vmatmul.mubr.f32.gmra.mrb[0].mxu0 %v614
    %v1575 = vpop.f32.mrb[0].mxu0
    %v1576 = vadd.f32 %v1387, %v1575
    %v1577 = vpop.f32.mrb[0].mxu0
    %1578 = vmatprep.mubr.f32.mxu0 0.0
    %1579 = vmatmul.mubr.f32.gmra.mrb[0].mxu0 %v615
    %v1580 = vpop.f32.mrb[0].mxu0
    %v1581 = vadd.f32 %v1387, %v1580
    %v1582 = vpop.f32.mrb[0].mxu0
    %1583 = vmatprep.mubr.f32.mxu0 0.0
    %1584 = vmatmul.mubr.f32.gmra.mrb[0].mxu0 %v616
    %v1585 = vpop.f32.mrb[0].mxu0
    %v1586 = vadd.f32 %v1387, %v1585
    %v1587 = vpop.f32.mrb[0].mxu0
    %1588 = vmatprep.mubr.f32.mxu0 0.0
    %1589 = vmatmul.mubr.f32.gmra.mrb[0].mxu0 %v617
    %v1590 = vpop.f32.mrb[0].mxu0
    %v1591 = vadd.f32 %v1387, %v1590
    %v1592 = vpop.f32.mrb[0].mxu0
    %1593 = vmatprep.mubr.f32.mxu0 0.0
    %1594 = vmatmul.mubr.f32.gmra.mrb[0].mxu0 %v618
    %v1595 = vpop.f32.mrb[0].mxu0
    %v1596 = vadd.f32 %v1387, %v1595
    %v1597 = vpop.f32.mrb[0].mxu0
    %1598 = vmatprep.mubr.f32.mxu0 0.0
    %1599 = vmatmul.mubr.f32.gmra.mrb[0].mxu0 %v619
    %v1600 = vpop.f32.mrb[0].mxu0
    %v1601 = vadd.f32 %v1387, %v1600
    %v1602 = vpop.f32.mrb[0].mxu0
    %1603 = vmatprep.mubr.f32.mxu0 0.0
    %1604 = vmatmul.mubr.f32.gmra.mrb[0].mxu0 %v620
    %v1605 = vpop.f32.mrb[0].mxu0
    %v1606 = vadd.f32 %v1387, %v1605
    %v1607 = vpop.f32.mrb[0].mxu0
    %1608 = vmatprep.mubr.f32.mxu0 0.0
    %1609 = vmatmul.mubr.f32.gmra.mrb[0].mxu0 %v621
    %v1610 = vpop.f32.mrb[0].mxu0
    %v1611 = vadd.f32 %v1387, %v1610
    %v1612 = vpop.f32.mrb[0].mxu0
    %1613 = vdwg.mxu0
    %v1614 = vld [vmem:[#allocation20] sm:$0xff]
    %v1615 = vld [vmem:[#allocation20 + $0x8] sm:$0xff]
    %v1616 = vld [vmem:[#allocation20 + $0x10] sm:$0xff]
    %v1617 = vld [vmem:[#allocation20 + $0x18] sm:$0xff]
    %v1618 = vld [vmem:[#allocation20 + $0x20] sm:$0xff]
    %v1619 = vld [vmem:[#allocation20 + $0x28] sm:$0xff]
    %v1620 = vld [vmem:[#allocation20 + $0x30] sm:$0xff]
    %v1621 = vld [vmem:[#allocation20 + $0x38] sm:$0xff]
    %v1622 = vld [vmem:[#allocation20 + $0x40] sm:$0xff]
    %v1623 = vld [vmem:[#allocation20 + $0x48] sm:$0xff]
    %v1624 = vld [vmem:[#allocation20 + $0x50] sm:$0xff]
    %v1625 = vld [vmem:[#allocation20 + $0x58] sm:$0xff]
    %v1626 = vld [vmem:[#allocation20 + $0x60] sm:$0xff]
    %v1627 = vld [vmem:[#allocation20 + $0x68] sm:$0xff]
    %v1628 = vld [vmem:[#allocation20 + $0x70] sm:$0xff]
    %v1629 = vld [vmem:[#allocation20 + $0x78] sm:$0xff]
    %v1630 = vunpack.c.0.s8 %v1614
    %v1631 = vunpack.c.0.s8 %v1615
    %v1632 = vunpack.c.1.s8 %v1614
    %v1633 = vunpack.c.1.s8 %v1615
    %v1634 = vunpack.c.2.s8 %v1614
    %v1635 = vunpack.c.2.s8 %v1615
    %v1636 = vunpack.c.3.s8 %v1614
    %v1637 = vunpack.c.3.s8 %v1615
    %v1638 = vunpack.c.0.s8 %v1616
    %v1639 = vunpack.c.0.s8 %v1617
    %v1640 = vunpack.c.1.s8 %v1616
    %v1641 = vunpack.c.1.s8 %v1617
    %v1642 = vunpack.c.2.s8 %v1616
    %v1643 = vunpack.c.2.s8 %v1617
    %v1644 = vunpack.c.3.s8 %v1616
    %v1645 = vunpack.c.3.s8 %v1617
    %v1646 = vunpack.c.0.s8 %v1618
    %v1647 = vunpack.c.0.s8 %v1619
    %v1648 = vunpack.c.1.s8 %v1618
    %v1649 = vunpack.c.1.s8 %v1619
    %v1650 = vunpack.c.2.s8 %v1618
    %v1651 = vunpack.c.2.s8 %v1619
    %v1652 = vunpack.c.3.s8 %v1618
    %v1653 = vunpack.c.3.s8 %v1619
    %v1654 = vunpack.c.0.s8 %v1620
    %v1655 = vunpack.c.0.s8 %v1621
    %v1656 = vunpack.c.1.s8 %v1620
    %v1657 = vunpack.c.1.s8 %v1621
    %v1658 = vunpack.c.2.s8 %v1620
    %v1659 = vunpack.c.2.s8 %v1621
    %v1660 = vunpack.c.3.s8 %v1620
    %v1661 = vunpack.c.3.s8 %v1621
    %v1662 = vunpack.c.0.s8 %v1622
    %v1663 = vunpack.c.0.s8 %v1623
    %v1664 = vunpack.c.1.s8 %v1622
    %v1665 = vunpack.c.1.s8 %v1623
    %v1666 = vunpack.c.2.s8 %v1622
    %v1667 = vunpack.c.2.s8 %v1623
    %v1668 = vunpack.c.3.s8 %v1622
    %v1669 = vunpack.c.3.s8 %v1623
    %v1670 = vunpack.c.0.s8 %v1624
    %v1671 = vunpack.c.0.s8 %v1625
    %v1672 = vunpack.c.1.s8 %v1624
    %v1673 = vunpack.c.1.s8 %v1625
    %v1674 = vunpack.c.2.s8 %v1624
    %v1675 = vunpack.c.2.s8 %v1625
    %v1676 = vunpack.c.3.s8 %v1624
    %v1677 = vunpack.c.3.s8 %v1625
    %v1678 = vunpack.c.0.s8 %v1626
    %v1679 = vunpack.c.0.s8 %v1627
    %v1680 = vunpack.c.1.s8 %v1626
    %v1681 = vunpack.c.1.s8 %v1627
    %v1682 = vunpack.c.2.s8 %v1626
    %v1683 = vunpack.c.2.s8 %v1627
    %v1684 = vunpack.c.3.s8 %v1626
    %v1685 = vunpack.c.3.s8 %v1627
    %v1686 = vunpack.c.0.s8 %v1628
    %v1687 = vunpack.c.0.s8 %v1629
    %v1688 = vunpack.c.1.s8 %v1628
    %v1689 = vunpack.c.1.s8 %v1629
    %v1690 = vunpack.c.2.s8 %v1628
    %v1691 = vunpack.c.2.s8 %v1629
    %v1692 = vunpack.c.3.s8 %v1628
    %v1693 = vunpack.c.3.s8 %v1629
    %v1694 = vcvt.s32.f32 %v1630
    %v1695 = vcvt.s32.f32 %v1631
    %v1696 = vcvt.s32.f32 %v1632
    %v1697 = vcvt.s32.f32 %v1633
    %v1698 = vcvt.s32.f32 %v1634
    %v1699 = vcvt.s32.f32 %v1635
    %v1700 = vcvt.s32.f32 %v1636
    %v1701 = vcvt.s32.f32 %v1637
    %v1702 = vcvt.s32.f32 %v1638
    %v1703 = vcvt.s32.f32 %v1639
    %v1704 = vcvt.s32.f32 %v1640
    %v1705 = vcvt.s32.f32 %v1641
    %v1706 = vcvt.s32.f32 %v1642
    %v1707 = vcvt.s32.f32 %v1643
    %v1708 = vcvt.s32.f32 %v1644
    %v1709 = vcvt.s32.f32 %v1645
    %v1710 = vcvt.s32.f32 %v1646
    %v1711 = vcvt.s32.f32 %v1647
    %v1712 = vcvt.s32.f32 %v1648
    %v1713 = vcvt.s32.f32 %v1649
    %v1714 = vcvt.s32.f32 %v1650
    %v1715 = vcvt.s32.f32 %v1651
    %v1716 = vcvt.s32.f32 %v1652
    %v1717 = vcvt.s32.f32 %v1653
    %v1718 = vcvt.s32.f32 %v1654
    %v1719 = vcvt.s32.f32 %v1655
    %v1720 = vcvt.s32.f32 %v1656
    %v1721 = vcvt.s32.f32 %v1657
    %v1722 = vcvt.s32.f32 %v1658
    %v1723 = vcvt.s32.f32 %v1659
    %v1724 = vcvt.s32.f32 %v1660
    %v1725 = vcvt.s32.f32 %v1661
    %v1726 = vcvt.s32.f32 %v1662
    %v1727 = vcvt.s32.f32 %v1663
    %v1728 = vcvt.s32.f32 %v1664
    %v1729 = vcvt.s32.f32 %v1665
    %v1730 = vcvt.s32.f32 %v1666
    %v1731 = vcvt.s32.f32 %v1667
    %v1732 = vcvt.s32.f32 %v1668
    %v1733 = vcvt.s32.f32 %v1669
    %v1734 = vcvt.s32.f32 %v1670
    %v1735 = vcvt.s32.f32 %v1671
    %v1736 = vcvt.s32.f32 %v1672
    %v1737 = vcvt.s32.f32 %v1673
    %v1738 = vcvt.s32.f32 %v1674
    %v1739 = vcvt.s32.f32 %v1675
    %v1740 = vcvt.s32.f32 %v1676
    %v1741 = vcvt.s32.f32 %v1677
    %v1742 = vcvt.s32.f32 %v1678
    %v1743 = vcvt.s32.f32 %v1679
    %v1744 = vcvt.s32.f32 %v1680
    %v1745 = vcvt.s32.f32 %v1681
    %v1746 = vcvt.s32.f32 %v1682
    %v1747 = vcvt.s32.f32 %v1683
    %v1748 = vcvt.s32.f32 %v1684
    %v1749 = vcvt.s32.f32 %v1685
    %v1750 = vcvt.s32.f32 %v1686
    %v1751 = vcvt.s32.f32 %v1687
    %v1752 = vcvt.s32.f32 %v1688
    %v1753 = vcvt.s32.f32 %v1689
    %v1754 = vcvt.s32.f32 %v1690
    %v1755 = vcvt.s32.f32 %v1691
    %v1756 = vcvt.s32.f32 %v1692
    %v1757 = vcvt.s32.f32 %v1693
    %1758 = vmatprep.subr.mxu0 0.0
    %1759 = vmatpush1.xpose.msra.mxu0 %v960
    %1760 = vmatprep.subr.mxu0 0.0
    %1761 = vmatpush1.xpose.msra.mxu0 %v965
    %1762 = vmatprep.subr.mxu0 0.0
    %1763 = vmatpush1.xpose.msra.mxu0 %v970
    %1764 = vmatprep.subr.mxu0 0.0
    %1765 = vmatpush1.xpose.msra.mxu0 %v975
    %1766 = vmatprep.subr.mxu0 0.0
    %1767 = vmatpush1.xpose.msra.mxu0 %v980
    %1768 = vmatprep.subr.mxu0 0.0
    %1769 = vmatpush1.xpose.msra.mxu0 %v985
    %1770 = vmatprep.subr.mxu0 0.0
    %1771 = vmatpush1.xpose.msra.mxu0 %v990
    %1772 = vmatprep.subr.mxu0 0.0
    %1773 = vmatpush1.xpose.msra.mxu0 %v995
    %1774 = vmatprep.subr.mxu0 0.0
    %1775 = vmatpush1.xpose.msra.mxu0 %v1000
    %1776 = vmatprep.subr.mxu0 0.0
    %1777 = vmatpush1.xpose.msra.mxu0 %v1005
    %1778 = vmatprep.subr.mxu0 0.0
    %1779 = vmatpush1.xpose.msra.mxu0 %v1010
    %1780 = vmatprep.subr.mxu0 0.0
    %1781 = vmatpush1.xpose.msra.mxu0 %v1015
    %1782 = vmatprep.subr.mxu0 0.0
    %1783 = vmatpush1.xpose.msra.mxu0 %v1020
    %1784 = vmatprep.subr.mxu0 0.0
    %1785 = vmatpush1.xpose.msra.mxu0 %v1025
    %1786 = vmatprep.subr.mxu0 0.0
    %1787 = vmatpush1.xpose.msra.mxu0 %v1030
    %1788 = vmatprep.subr.mxu0 0.0
    %1789 = vmatpush1.xpose.msra.mxu0 %v1035
    %1790 = vmatprep.subr.mxu0 0.0
    %1791 = vmatpush1.xpose.msra.mxu0 %v1040
    %1792 = vmatprep.subr.mxu0 0.0
    %1793 = vmatpush1.xpose.msra.mxu0 %v1045
    %1794 = vmatprep.subr.mxu0 0.0
    %1795 = vmatpush1.xpose.msra.mxu0 %v1050
    %1796 = vmatprep.subr.mxu0 0.0
    %1797 = vmatpush1.xpose.msra.mxu0 %v1055
    %1798 = vmatprep.subr.mxu0 0.0
    %1799 = vmatpush1.xpose.msra.mxu0 %v1060
    %1800 = vmatprep.subr.mxu0 0.0
    %1801 = vmatpush1.xpose.msra.mxu0 %v1065
    %1802 = vmatprep.subr.mxu0 0.0
    %1803 = vmatpush1.xpose.msra.mxu0 %v1070
    %1804 = vmatprep.subr.mxu0 0.0
    %1805 = vmatpush1.xpose.msra.mxu0 %v1075
    %1806 = vmatprep.subr.mxu0 0.0
    %1807 = vmatpush1.xpose.msra.mxu0 %v1080
    %1808 = vmatprep.subr.mxu0 0.0
    %1809 = vmatpush1.xpose.msra.mxu0 %v1085
    %1810 = vmatprep.subr.mxu0 0.0
    %1811 = vmatpush1.xpose.msra.mxu0 %v1090
    %1812 = vmatprep.subr.mxu0 0.0
    %1813 = vmatpush1.xpose.msra.mxu0 %v1095
    %1814 = vmatprep.subr.mxu0 0.0
    %1815 = vmatpush1.xpose.msra.mxu0 %v1100
    %1816 = vmatprep.subr.mxu0 0.0
    %1817 = vmatpush1.xpose.msra.mxu0 %v1105
    %1818 = vmatprep.subr.mxu0 0.0
    %1819 = vmatpush1.xpose.msra.mxu0 %v1110
    %1820 = vmatprep.subr.mxu0 0.0
    %1821 = vmatpush1.xpose.msra.mxu0 %v1115
    %1822 = vmatprep.mubr.f32.mxu0 0.0
    %1823 = vmatmul.mubr.f32.gmra.mrb[0].mxu0 %v712
    %v1824 = vpop.f32.mrb[0].mxu0
    %v1825 = vadd.f32 0.0, %v1824
    %v1826 = vpop.f32.mrb[0].mxu0
    %v1827 = vadd.f32 0.0, %v1826
    %1828 = vmatprep.mubr.f32.mxu0 0.0
    %1829 = vmatmul.mubr.f32.gmra.mrb[0].mxu0 %v717
    %v1830 = vpop.f32.mrb[0].mxu0
    %v1831 = vadd.f32 0.0, %v1830
    %v1832 = vpop.f32.mrb[0].mxu0
    %v1833 = vadd.f32 0.0, %v1832
    %1834 = vmatprep.mubr.f32.mxu0 0.0
    %1835 = vmatmul.mubr.f32.gmra.mrb[0].mxu0 %v722
    %v1836 = vpop.f32.mrb[0].mxu0
    %v1837 = vadd.f32 0.0, %v1836
    %v1838 = vpop.f32.mrb[0].mxu0
    %v1839 = vadd.f32 0.0, %v1838
    %1840 = vmatprep.mubr.f32.mxu0 0.0
    %1841 = vmatmul.mubr.f32.gmra.mrb[0].mxu0 %v727
    %v1842 = vpop.f32.mrb[0].mxu0
    %v1843 = vadd.f32 0.0, %v1842
    %v1844 = vpop.f32.mrb[0].mxu0
    %v1845 = vadd.f32 0.0, %v1844
    %1846 = vmatprep.mubr.f32.mxu0 0.0
    %1847 = vmatmul.mubr.f32.gmra.mrb[0].mxu0 %v732
    %v1848 = vpop.f32.mrb[0].mxu0
    %v1849 = vadd.f32 0.0, %v1848
    %v1850 = vpop.f32.mrb[0].mxu0
    %v1851 = vadd.f32 0.0, %v1850
    %1852 = vmatprep.mubr.f32.mxu0 0.0
    %1853 = vmatmul.mubr.f32.gmra.mrb[0].mxu0 %v737
    %v1854 = vpop.f32.mrb[0].mxu0
    %v1855 = vadd.f32 0.0, %v1854
    %v1856 = vpop.f32.mrb[0].mxu0
    %v1857 = vadd.f32 0.0, %v1856
    %1858 = vmatprep.mubr.f32.mxu0 0.0
    %1859 = vmatmul.mubr.f32.gmra.mrb[0].mxu0 %v742
    %v1860 = vpop.f32.mrb[0].mxu0
    %v1861 = vadd.f32 0.0, %v1860
    %v1862 = vpop.f32.mrb[0].mxu0
    %v1863 = vadd.f32 0.0, %v1862
    %1864 = vmatprep.mubr.f32.mxu0 0.0
    %1865 = vmatmul.mubr.f32.gmra.mrb[0].mxu0 %v747
    %v1866 = vpop.f32.mrb[0].mxu0
    %v1867 = vadd.f32 0.0, %v1866
    %v1868 = vpop.f32.mrb[0].mxu0
    %v1869 = vadd.f32 0.0, %v1868
    %1870 = vmatprep.mubr.f32.mxu0 0.0
    %1871 = vmatmul.mubr.f32.gmra.mrb[0].mxu0 %v752
    %v1872 = vpop.f32.mrb[0].mxu0
    %v1873 = vadd.f32 0.0, %v1872
    %v1874 = vpop.f32.mrb[0].mxu0
    %v1875 = vadd.f32 0.0, %v1874
    %1876 = vmatprep.mubr.f32.mxu0 0.0
    %1877 = vmatmul.mubr.f32.gmra.mrb[0].mxu0 %v757
    %v1878 = vpop.f32.mrb[0].mxu0
    %v1879 = vadd.f32 0.0, %v1878
    %v1880 = vpop.f32.mrb[0].mxu0
    %v1881 = vadd.f32 0.0, %v1880
    %1882 = vmatprep.mubr.f32.mxu0 0.0
    %1883 = vmatmul.mubr.f32.gmra.mrb[0].mxu0 %v762
    %v1884 = vpop.f32.mrb[0].mxu0
    %v1885 = vadd.f32 0.0, %v1884
    %v1886 = vpop.f32.mrb[0].mxu0
    %v1887 = vadd.f32 0.0, %v1886
    %1888 = vmatprep.mubr.f32.mxu0 0.0
    %1889 = vmatmul.mubr.f32.gmra.mrb[0].mxu0 %v767
    %v1890 = vpop.f32.mrb[0].mxu0
    %v1891 = vadd.f32 0.0, %v1890
    %v1892 = vpop.f32.mrb[0].mxu0
    %v1893 = vadd.f32 0.0, %v1892
    %1894 = vmatprep.mubr.f32.mxu0 0.0
    %1895 = vmatmul.mubr.f32.gmra.mrb[0].mxu0 %v772
    %v1896 = vpop.f32.mrb[0].mxu0
    %v1897 = vadd.f32 0.0, %v1896
    %v1898 = vpop.f32.mrb[0].mxu0
    %v1899 = vadd.f32 0.0, %v1898
    %1900 = vmatprep.mubr.f32.mxu0 0.0
    %1901 = vmatmul.mubr.f32.gmra.mrb[0].mxu0 %v777
    %v1902 = vpop.f32.mrb[0].mxu0
    %v1903 = vadd.f32 0.0, %v1902
    %v1904 = vpop.f32.mrb[0].mxu0
    %v1905 = vadd.f32 0.0, %v1904
    %1906 = vmatprep.mubr.f32.mxu0 0.0
    %1907 = vmatmul.mubr.f32.gmra.mrb[0].mxu0 %v782
    %v1908 = vpop.f32.mrb[0].mxu0
    %v1909 = vadd.f32 0.0, %v1908
    %v1910 = vpop.f32.mrb[0].mxu0
    %v1911 = vadd.f32 0.0, %v1910
    %1912 = vmatprep.mubr.f32.mxu0 0.0
    %1913 = vmatmul.mubr.f32.gmra.mrb[0].mxu0 %v787
    %v1914 = vpop.f32.mrb[0].mxu0
    %v1915 = vadd.f32 0.0, %v1914
    %v1916 = vpop.f32.mrb[0].mxu0
    %v1917 = vadd.f32 0.0, %v1916
    %1918 = vmatprep.mubr.f32.mxu0 0.0
    %1919 = vmatmul.mubr.f32.gmra.mrb[0].mxu0 %v792
    %v1920 = vpop.f32.mrb[0].mxu0
    %v1921 = vadd.f32 0.0, %v1920
    %v1922 = vpop.f32.mrb[0].mxu0
    %v1923 = vadd.f32 0.0, %v1922
    %1924 = vmatprep.mubr.f32.mxu0 0.0
    %1925 = vmatmul.mubr.f32.gmra.mrb[0].mxu0 %v797
    %v1926 = vpop.f32.mrb[0].mxu0
    %v1927 = vadd.f32 0.0, %v1926
    %v1928 = vpop.f32.mrb[0].mxu0
    %v1929 = vadd.f32 0.0, %v1928
    %1930 = vmatprep.mubr.f32.mxu0 0.0
    %1931 = vmatmul.mubr.f32.gmra.mrb[0].mxu0 %v802
    %v1932 = vpop.f32.mrb[0].mxu0
    %v1933 = vadd.f32 0.0, %v1932
    %v1934 = vpop.f32.mrb[0].mxu0
    %v1935 = vadd.f32 0.0, %v1934
    %1936 = vmatprep.mubr.f32.mxu0 0.0
    %1937 = vmatmul.mubr.f32.gmra.mrb[0].mxu0 %v807
    %v1938 = vpop.f32.mrb[0].mxu0
    %v1939 = vadd.f32 0.0, %v1938
    %v1940 = vpop.f32.mrb[0].mxu0
    %v1941 = vadd.f32 0.0, %v1940
    %1942 = vmatprep.mubr.f32.mxu0 0.0
    %1943 = vmatmul.mubr.f32.gmra.mrb[0].mxu0 %v812
    %v1944 = vpop.f32.mrb[0].mxu0
    %v1945 = vadd.f32 0.0, %v1944
    %v1946 = vpop.f32.mrb[0].mxu0
    %v1947 = vadd.f32 0.0, %v1946
    %1948 = vmatprep.mubr.f32.mxu0 0.0
    %1949 = vmatmul.mubr.f32.gmra.mrb[0].mxu0 %v817
    %v1950 = vpop.f32.mrb[0].mxu0
    %v1951 = vadd.f32 0.0, %v1950
    %v1952 = vpop.f32.mrb[0].mxu0
    %v1953 = vadd.f32 0.0, %v1952
    %1954 = vmatprep.mubr.f32.mxu0 0.0
    %1955 = vmatmul.mubr.f32.gmra.mrb[0].mxu0 %v822
    %v1956 = vpop.f32.mrb[0].mxu0
    %v1957 = vadd.f32 0.0, %v1956
    %v1958 = vpop.f32.mrb[0].mxu0
    %v1959 = vadd.f32 0.0, %v1958
    %1960 = vmatprep.mubr.f32.mxu0 0.0
    %1961 = vmatmul.mubr.f32.gmra.mrb[0].mxu0 %v827
    %v1962 = vpop.f32.mrb[0].mxu0
    %v1963 = vadd.f32 0.0, %v1962
    %v1964 = vpop.f32.mrb[0].mxu0
    %v1965 = vadd.f32 0.0, %v1964
    %1966 = vmatprep.mubr.f32.mxu0 0.0
    %1967 = vmatmul.mubr.f32.gmra.mrb[0].mxu0 %v832
    %v1968 = vpop.f32.mrb[0].mxu0
    %v1969 = vadd.f32 0.0, %v1968
    %v1970 = vpop.f32.mrb[0].mxu0
    %v1971 = vadd.f32 0.0, %v1970
    %1972 = vmatprep.mubr.f32.mxu0 0.0
    %1973 = vmatmul.mubr.f32.gmra.mrb[0].mxu0 %v837
    %v1974 = vpop.f32.mrb[0].mxu0
    %v1975 = vadd.f32 0.0, %v1974
    %v1976 = vpop.f32.mrb[0].mxu0
    %v1977 = vadd.f32 0.0, %v1976
    %1978 = vmatprep.mubr.f32.mxu0 0.0
    %1979 = vmatmul.mubr.f32.gmra.mrb[0].mxu0 %v842
    %v1980 = vpop.f32.mrb[0].mxu0
    %v1981 = vadd.f32 0.0, %v1980
    %v1982 = vpop.f32.mrb[0].mxu0
    %v1983 = vadd.f32 0.0, %v1982
    %1984 = vmatprep.mubr.f32.mxu0 0.0
    %1985 = vmatmul.mubr.f32.gmra.mrb[0].mxu0 %v847
    %v1986 = vpop.f32.mrb[0].mxu0
    %v1987 = vadd.f32 0.0, %v1986
    %v1988 = vpop.f32.mrb[0].mxu0
    %v1989 = vadd.f32 0.0, %v1988
    %1990 = vmatprep.mubr.f32.mxu0 0.0
    %1991 = vmatmul.mubr.f32.gmra.mrb[0].mxu0 %v852
    %v1992 = vpop.f32.mrb[0].mxu0
    %v1993 = vadd.f32 0.0, %v1992
    %v1994 = vpop.f32.mrb[0].mxu0
    %v1995 = vadd.f32 0.0, %v1994
    %1996 = vmatprep.mubr.f32.mxu0 0.0
    %1997 = vmatmul.mubr.f32.gmra.mrb[0].mxu0 %v857
    %v1998 = vpop.f32.mrb[0].mxu0
    %v1999 = vadd.f32 0.0, %v1998
    %v2000 = vpop.f32.mrb[0].mxu0
    %v2001 = vadd.f32 0.0, %v2000
    %2002 = vmatprep.mubr.f32.mxu0 0.0
    %2003 = vmatmul.mubr.f32.gmra.mrb[0].mxu0 %v862
    %v2004 = vpop.f32.mrb[0].mxu0
    %v2005 = vadd.f32 0.0, %v2004
    %v2006 = vpop.f32.mrb[0].mxu0
    %v2007 = vadd.f32 0.0, %v2006
    %2008 = vmatprep.mubr.f32.mxu0 0.0
    %2009 = vmatmul.mubr.f32.gmra.mrb[0].mxu0 %v867
    %v2010 = vpop.f32.mrb[0].mxu0
    %v2011 = vadd.f32 0.0, %v2010
    %v2012 = vpop.f32.mrb[0].mxu0
    %v2013 = vadd.f32 0.0, %v2012
    %2014 = vdwg.mxu0
    %v2015 = vmul.f32 %v1825, 0.17677669
    %v2016 = vmul.f32 %v1827, 0.17677669
    %v2017 = vmul.f32 %v1831, 0.17677669
    %v2018 = vmul.f32 %v1833, 0.17677669
    %v2019 = vmul.f32 %v1837, 0.17677669
    %v2020 = vmul.f32 %v1839, 0.17677669
    %v2021 = vmul.f32 %v1843, 0.17677669
    %v2022 = vmul.f32 %v1845, 0.17677669
    %v2023 = vmul.f32 %v1849, 0.17677669
    %v2024 = vmul.f32 %v1851, 0.17677669
    %v2025 = vmul.f32 %v1855, 0.17677669
    %v2026 = vmul.f32 %v1857, 0.17677669
    %v2027 = vmul.f32 %v1861, 0.17677669
    %v2028 = vmul.f32 %v1863, 0.17677669
    %v2029 = vmul.f32 %v1867, 0.17677669
    %v2030 = vmul.f32 %v1869, 0.17677669
    %v2031 = vmul.f32 %v1873, 0.17677669
    %v2032 = vmul.f32 %v1875, 0.17677669
    %v2033 = vmul.f32 %v1879, 0.17677669
    %v2034 = vmul.f32 %v1881, 0.17677669
    %v2035 = vmul.f32 %v1885, 0.17677669
    %v2036 = vmul.f32 %v1887, 0.17677669
    %v2037 = vmul.f32 %v1891, 0.17677669
    %v2038 = vmul.f32 %v1893, 0.17677669
    %v2039 = vmul.f32 %v1897, 0.17677669
    %v2040 = vmul.f32 %v1899, 0.17677669
    %v2041 = vmul.f32 %v1903, 0.17677669
    %v2042 = vmul.f32 %v1905, 0.17677669
    %v2043 = vmul.f32 %v1909, 0.17677669
    %v2044 = vmul.f32 %v1911, 0.17677669
    %v2045 = vmul.f32 %v1915, 0.17677669
    %v2046 = vmul.f32 %v1917, 0.17677669
    %v2047 = vmul.f32 %v1921, 0.17677669
    %v2048 = vmul.f32 %v1923, 0.17677669
    %v2049 = vmul.f32 %v1927, 0.17677669
    %v2050 = vmul.f32 %v1929, 0.17677669
    %v2051 = vmul.f32 %v1933, 0.17677669
    %v2052 = vmul.f32 %v1935, 0.17677669
    %v2053 = vmul.f32 %v1939, 0.17677669
    %v2054 = vmul.f32 %v1941, 0.17677669
    %v2055 = vmul.f32 %v1945, 0.17677669
    %v2056 = vmul.f32 %v1947, 0.17677669
    %v2057 = vmul.f32 %v1951, 0.17677669
    %v2058 = vmul.f32 %v1953, 0.17677669
    %v2059 = vmul.f32 %v1957, 0.17677669
    %v2060 = vmul.f32 %v1959, 0.17677669
    %v2061 = vmul.f32 %v1963, 0.17677669
    %v2062 = vmul.f32 %v1965, 0.17677669
    %v2063 = vmul.f32 %v1969, 0.17677669
    %v2064 = vmul.f32 %v1971, 0.17677669
    %v2065 = vmul.f32 %v1975, 0.17677669
    %v2066 = vmul.f32 %v1977, 0.17677669
    %v2067 = vmul.f32 %v1981, 0.17677669
    %v2068 = vmul.f32 %v1983, 0.17677669
    %v2069 = vmul.f32 %v1987, 0.17677669
    %v2070 = vmul.f32 %v1989, 0.17677669
    %v2071 = vmul.f32 %v1993, 0.17677669
    %v2072 = vmul.f32 %v1995, 0.17677669
    %v2073 = vmul.f32 %v1999, 0.17677669
    %v2074 = vmul.f32 %v2001, 0.17677669
    %v2075 = vmul.f32 %v2005, 0.17677669
    %v2076 = vmul.f32 %v2007, 0.17677669
    %v2077 = vmul.f32 %v2011, 0.17677669
    %v2078 = vmul.f32 %v2013, 0.17677669
    %v2079 = vmul.f32 %v2015, %v1694
    %v2080 = vmul.f32 %v2016, %v1695
    %v2081 = vmul.f32 %v2017, %v1696
    %v2082 = vmul.f32 %v2018, %v1697
    %v2083 = vmul.f32 %v2019, %v1698
    %v2084 = vmul.f32 %v2020, %v1699
    %v2085 = vmul.f32 %v2021, %v1700
    %v2086 = vmul.f32 %v2022, %v1701
    %v2087 = vmul.f32 %v2023, %v1702
    %v2088 = vmul.f32 %v2024, %v1703
    %v2089 = vmul.f32 %v2025, %v1704
    %v2090 = vmul.f32 %v2026, %v1705
    %v2091 = vmul.f32 %v2027, %v1706
    %v2092 = vmul.f32 %v2028, %v1707
    %v2093 = vmul.f32 %v2029, %v1708
    %v2094 = vmul.f32 %v2030, %v1709
    %v2095 = vmul.f32 %v2031, %v1710
    %v2096 = vmul.f32 %v2032, %v1711
    %v2097 = vmul.f32 %v2033, %v1712
    %v2098 = vmul.f32 %v2034, %v1713
    %v2099 = vmul.f32 %v2035, %v1714
    %v2100 = vmul.f32 %v2036, %v1715
    %v2101 = vmul.f32 %v2037, %v1716
    %v2102 = vmul.f32 %v2038, %v1717
    %v2103 = vmul.f32 %v2039, %v1718
    %v2104 = vmul.f32 %v2040, %v1719
    %v2105 = vmul.f32 %v2041, %v1720
    %v2106 = vmul.f32 %v2042, %v1721
    %v2107 = vmul.f32 %v2043, %v1722
    %v2108 = vmul.f32 %v2044, %v1723
    %v2109 = vmul.f32 %v2045, %v1724
    %v2110 = vmul.f32 %v2046, %v1725
    %v2111 = vmul.f32 %v2047, %v1726
    %v2112 = vmul.f32 %v2048, %v1727
    %v2113 = vmul.f32 %v2049, %v1728
    %v2114 = vmul.f32 %v2050, %v1729
    %v2115 = vmul.f32 %v2051, %v1730
    %v2116 = vmul.f32 %v2052, %v1731
    %v2117 = vmul.f32 %v2053, %v1732
    %v2118 = vmul.f32 %v2054, %v1733
    %v2119 = vmul.f32 %v2055, %v1734
    %v2120 = vmul.f32 %v2056, %v1735
    %v2121 = vmul.f32 %v2057, %v1736
    %v2122 = vmul.f32 %v2058, %v1737
    %v2123 = vmul.f32 %v2059, %v1738
    %v2124 = vmul.f32 %v2060, %v1739
    %v2125 = vmul.f32 %v2061, %v1740
    %v2126 = vmul.f32 %v2062, %v1741
    %v2127 = vmul.f32 %v2063, %v1742
    %v2128 = vmul.f32 %v2064, %v1743
    %v2129 = vmul.f32 %v2065, %v1744
    %v2130 = vmul.f32 %v2066, %v1745
    %v2131 = vmul.f32 %v2067, %v1746
    %v2132 = vmul.f32 %v2068, %v1747
    %v2133 = vmul.f32 %v2069, %v1748
    %v2134 = vmul.f32 %v2070, %v1749
    %v2135 = vmul.f32 %v2071, %v1750
    %v2136 = vmul.f32 %v2072, %v1751
    %v2137 = vmul.f32 %v2073, %v1752
    %v2138 = vmul.f32 %v2074, %v1753
    %v2139 = vmul.f32 %v2075, %v1754
    %v2140 = vmul.f32 %v2076, %v1755
    %v2141 = vmul.f32 %v2077, %v1756
    %v2142 = vmul.f32 %v2078, %v1757
    %v2143 = vadd.f32 %v2079, %v2080
    %v2144 = vadd.f32 %v2143, %v2081
    %v2145 = vadd.f32 %v2144, %v2082
    %v2146 = vadd.f32 %v2145, %v2083
    %v2147 = vadd.f32 %v2146, %v2084
    %v2148 = vadd.f32 %v2147, %v2085
    %v2149 = vadd.f32 %v2148, %v2086
    %v2150 = vadd.f32 %v2149, %v2087
    %v2151 = vadd.f32 %v2150, %v2088
    %v2152 = vadd.f32 %v2151, %v2089
    %v2153 = vadd.f32 %v2152, %v2090
    %v2154 = vadd.f32 %v2153, %v2091
    %v2155 = vadd.f32 %v2154, %v2092
    %v2156 = vadd.f32 %v2155, %v2093
    %v2157 = vadd.f32 %v2156, %v2094
    %v2158 = vadd.f32 %v2157, %v2095
    %v2159 = vadd.f32 %v2158, %v2096
    %v2160 = vadd.f32 %v2159, %v2097
    %v2161 = vadd.f32 %v2160, %v2098
    %v2162 = vadd.f32 %v2161, %v2099
    %v2163 = vadd.f32 %v2162, %v2100
    %v2164 = vadd.f32 %v2163, %v2101
    %v2165 = vadd.f32 %v2164, %v2102
    %v2166 = vadd.f32 %v2165, %v2103
    %v2167 = vadd.f32 %v2166, %v2104
    %v2168 = vadd.f32 %v2167, %v2105
    %v2169 = vadd.f32 %v2168, %v2106
    %v2170 = vadd.f32 %v2169, %v2107
    %v2171 = vadd.f32 %v2170, %v2108
    %v2172 = vadd.f32 %v2171, %v2109
    %v2173 = vadd.f32 %v2172, %v2110
    %v2174 = vadd.f32 %v2173, %v2111
    %v2175 = vadd.f32 %v2174, %v2112
    %v2176 = vadd.f32 %v2175, %v2113
    %v2177 = vadd.f32 %v2176, %v2114
    %v2178 = vadd.f32 %v2177, %v2115
    %v2179 = vadd.f32 %v2178, %v2116
    %v2180 = vadd.f32 %v2179, %v2117
    %v2181 = vadd.f32 %v2180, %v2118
    %v2182 = vadd.f32 %v2181, %v2119
    %v2183 = vadd.f32 %v2182, %v2120
    %v2184 = vadd.f32 %v2183, %v2121
    %v2185 = vadd.f32 %v2184, %v2122
    %v2186 = vadd.f32 %v2185, %v2123
    %v2187 = vadd.f32 %v2186, %v2124
    %v2188 = vadd.f32 %v2187, %v2125
    %v2189 = vadd.f32 %v2188, %v2126
    %v2190 = vadd.f32 %v2189, %v2127
    %v2191 = vadd.f32 %v2190, %v2128
    %v2192 = vadd.f32 %v2191, %v2129
    %v2193 = vadd.f32 %v2192, %v2130
    %v2194 = vadd.f32 %v2193, %v2131
    %v2195 = vadd.f32 %v2194, %v2132
    %v2196 = vadd.f32 %v2195, %v2133
    %v2197 = vadd.f32 %v2196, %v2134
    %v2198 = vadd.f32 %v2197, %v2135
    %v2199 = vadd.f32 %v2198, %v2136
    %v2200 = vadd.f32 %v2199, %v2137
    %v2201 = vadd.f32 %v2200, %v2138
    %v2202 = vadd.f32 %v2201, %v2139
    %v2203 = vadd.f32 %v2202, %v2140
    %v2204 = vadd.f32 %v2203, %v2141
    %v2205 = vadd.f32 %v2204, %v2142
    %2206 = vadd.xlane.f32.xlu0 %v2205
    %v2207 = vpop.xlane.xlu0 %2206
    %v2208 = vrot.slane %v2207, 4
    %v2209 = vadd.f32 %v2207, %v2208
    %v2210 = vrot.slane %v2209, 2
    %v2211 = vadd.f32 %v2209, %v2210
    %v2212 = vrot.slane %v2211, 1
    %v2213 = vadd.f32 %v2211, %v2212
    %s2214 = vtos %v2213
    %v2215 = vmul.f32 %v2079, %v2015
    %v2216 = vmul.f32 %v2080, %v2016
    %v2217 = vmul.f32 %v2081, %v2017
    %v2218 = vmul.f32 %v2082, %v2018
    %v2219 = vmul.f32 %v2083, %v2019
    %v2220 = vmul.f32 %v2084, %v2020
    %v2221 = vmul.f32 %v2085, %v2021
    %v2222 = vmul.f32 %v2086, %v2022
    %v2223 = vmul.f32 %v2087, %v2023
    %v2224 = vmul.f32 %v2088, %v2024
    %v2225 = vmul.f32 %v2089, %v2025
    %v2226 = vmul.f32 %v2090, %v2026
    %v2227 = vmul.f32 %v2091, %v2027
    %v2228 = vmul.f32 %v2092, %v2028
    %v2229 = vmul.f32 %v2093, %v2029
    %v2230 = vmul.f32 %v2094, %v2030
    %v2231 = vmul.f32 %v2095, %v2031
    %v2232 = vmul.f32 %v2096, %v2032
    %v2233 = vmul.f32 %v2097, %v2033
    %v2234 = vmul.f32 %v2098, %v2034
    %v2235 = vmul.f32 %v2099, %v2035
    %v2236 = vmul.f32 %v2100, %v2036
    %v2237 = vmul.f32 %v2101, %v2037
    %v2238 = vmul.f32 %v2102, %v2038
    %v2239 = vmul.f32 %v2103, %v2039
    %v2240 = vmul.f32 %v2104, %v2040
    %v2241 = vmul.f32 %v2105, %v2041
    %v2242 = vmul.f32 %v2106, %v2042
    %v2243 = vmul.f32 %v2107, %v2043
    %v2244 = vmul.f32 %v2108, %v2044
    %v2245 = vmul.f32 %v2109, %v2045
    %v2246 = vmul.f32 %v2110, %v2046
    %v2247 = vmul.f32 %v2111, %v2047
    %v2248 = vmul.f32 %v2112, %v2048
    %v2249 = vmul.f32 %v2113, %v2049
    %v2250 = vmul.f32 %v2114, %v2050
    %v2251 = vmul.f32 %v2115, %v2051
    %v2252 = vmul.f32 %v2116, %v2052
    %v2253 = vmul.f32 %v2117, %v2053
    %v2254 = vmul.f32 %v2118, %v2054
    %v2255 = vmul.f32 %v2119, %v2055
    %v2256 = vmul.f32 %v2120, %v2056
    %v2257 = vmul.f32 %v2121, %v2057
    %v2258 = vmul.f32 %v2122, %v2058
    %v2259 = vmul.f32 %v2123, %v2059
    %v2260 = vmul.f32 %v2124, %v2060
    %v2261 = vmul.f32 %v2125, %v2061
    %v2262 = vmul.f32 %v2126, %v2062
    %v2263 = vmul.f32 %v2127, %v2063
    %v2264 = vmul.f32 %v2128, %v2064
    %v2265 = vmul.f32 %v2129, %v2065
    %v2266 = vmul.f32 %v2130, %v2066
    %v2267 = vmul.f32 %v2131, %v2067
    %v2268 = vmul.f32 %v2132, %v2068
    %v2269 = vmul.f32 %v2133, %v2069
    %v2270 = vmul.f32 %v2134, %v2070
    %v2271 = vmul.f32 %v2135, %v2071
    %v2272 = vmul.f32 %v2136, %v2072
    %v2273 = vmul.f32 %v2137, %v2073
    %v2274 = vmul.f32 %v2138, %v2074
    %v2275 = vmul.f32 %v2139, %v2075
    %v2276 = vmul.f32 %v2140, %v2076
    %v2277 = vmul.f32 %v2141, %v2077
    %v2278 = vmul.f32 %v2142, %v2078
    %v2279 = vadd.f32 %v2215, %v2216
    %v2280 = vadd.f32 %v2279, %v2217
    %v2281 = vadd.f32 %v2280, %v2218
    %v2282 = vadd.f32 %v2281, %v2219
    %v2283 = vadd.f32 %v2282, %v2220
    %v2284 = vadd.f32 %v2283, %v2221
    %v2285 = vadd.f32 %v2284, %v2222
    %v2286 = vadd.f32 %v2285, %v2223
    %v2287 = vadd.f32 %v2286, %v2224
    %v2288 = vadd.f32 %v2287, %v2225
    %v2289 = vadd.f32 %v2288, %v2226
    %v2290 = vadd.f32 %v2289, %v2227
    %v2291 = vadd.f32 %v2290, %v2228
    %v2292 = vadd.f32 %v2291, %v2229
    %v2293 = vadd.f32 %v2292, %v2230
    %v2294 = vadd.f32 %v2293, %v2231
    %v2295 = vadd.f32 %v2294, %v2232
    %v2296 = vadd.f32 %v2295, %v2233
    %v2297 = vadd.f32 %v2296, %v2234
    %v2298 = vadd.f32 %v2297, %v2235
    %v2299 = vadd.f32 %v2298, %v2236
    %v2300 = vadd.f32 %v2299, %v2237
    %v2301 = vadd.f32 %v2300, %v2238
    %v2302 = vadd.f32 %v2301, %v2239
    %v2303 = vadd.f32 %v2302, %v2240
    %v2304 = vadd.f32 %v2303, %v2241
    %v2305 = vadd.f32 %v2304, %v2242
    %v2306 = vadd.f32 %v2305, %v2243
    %v2307 = vadd.f32 %v2306, %v2244
    %v2308 = vadd.f32 %v2307, %v2245
    %v2309 = vadd.f32 %v2308, %v2246
    %v2310 = vadd.f32 %v2309, %v2247
    %v2311 = vadd.f32 %v2310, %v2248
    %v2312 = vadd.f32 %v2311, %v2249
    %v2313 = vadd.f32 %v2312, %v2250
    %v2314 = vadd.f32 %v2313, %v2251
    %v2315 = vadd.f32 %v2314, %v2252
    %v2316 = vadd.f32 %v2315, %v2253
    %v2317 = vadd.f32 %v2316, %v2254
    %v2318 = vadd.f32 %v2317, %v2255
    %v2319 = vadd.f32 %v2318, %v2256
    %v2320 = vadd.f32 %v2319, %v2257
    %v2321 = vadd.f32 %v2320, %v2258
    %v2322 = vadd.f32 %v2321, %v2259
    %v2323 = vadd.f32 %v2322, %v2260
    %v2324 = vadd.f32 %v2323, %v2261
    %v2325 = vadd.f32 %v2324, %v2262
    %v2326 = vadd.f32 %v2325, %v2263
    %v2327 = vadd.f32 %v2326, %v2264
    %v2328 = vadd.f32 %v2327, %v2265
    %v2329 = vadd.f32 %v2328, %v2266
    %v2330 = vadd.f32 %v2329, %v2267
    %v2331 = vadd.f32 %v2330, %v2268
    %v2332 = vadd.f32 %v2331, %v2269
    %v2333 = vadd.f32 %v2332, %v2270
    %v2334 = vadd.f32 %v2333, %v2271
    %v2335 = vadd.f32 %v2334, %v2272
    %v2336 = vadd.f32 %v2335, %v2273
    %v2337 = vadd.f32 %v2336, %v2274
    %v2338 = vadd.f32 %v2337, %v2275
    %v2339 = vadd.f32 %v2338, %v2276
    %v2340 = vadd.f32 %v2339, %v2277
    %v2341 = vadd.f32 %v2340, %v2278
    %2342 = vadd.xlane.f32.xlu0 %v2341
    %v2343 = vpop.xlane.xlu0 %2342
    %v2344 = vrot.slane %v2343, 4
    %v2345 = vadd.f32 %v2343, %v2344
    %v2346 = vrot.slane %v2345, 2
    %v2347 = vadd.f32 %v2345, %v2346
    %v2348 = vrot.slane %v2347, 1
    %v2349 = vadd.f32 %v2347, %v2348
    %s2350 = vtos %v2349
    %s2351 = smul.f32 %s2214, %s2214
    %v2352 = vrcp.pop 768.0
    %s2353 = vtos %v2352
    %s2354 = smul.f32 %s2351, %s2353
    %s2355 = ssub.f32 %s2350, %s2354
    %v2356 = vrcp.pop 767.0
    %s2357 = vtos %v2356
    %s2358 = smul.f32 %s2355, %s2357
    %s2359 = smax.f32 %s2358, 1e-30
    %v2360 = vstv %s2359
    %v2361 = vrsqrt.pop %v2360
    %s2362 = vtos %v2361
    %s2363 = smul.f32 %s2362, 1.5
    %v2364 = vstv %s2363
    %v2365 = vmul.f32 %v2015, %v2364
    %v2366 = vmul.f32 %v2016, %v2364
    %v2367 = vmul.f32 %v2017, %v2364
    %v2368 = vmul.f32 %v2018, %v2364
    %v2369 = vmul.f32 %v2019, %v2364
    %v2370 = vmul.f32 %v2020, %v2364
    %v2371 = vmul.f32 %v2021, %v2364
    %v2372 = vmul.f32 %v2022, %v2364
    %v2373 = vmul.f32 %v2023, %v2364
    %v2374 = vmul.f32 %v2024, %v2364
    %v2375 = vmul.f32 %v2025, %v2364
    %v2376 = vmul.f32 %v2026, %v2364
    %v2377 = vmul.f32 %v2027, %v2364
    %v2378 = vmul.f32 %v2028, %v2364
    %v2379 = vmul.f32 %v2029, %v2364
    %v2380 = vmul.f32 %v2030, %v2364
    %v2381 = vmul.f32 %v2031, %v2364
    %v2382 = vmul.f32 %v2032, %v2364
    %v2383 = vmul.f32 %v2033, %v2364
    %v2384 = vmul.f32 %v2034, %v2364
    %v2385 = vmul.f32 %v2035, %v2364
    %v2386 = vmul.f32 %v2036, %v2364
    %v2387 = vmul.f32 %v2037, %v2364
    %v2388 = vmul.f32 %v2038, %v2364
    %v2389 = vmul.f32 %v2039, %v2364
    %v2390 = vmul.f32 %v2040, %v2364
    %v2391 = vmul.f32 %v2041, %v2364
    %v2392 = vmul.f32 %v2042, %v2364
    %v2393 = vmul.f32 %v2043, %v2364
    %v2394 = vmul.f32 %v2044, %v2364
    %v2395 = vmul.f32 %v2045, %v2364
    %v2396 = vmul.f32 %v2046, %v2364
    %v2397 = vmul.f32 %v2047, %v2364
    %v2398 = vmul.f32 %v2048, %v2364
    %v2399 = vmul.f32 %v2049, %v2364
    %v2400 = vmul.f32 %v2050, %v2364
    %v2401 = vmul.f32 %v2051, %v2364
    %v2402 = vmul.f32 %v2052, %v2364
    %v2403 = vmul.f32 %v2053, %v2364
    %v2404 = vmul.f32 %v2054, %v2364
    %v2405 = vmul.f32 %v2055, %v2364
    %v2406 = vmul.f32 %v2056, %v2364
    %v2407 = vmul.f32 %v2057, %v2364
    %v2408 = vmul.f32 %v2058, %v2364
    %v2409 = vmul.f32 %v2059, %v2364
    %v2410 = vmul.f32 %v2060, %v2364
    %v2411 = vmul.f32 %v2061, %v2364
    %v2412 = vmul.f32 %v2062, %v2364
    %v2413 = vmul.f32 %v2063, %v2364
    %v2414 = vmul.f32 %v2064, %v2364
    %v2415 = vmul.f32 %v2065, %v2364
    %v2416 = vmul.f32 %v2066, %v2364
    %v2417 = vmul.f32 %v2067, %v2364
    %v2418 = vmul.f32 %v2068, %v2364
    %v2419 = vmul.f32 %v2069, %v2364
    %v2420 = vmul.f32 %v2070, %v2364
    %v2421 = vmul.f32 %v2071, %v2364
    %v2422 = vmul.f32 %v2072, %v2364
    %v2423 = vmul.f32 %v2073, %v2364
    %v2424 = vmul.f32 %v2074, %v2364
    %v2425 = vmul.f32 %v2075, %v2364
    %v2426 = vmul.f32 %v2076, %v2364
    %v2427 = vmul.f32 %v2077, %v2364
    %v2428 = vmul.f32 %v2078, %v2364
    %v2429 = vxor.u32 %v2365, 2147483648
    %v2430 = vxor.u32 %v2366, 2147483648
    %v2431 = vxor.u32 %v2367, 2147483648
    %v2432 = vxor.u32 %v2368, 2147483648
    %v2433 = vxor.u32 %v2369, 2147483648
    %v2434 = vxor.u32 %v2370, 2147483648
    %v2435 = vxor.u32 %v2371, 2147483648
    %v2436 = vxor.u32 %v2372, 2147483648
    %v2437 = vxor.u32 %v2373, 2147483648
    %v2438 = vxor.u32 %v2374, 2147483648
    %v2439 = vxor.u32 %v2375, 2147483648
    %v2440 = vxor.u32 %v2376, 2147483648
    %v2441 = vxor.u32 %v2377, 2147483648
    %v2442 = vxor.u32 %v2378, 2147483648
    %v2443 = vxor.u32 %v2379, 2147483648
    %v2444 = vxor.u32 %v2380, 2147483648
    %v2445 = vxor.u32 %v2381, 2147483648
    %v2446 = vxor.u32 %v2382, 2147483648
    %v2447 = vxor.u32 %v2383, 2147483648
    %v2448 = vxor.u32 %v2384, 2147483648
    %v2449 = vxor.u32 %v2385, 2147483648
    %v2450 = vxor.u32 %v2386, 2147483648
    %v2451 = vxor.u32 %v2387, 2147483648
    %v2452 = vxor.u32 %v2388, 2147483648
    %v2453 = vxor.u32 %v2389, 2147483648
    %v2454 = vxor.u32 %v2390, 2147483648
    %v2455 = vxor.u32 %v2391, 2147483648
    %v2456 = vxor.u32 %v2392, 2147483648
    %v2457 = vxor.u32 %v2393, 2147483648
    %v2458 = vxor.u32 %v2394, 2147483648
    %v2459 = vxor.u32 %v2395, 2147483648
    %v2460 = vxor.u32 %v2396, 2147483648
    %v2461 = vxor.u32 %v2397, 2147483648
    %v2462 = vxor.u32 %v2398, 2147483648
    %v2463 = vxor.u32 %v2399, 2147483648
    %v2464 = vxor.u32 %v2400, 2147483648
    %v2465 = vxor.u32 %v2401, 2147483648
    %v2466 = vxor.u32 %v2402, 2147483648
    %v2467 = vxor.u32 %v2403, 2147483648
    %v2468 = vxor.u32 %v2404, 2147483648
    %v2469 = vxor.u32 %v2405, 2147483648
    %v2470 = vxor.u32 %v2406, 2147483648
    %v2471 = vxor.u32 %v2407, 2147483648
    %v2472 = vxor.u32 %v2408, 2147483648
    %v2473 = vxor.u32 %v2409, 2147483648
    %v2474 = vxor.u32 %v2410, 2147483648
    %v2475 = vxor.u32 %v2411, 2147483648
    %v2476 = vxor.u32 %v2412, 2147483648
    %v2477 = vxor.u32 %v2413, 2147483648
    %v2478 = vxor.u32 %v2414, 2147483648
    %v2479 = vxor.u32 %v2415, 2147483648
    %v2480 = vxor.u32 %v2416, 2147483648
    %v2481 = vxor.u32 %v2417, 2147483648
    %v2482 = vxor.u32 %v2418, 2147483648
    %v2483 = vxor.u32 %v2419, 2147483648
    %v2484 = vxor.u32 %v2420, 2147483648
    %v2485 = vxor.u32 %v2421, 2147483648
    %v2486 = vxor.u32 %v2422, 2147483648
    %v2487 = vxor.u32 %v2423, 2147483648
    %v2488 = vxor.u32 %v2424, 2147483648
    %v2489 = vxor.u32 %v2425, 2147483648
    %v2490 = vxor.u32 %v2426, 2147483648
    %v2491 = vxor.u32 %v2427, 2147483648
    %v2492 = vxor.u32 %v2428, 2147483648
    %v2493 = vmul.f32 %v2429, 1.442695
    %v2494 = vpow.pop %v2493
    %v2495 = vmul.f32 %v2430, 1.442695
    %v2496 = vpow.pop %v2495
    %v2497 = vmul.f32 %v2431, 1.442695
    %v2498 = vpow.pop %v2497
    %v2499 = vmul.f32 %v2432, 1.442695
    %v2500 = vpow.pop %v2499
    %v2501 = vmul.f32 %v2433, 1.442695
    %v2502 = vpow.pop %v2501
    %v2503 = vmul.f32 %v2434, 1.442695
    %v2504 = vpow.pop %v2503
    %v2505 = vmul.f32 %v2435, 1.442695
    %v2506 = vpow.pop %v2505
    %v2507 = vmul.f32 %v2436, 1.442695
    %v2508 = vpow.pop %v2507
    %v2509 = vmul.f32 %v2437, 1.442695
    %v2510 = vpow.pop %v2509
    %v2511 = vmul.f32 %v2438, 1.442695
    %v2512 = vpow.pop %v2511
    %v2513 = vmul.f32 %v2439, 1.442695
    %v2514 = vpow.pop %v2513
    %v2515 = vmul.f32 %v2440, 1.442695
    %v2516 = vpow.pop %v2515
    %v2517 = vmul.f32 %v2441, 1.442695
    %v2518 = vpow.pop %v2517
    %v2519 = vmul.f32 %v2442, 1.442695
    %v2520 = vpow.pop %v2519
    %v2521 = vmul.f32 %v2443, 1.442695
    %v2522 = vpow.pop %v2521
    %v2523 = vmul.f32 %v2444, 1.442695
    %v2524 = vpow.pop %v2523
    %v2525 = vmul.f32 %v2445, 1.442695
    %v2526 = vpow.pop %v2525
    %v2527 = vmul.f32 %v2446, 1.442695
    %v2528 = vpow.pop %v2527
    %v2529 = vmul.f32 %v2447, 1.442695
    %v2530 = vpow.pop %v2529
    %v2531 = vmul.f32 %v2448, 1.442695
    %v2532 = vpow.pop %v2531
    %v2533 = vmul.f32 %v2449, 1.442695
    %v2534 = vpow.pop %v2533
    %v2535 = vmul.f32 %v2450, 1.442695
    %v2536 = vpow.pop %v2535
    %v2537 = vmul.f32 %v2451, 1.442695
    %v2538 = vpow.pop %v2537
    %v2539 = vmul.f32 %v2452, 1.442695
    %v2540 = vpow.pop %v2539
    %v2541 = vmul.f32 %v2453, 1.442695
    %v2542 = vpow.pop %v2541
    %v2543 = vmul.f32 %v2454, 1.442695
    %v2544 = vpow.pop %v2543
    %v2545 = vmul.f32 %v2455, 1.442695
    %v2546 = vpow.pop %v2545
    %v2547 = vmul.f32 %v2456, 1.442695
    %v2548 = vpow.pop %v2547
    %v2549 = vmul.f32 %v2457, 1.442695
    %v2550 = vpow.pop %v2549
    %v2551 = vmul.f32 %v2458, 1.442695
    %v2552 = vpow.pop %v2551
    %v2553 = vmul.f32 %v2459, 1.442695
    %v2554 = vpow.pop %v2553
    %v2555 = vmul.f32 %v2460, 1.442695
    %v2556 = vpow.pop %v2555
    %v2557 = vmul.f32 %v2461, 1.442695
    %v2558 = vpow.pop %v2557
    %v2559 = vmul.f32 %v2462, 1.442695
    %v2560 = vpow.pop %v2559
    %v2561 = vmul.f32 %v2463, 1.442695
    %v2562 = vpow.pop %v2561
    %v2563 = vmul.f32 %v2464, 1.442695
    %v2564 = vpow.pop %v2563
    %v2565 = vmul.f32 %v2465, 1.442695
    %v2566 = vpow.pop %v2565
    %v2567 = vmul.f32 %v2466, 1.442695
    %v2568 = vpow.pop %v2567
    %v2569 = vmul.f32 %v2467, 1.442695
    %v2570 = vpow.pop %v2569
    %v2571 = vmul.f32 %v2468, 1.442695
    %v2572 = vpow.pop %v2571
    %v2573 = vmul.f32 %v2469, 1.442695
    %v2574 = vpow.pop %v2573
    %v2575 = vmul.f32 %v2470, 1.442695
    %v2576 = vpow.pop %v2575
    %v2577 = vmul.f32 %v2471, 1.442695
    %v2578 = vpow.pop %v2577
    %v2579 = vmul.f32 %v2472, 1.442695
    %v2580 = vpow.pop %v2579
    %v2581 = vmul.f32 %v2473, 1.442695
    %v2582 = vpow.pop %v2581
    %v2583 = vmul.f32 %v2474, 1.442695
    %v2584 = vpow.pop %v2583
    %v2585 = vmul.f32 %v2475, 1.442695
    %v2586 = vpow.pop %v2585
    %v2587 = vmul.f32 %v2476, 1.442695
    %v2588 = vpow.pop %v2587
    %v2589 = vmul.f32 %v2477, 1.442695
    %v2590 = vpow.pop %v2589
    %v2591 = vmul.f32 %v2478, 1.442695
    %v2592 = vpow.pop %v2591
    %v2593 = vmul.f32 %v2479, 1.442695
    %v2594 = vpow.pop %v2593
    %v2595 = vmul.f32 %v2480, 1.442695
    %v2596 = vpow.pop %v2595
    %v2597 = vmul.f32 %v2481, 1.442695
    %v2598 = vpow.pop %v2597
    %v2599 = vmul.f32 %v2482, 1.442695
    %v2600 = vpow.pop %v2599
    %v2601 = vmul.f32 %v2483, 1.442695
    %v2602 = vpow.pop %v2601
    %v2603 = vmul.f32 %v2484, 1.442695
    %v2604 = vpow.pop %v2603
    %v2605 = vmul.f32 %v2485, 1.442695
    %v2606 = vpow.pop %v2605
    %v2607 = vmul.f32 %v2486, 1.442695
    %v2608 = vpow.pop %v2607
    %v2609 = vmul.f32 %v2487, 1.442695
    %v2610 = vpow.pop %v2609
    %v2611 = vmul.f32 %v2488, 1.442695
    %v2612 = vpow.pop %v2611
    %v2613 = vmul.f32 %v2489, 1.442695
    %v2614 = vpow.pop %v2613
    %v2615 = vmul.f32 %v2490, 1.442695
    %v2616 = vpow.pop %v2615
    %v2617 = vmul.f32 %v2491, 1.442695
    %v2618 = vpow.pop %v2617
    %v2619 = vmul.f32 %v2492, 1.442695
    %v2620 = vpow.pop %v2619
    %v2621 = vadd.f32 %v2494, 1.0
    %v2622 = vadd.f32 %v2496, 1.0
    %v2623 = vadd.f32 %v2498, 1.0
    %v2624 = vadd.f32 %v2500, 1.0
    %v2625 = vadd.f32 %v2502, 1.0
    %v2626 = vadd.f32 %v2504, 1.0
    %v2627 = vadd.f32 %v2506, 1.0
    %v2628 = vadd.f32 %v2508, 1.0
    %v2629 = vadd.f32 %v2510, 1.0
    %v2630 = vadd.f32 %v2512, 1.0
    %v2631 = vadd.f32 %v2514, 1.0
    %v2632 = vadd.f32 %v2516, 1.0
    %v2633 = vadd.f32 %v2518, 1.0
    %v2634 = vadd.f32 %v2520, 1.0
    %v2635 = vadd.f32 %v2522, 1.0
    %v2636 = vadd.f32 %v2524, 1.0
    %v2637 = vadd.f32 %v2526, 1.0
    %v2638 = vadd.f32 %v2528, 1.0
    %v2639 = vadd.f32 %v2530, 1.0
    %v2640 = vadd.f32 %v2532, 1.0
    %v2641 = vadd.f32 %v2534, 1.0
    %v2642 = vadd.f32 %v2536, 1.0
    %v2643 = vadd.f32 %v2538, 1.0
    %v2644 = vadd.f32 %v2540, 1.0
    %v2645 = vadd.f32 %v2542, 1.0
    %v2646 = vadd.f32 %v2544, 1.0
    %v2647 = vadd.f32 %v2546, 1.0
    %v2648 = vadd.f32 %v2548, 1.0
    %v2649 = vadd.f32 %v2550, 1.0
    %v2650 = vadd.f32 %v2552, 1.0
    %v2651 = vadd.f32 %v2554, 1.0
    %v2652 = vadd.f32 %v2556, 1.0
    %v2653 = vadd.f32 %v2558, 1.0
    %v2654 = vadd.f32 %v2560, 1.0
    %v2655 = vadd.f32 %v2562, 1.0
    %v2656 = vadd.f32 %v2564, 1.0
    %v2657 = vadd.f32 %v2566, 1.0
    %v2658 = vadd.f32 %v2568, 1.0
    %v2659 = vadd.f32 %v2570, 1.0
    %v2660 = vadd.f32 %v2572, 1.0
    %v2661 = vadd.f32 %v2574, 1.0
    %v2662 = vadd.f32 %v2576, 1.0
    %v2663 = vadd.f32 %v2578, 1.0
    %v2664 = vadd.f32 %v2580, 1.0
    %v2665 = vadd.f32 %v2582, 1.0
    %v2666 = vadd.f32 %v2584, 1.0
    %v2667 = vadd.f32 %v2586, 1.0
    %v2668 = vadd.f32 %v2588, 1.0
    %v2669 = vadd.f32 %v2590, 1.0
    %v2670 = vadd.f32 %v2592, 1.0
    %v2671 = vadd.f32 %v2594, 1.0
    %v2672 = vadd.f32 %v2596, 1.0
    %v2673 = vadd.f32 %v2598, 1.0
    %v2674 = vadd.f32 %v2600, 1.0
    %v2675 = vadd.f32 %v2602, 1.0
    %v2676 = vadd.f32 %v2604, 1.0
    %v2677 = vadd.f32 %v2606, 1.0
    %v2678 = vadd.f32 %v2608, 1.0
    %v2679 = vadd.f32 %v2610, 1.0
    %v2680 = vadd.f32 %v2612, 1.0
    %v2681 = vadd.f32 %v2614, 1.0
    %v2682 = vadd.f32 %v2616, 1.0
    %v2683 = vadd.f32 %v2618, 1.0
    %v2684 = vadd.f32 %v2620, 1.0
    %v2685 = vrcp.pop %v2621
    %v2686 = vmul.f32 1.0, %v2685
    %v2687 = vrcp.pop %v2622
    %v2688 = vmul.f32 1.0, %v2687
    %v2689 = vrcp.pop %v2623
    %v2690 = vmul.f32 1.0, %v2689
    %v2691 = vrcp.pop %v2624
    %v2692 = vmul.f32 1.0, %v2691
    %v2693 = vrcp.pop %v2625
    %v2694 = vmul.f32 1.0, %v2693
    %v2695 = vrcp.pop %v2626
    %v2696 = vmul.f32 1.0, %v2695
    %v2697 = vrcp.pop %v2627
    %v2698 = vmul.f32 1.0, %v2697
    %v2699 = vrcp.pop %v2628
    %v2700 = vmul.f32 1.0, %v2699
    %v2701 = vrcp.pop %v2629
    %v2702 = vmul.f32 1.0, %v2701
    %v2703 = vrcp.pop %v2630
    %v2704 = vmul.f32 1.0, %v2703
    %v2705 = vrcp.pop %v2631
    %v2706 = vmul.f32 1.0, %v2705
    %v2707 = vrcp.pop %v2632
    %v2708 = vmul.f32 1.0, %v2707
    %v2709 = vrcp.pop %v2633
    %v2710 = vmul.f32 1.0, %v2709
    %v2711 = vrcp.pop %v2634
    %v2712 = vmul.f32 1.0, %v2711
    %v2713 = vrcp.pop %v2635
    %v2714 = vmul.f32 1.0, %v2713
    %v2715 = vrcp.pop %v2636
    %v2716 = vmul.f32 1.0, %v2715
    %v2717 = vrcp.pop %v2637
    %v2718 = vmul.f32 1.0, %v2717
    %v2719 = vrcp.pop %v2638
    %v2720 = vmul.f32 1.0, %v2719
    %v2721 = vrcp.pop %v2639
    %v2722 = vmul.f32 1.0, %v2721
    %v2723 = vrcp.pop %v2640
    %v2724 = vmul.f32 1.0, %v2723
    %v2725 = vrcp.pop %v2641
    %v2726 = vmul.f32 1.0, %v2725
    %v2727 = vrcp.pop %v2642
    %v2728 = vmul.f32 1.0, %v2727
    %v2729 = vrcp.pop %v2643
    %v2730 = vmul.f32 1.0, %v2729
    %v2731 = vrcp.pop %v2644
    %v2732 = vmul.f32 1.0, %v2731
    %v2733 = vrcp.pop %v2645
    %v2734 = vmul.f32 1.0, %v2733
    %v2735 = vrcp.pop %v2646
    %v2736 = vmul.f32 1.0, %v2735
    %v2737 = vrcp.pop %v2647
    %v2738 = vmul.f32 1.0, %v2737
    %v2739 = vrcp.pop %v2648
    %v2740 = vmul.f32 1.0, %v2739
    %v2741 = vrcp.pop %v2649
    %v2742 = vmul.f32 1.0, %v2741
    %v2743 = vrcp.pop %v2650
    %v2744 = vmul.f32 1.0, %v2743
    %v2745 = vrcp.pop %v2651
    %v2746 = vmul.f32 1.0, %v2745
    %v2747 = vrcp.pop %v2652
    %v2748 = vmul.f32 1.0, %v2747
    %v2749 = vrcp.pop %v2653
    %v2750 = vmul.f32 1.0, %v2749
    %v2751 = vrcp.pop %v2654
    %v2752 = vmul.f32 1.0, %v2751
    %v2753 = vrcp.pop %v2655
    %v2754 = vmul.f32 1.0, %v2753
    %v2755 = vrcp.pop %v2656
    %v2756 = vmul.f32 1.0, %v2755
    %v2757 = vrcp.pop %v2657
    %v2758 = vmul.f32 1.0, %v2757
    %v2759 = vrcp.pop %v2658
    %v2760 = vmul.f32 1.0, %v2759
    %v2761 = vrcp.pop %v2659
    %v2762 = vmul.f32 1.0, %v2761
    %v2763 = vrcp.pop %v2660
    %v2764 = vmul.f32 1.0, %v2763
    %v2765 = vrcp.pop %v2661
    %v2766 = vmul.f32 1.0, %v2765
    %v2767 = vrcp.pop %v2662
    %v2768 = vmul.f32 1.0, %v2767
    %v2769 = vrcp.pop %v2663
    %v2770 = vmul.f32 1.0, %v2769
    %v2771 = vrcp.pop %v2664
    %v2772 = vmul.f32 1.0, %v2771
    %v2773 = vrcp.pop %v2665
    %v2774 = vmul.f32 1.0, %v2773
    %v2775 = vrcp.pop %v2666
    %v2776 = vmul.f32 1.0, %v2775
    %v2777 = vrcp.pop %v2667
    %v2778 = vmul.f32 1.0, %v2777
    %v2779 = vrcp.pop %v2668
    %v2780 = vmul.f32 1.0, %v2779
    %v2781 = vrcp.pop %v2669
    %v2782 = vmul.f32 1.0, %v2781
    %v2783 = vrcp.pop %v2670
    %v2784 = vmul.f32 1.0, %v2783
    %v2785 = vrcp.pop %v2671
    %v2786 = vmul.f32 1.0, %v2785
    %v2787 = vrcp.pop %v2672
    %v2788 = vmul.f32 1.0, %v2787
    %v2789 = vrcp.pop %v2673
    %v2790 = vmul.f32 1.0, %v2789
    %v2791 = vrcp.pop %v2674
    %v2792 = vmul.f32 1.0, %v2791
    %v2793 = vrcp.pop %v2675
    %v2794 = vmul.f32 1.0, %v2793
    %v2795 = vrcp.pop %v2676
    %v2796 = vmul.f32 1.0, %v2795
    %v2797 = vrcp.pop %v2677
    %v2798 = vmul.f32 1.0, %v2797
    %v2799 = vrcp.pop %v2678
    %v2800 = vmul.f32 1.0, %v2799
    %v2801 = vrcp.pop %v2679
    %v2802 = vmul.f32 1.0, %v2801
    %v2803 = vrcp.pop %v2680
    %v2804 = vmul.f32 1.0, %v2803
    %v2805 = vrcp.pop %v2681
    %v2806 = vmul.f32 1.0, %v2805
    %v2807 = vrcp.pop %v2682
    %v2808 = vmul.f32 1.0, %v2807
    %v2809 = vrcp.pop %v2683
    %v2810 = vmul.f32 1.0, %v2809
    %v2811 = vrcp.pop %v2684
    %v2812 = vmul.f32 1.0, %v2811
    %v2813 = vmul.f32 %v2686, %v1694
    %v2814 = vmul.f32 %v2688, %v1695
    %v2815 = vmul.f32 %v2690, %v1696
    %v2816 = vmul.f32 %v2692, %v1697
    %v2817 = vmul.f32 %v2694, %v1698
    %v2818 = vmul.f32 %v2696, %v1699
    %v2819 = vmul.f32 %v2698, %v1700
    %v2820 = vmul.f32 %v2700, %v1701
    %v2821 = vmul.f32 %v2702, %v1702
    %v2822 = vmul.f32 %v2704, %v1703
    %v2823 = vmul.f32 %v2706, %v1704
    %v2824 = vmul.f32 %v2708, %v1705
    %v2825 = vmul.f32 %v2710, %v1706
    %v2826 = vmul.f32 %v2712, %v1707
    %v2827 = vmul.f32 %v2714, %v1708
    %v2828 = vmul.f32 %v2716, %v1709
    %v2829 = vmul.f32 %v2718, %v1710
    %v2830 = vmul.f32 %v2720, %v1711
    %v2831 = vmul.f32 %v2722, %v1712
    %v2832 = vmul.f32 %v2724, %v1713
    %v2833 = vmul.f32 %v2726, %v1714
    %v2834 = vmul.f32 %v2728, %v1715
    %v2835 = vmul.f32 %v2730, %v1716
    %v2836 = vmul.f32 %v2732, %v1717
    %v2837 = vmul.f32 %v2734, %v1718
    %v2838 = vmul.f32 %v2736, %v1719
    %v2839 = vmul.f32 %v2738, %v1720
    %v2840 = vmul.f32 %v2740, %v1721
    %v2841 = vmul.f32 %v2742, %v1722
    %v2842 = vmul.f32 %v2744, %v1723
    %v2843 = vmul.f32 %v2746, %v1724
    %v2844 = vmul.f32 %v2748, %v1725
    %v2845 = vmul.f32 %v2750, %v1726
    %v2846 = vmul.f32 %v2752, %v1727
    %v2847 = vmul.f32 %v2754, %v1728
    %v2848 = vmul.f32 %v2756, %v1729
    %v2849 = vmul.f32 %v2758, %v1730
    %v2850 = vmul.f32 %v2760, %v1731
    %v2851 = vmul.f32 %v2762, %v1732
    %v2852 = vmul.f32 %v2764, %v1733
    %v2853 = vmul.f32 %v2766, %v1734
    %v2854 = vmul.f32 %v2768, %v1735
    %v2855 = vmul.f32 %v2770, %v1736
    %v2856 = vmul.f32 %v2772, %v1737
    %v2857 = vmul.f32 %v2774, %v1738
    %v2858 = vmul.f32 %v2776, %v1739
    %v2859 = vmul.f32 %v2778, %v1740
    %v2860 = vmul.f32 %v2780, %v1741
    %v2861 = vmul.f32 %v2782, %v1742
    %v2862 = vmul.f32 %v2784, %v1743
    %v2863 = vmul.f32 %v2786, %v1744
    %v2864 = vmul.f32 %v2788, %v1745
    %v2865 = vmul.f32 %v2790, %v1746
    %v2866 = vmul.f32 %v2792, %v1747
    %v2867 = vmul.f32 %v2794, %v1748
    %v2868 = vmul.f32 %v2796, %v1749
    %v2869 = vmul.f32 %v2798, %v1750
    %v2870 = vmul.f32 %v2800, %v1751
    %v2871 = vmul.f32 %v2802, %v1752
    %v2872 = vmul.f32 %v2804, %v1753
    %v2873 = vmul.f32 %v2806, %v1754
    %v2874 = vmul.f32 %v2808, %v1755
    %v2875 = vmul.f32 %v2810, %v1756
    %v2876 = vmul.f32 %v2812, %v1757
    %2877 = vmatprep.subr.mxu0 0.0
    %2878 = vmatpush1.msra.mxu0 %v1208
    %2879 = vmatprep.subr.mxu0 0.0
    %2880 = vmatpush1.msra.mxu0 %v1213
    %2881 = vmatprep.subr.mxu0 0.0
    %2882 = vmatpush1.msra.mxu0 %v1218
    %2883 = vmatprep.subr.mxu0 0.0
    %2884 = vmatpush1.msra.mxu0 %v1223
    %2885 = vmatprep.subr.mxu0 0.0
    %2886 = vmatpush1.msra.mxu0 %v1228
    %2887 = vmatprep.subr.mxu0 0.0
    %2888 = vmatpush1.msra.mxu0 %v1233
    %2889 = vmatprep.subr.mxu0 0.0
    %2890 = vmatpush1.msra.mxu0 %v1238
    %2891 = vmatprep.subr.mxu0 0.0
    %2892 = vmatpush1.msra.mxu0 %v1243
    %2893 = vmatprep.subr.mxu0 0.0
    %2894 = vmatpush1.msra.mxu0 %v1248
    %2895 = vmatprep.subr.mxu0 0.0
    %2896 = vmatpush1.msra.mxu0 %v1253
    %2897 = vmatprep.subr.mxu0 0.0
    %2898 = vmatpush1.msra.mxu0 %v1258
    %2899 = vmatprep.subr.mxu0 0.0
    %2900 = vmatpush1.msra.mxu0 %v1263
    %2901 = vmatprep.subr.mxu0 0.0
    %2902 = vmatpush1.msra.mxu0 %v1268
    %2903 = vmatprep.subr.mxu0 0.0
    %2904 = vmatpush1.msra.mxu0 %v1273
    %2905 = vmatprep.subr.mxu0 0.0
    %2906 = vmatpush1.msra.mxu0 %v1278
    %2907 = vmatprep.subr.mxu0 0.0
    %2908 = vmatpush1.msra.mxu0 %v1283
    %2909 = vmatprep.subr.mxu0 0.0
    %2910 = vmatpush1.msra.mxu0 %v1288
    %2911 = vmatprep.subr.mxu0 0.0
    %2912 = vmatpush1.msra.mxu0 %v1293
    %2913 = vmatprep.subr.mxu0 0.0
    %2914 = vmatpush1.msra.mxu0 %v1298
    %2915 = vmatprep.subr.mxu0 0.0
    %2916 = vmatpush1.msra.mxu0 %v1303
    %2917 = vmatprep.subr.mxu0 0.0
    %2918 = vmatpush1.msra.mxu0 %v1308
    %2919 = vmatprep.subr.mxu0 0.0
    %2920 = vmatpush1.msra.mxu0 %v1313
    %2921 = vmatprep.subr.mxu0 0.0
    %2922 = vmatpush1.msra.mxu0 %v1318
    %2923 = vmatprep.subr.mxu0 0.0
    %2924 = vmatpush1.msra.mxu0 %v1323
    %2925 = vmatprep.subr.mxu0 0.0
    %2926 = vmatpush1.msra.mxu0 %v1328
    %2927 = vmatprep.subr.mxu0 0.0
    %2928 = vmatpush1.msra.mxu0 %v1333
    %2929 = vmatprep.subr.mxu0 0.0
    %2930 = vmatpush1.msra.mxu0 %v1338
    %2931 = vmatprep.subr.mxu0 0.0
    %2932 = vmatpush1.msra.mxu0 %v1343
    %2933 = vmatprep.subr.mxu0 0.0
    %2934 = vmatpush1.msra.mxu0 %v1348
    %2935 = vmatprep.subr.mxu0 0.0
    %2936 = vmatpush1.msra.mxu0 %v1353
    %2937 = vmatprep.subr.mxu0 0.0
    %2938 = vmatpush1.msra.mxu0 %v1358
    %2939 = vmatprep.subr.mxu0 0.0
    %2940 = vmatpush1.msra.mxu0 %v1363
    %2941 = vmatprep.mubr.f32.mxu0 %v2814
    %2942 = vmatmul.mubr.f32.gmra.mrb[0].mxu0 %v2813
    %v2943 = vpop.f32.mrb[0].mxu0
    %v2944 = vadd.f32 %v1456, %v2943
    %v2945 = vpop.f32.mrb[0].mxu0
    %2946 = vmatprep.mubr.f32.mxu0 %v2816
    %2947 = vmatmul.mubr.f32.gmra.mrb[0].mxu0 %v2815
    %v2948 = vpop.f32.mrb[0].mxu0
    %v2949 = vadd.f32 %v1461, %v2948
    %v2950 = vpop.f32.mrb[0].mxu0
    %2951 = vmatprep.mubr.f32.mxu0 %v2818
    %2952 = vmatmul.mubr.f32.gmra.mrb[0].mxu0 %v2817
    %v2953 = vpop.f32.mrb[0].mxu0
    %v2954 = vadd.f32 %v1466, %v2953
    %v2955 = vpop.f32.mrb[0].mxu0
    %2956 = vmatprep.mubr.f32.mxu0 %v2820
    %2957 = vmatmul.mubr.f32.gmra.mrb[0].mxu0 %v2819
    %v2958 = vpop.f32.mrb[0].mxu0
    %v2959 = vadd.f32 %v1471, %v2958
    %v2960 = vpop.f32.mrb[0].mxu0
    %2961 = vmatprep.mubr.f32.mxu0 %v2822
    %2962 = vmatmul.mubr.f32.gmra.mrb[0].mxu0 %v2821
    %v2963 = vpop.f32.mrb[0].mxu0
    %v2964 = vadd.f32 %v1476, %v2963
    %v2965 = vpop.f32.mrb[0].mxu0
    %2966 = vmatprep.mubr.f32.mxu0 %v2824
    %2967 = vmatmul.mubr.f32.gmra.mrb[0].mxu0 %v2823
    %v2968 = vpop.f32.mrb[0].mxu0
    %v2969 = vadd.f32 %v1481, %v2968
    %v2970 = vpop.f32.mrb[0].mxu0
    %2971 = vmatprep.mubr.f32.mxu0 %v2826
    %2972 = vmatmul.mubr.f32.gmra.mrb[0].mxu0 %v2825
    %v2973 = vpop.f32.mrb[0].mxu0
    %v2974 = vadd.f32 %v1486, %v2973
    %v2975 = vpop.f32.mrb[0].mxu0
    %2976 = vmatprep.mubr.f32.mxu0 %v2828
    %2977 = vmatmul.mubr.f32.gmra.mrb[0].mxu0 %v2827
    %v2978 = vpop.f32.mrb[0].mxu0
    %v2979 = vadd.f32 %v1491, %v2978
    %v2980 = vpop.f32.mrb[0].mxu0
    %2981 = vmatprep.mubr.f32.mxu0 %v2830
    %2982 = vmatmul.mubr.f32.gmra.mrb[0].mxu0 %v2829
    %v2983 = vpop.f32.mrb[0].mxu0
    %v2984 = vadd.f32 %v1496, %v2983
    %v2985 = vpop.f32.mrb[0].mxu0
    %2986 = vmatprep.mubr.f32.mxu0 %v2832
    %2987 = vmatmul.mubr.f32.gmra.mrb[0].mxu0 %v2831
    %v2988 = vpop.f32.mrb[0].mxu0
    %v2989 = vadd.f32 %v1501, %v2988
    %v2990 = vpop.f32.mrb[0].mxu0
    %2991 = vmatprep.mubr.f32.mxu0 %v2834
    %2992 = vmatmul.mubr.f32.gmra.mrb[0].mxu0 %v2833
    %v2993 = vpop.f32.mrb[0].mxu0
    %v2994 = vadd.f32 %v1506, %v2993
    %v2995 = vpop.f32.mrb[0].mxu0
    %2996 = vmatprep.mubr.f32.mxu0 %v2836
    %2997 = vmatmul.mubr.f32.gmra.mrb[0].mxu0 %v2835
    %v2998 = vpop.f32.mrb[0].mxu0
    %v2999 = vadd.f32 %v1511, %v2998
    %v3000 = vpop.f32.mrb[0].mxu0
    %3001 = vmatprep.mubr.f32.mxu0 %v2838
    %3002 = vmatmul.mubr.f32.gmra.mrb[0].mxu0 %v2837
    %v3003 = vpop.f32.mrb[0].mxu0
    %v3004 = vadd.f32 %v1516, %v3003
    %v3005 = vpop.f32.mrb[0].mxu0
    %3006 = vmatprep.mubr.f32.mxu0 %v2840
    %3007 = vmatmul.mubr.f32.gmra.mrb[0].mxu0 %v2839
    %v3008 = vpop.f32.mrb[0].mxu0
    %v3009 = vadd.f32 %v1521, %v3008
    %v3010 = vpop.f32.mrb[0].mxu0
    %3011 = vmatprep.mubr.f32.mxu0 %v2842
    %3012 = vmatmul.mubr.f32.gmra.mrb[0].mxu0 %v2841
    %v3013 = vpop.f32.mrb[0].mxu0
    %v3014 = vadd.f32 %v1526, %v3013
    %v3015 = vpop.f32.mrb[0].mxu0
    %3016 = vmatprep.mubr.f32.mxu0 %v2844
    %3017 = vmatmul.mubr.f32.gmra.mrb[0].mxu0 %v2843
    %v3018 = vpop.f32.mrb[0].mxu0
    %v3019 = vadd.f32 %v1531, %v3018
    %v3020 = vpop.f32.mrb[0].mxu0
    %3021 = vmatprep.mubr.f32.mxu0 %v2846
    %3022 = vmatmul.mubr.f32.gmra.mrb[0].mxu0 %v2845
    %v3023 = vpop.f32.mrb[0].mxu0
    %v3024 = vadd.f32 %v1536, %v3023
    %v3025 = vpop.f32.mrb[0].mxu0
    %3026 = vmatprep.mubr.f32.mxu0 %v2848
    %3027 = vmatmul.mubr.f32.gmra.mrb[0].mxu0 %v2847
    %v3028 = vpop.f32.mrb[0].mxu0
    %v3029 = vadd.f32 %v1541, %v3028
    %v3030 = vpop.f32.mrb[0].mxu0
    %3031 = vmatprep.mubr.f32.mxu0 %v2850
    %3032 = vmatmul.mubr.f32.gmra.mrb[0].mxu0 %v2849
    %v3033 = vpop.f32.mrb[0].mxu0
    %v3034 = vadd.f32 %v1546, %v3033
    %v3035 = vpop.f32.mrb[0].mxu0
    %3036 = vmatprep.mubr.f32.mxu0 %v2852
    %3037 = vmatmul.mubr.f32.gmra.mrb[0].mxu0 %v2851
    %v3038 = vpop.f32.mrb[0].mxu0
    %v3039 = vadd.f32 %v1551, %v3038
    %v3040 = vpop.f32.mrb[0].mxu0
    %3041 = vmatprep.mubr.f32.mxu0 %v2854
    %3042 = vmatmul.mubr.f32.gmra.mrb[0].mxu0 %v2853
    %v3043 = vpop.f32.mrb[0].mxu0
    %v3044 = vadd.f32 %v1556, %v3043
    %v3045 = vpop.f32.mrb[0].mxu0
    %3046 = vmatprep.mubr.f32.mxu0 %v2856
    %3047 = vmatmul.mubr.f32.gmra.mrb[0].mxu0 %v2855
    %v3048 = vpop.f32.mrb[0].mxu0
    %v3049 = vadd.f32 %v1561, %v3048
    %v3050 = vpop.f32.mrb[0].mxu0
    %3051 = vmatprep.mubr.f32.mxu0 %v2858
    %3052 = vmatmul.mubr.f32.gmra.mrb[0].mxu0 %v2857
    %v3053 = vpop.f32.mrb[0].mxu0
    %v3054 = vadd.f32 %v1566, %v3053
    %v3055 = vpop.f32.mrb[0].mxu0
    %3056 = vmatprep.mubr.f32.mxu0 %v2860
    %3057 = vmatmul.mubr.f32.gmra.mrb[0].mxu0 %v2859
    %v3058 = vpop.f32.mrb[0].mxu0
    %v3059 = vadd.f32 %v1571, %v3058
    %v3060 = vpop.f32.mrb[0].mxu0
    %3061 = vmatprep.mubr.f32.mxu0 %v2862
    %3062 = vmatmul.mubr.f32.gmra.mrb[0].mxu0 %v2861
    %v3063 = vpop.f32.mrb[0].mxu0
    %v3064 = vadd.f32 %v1576, %v3063
    %v3065 = vpop.f32.mrb[0].mxu0
    %3066 = vmatprep.mubr.f32.mxu0 %v2864
    %3067 = vmatmul.mubr.f32.gmra.mrb[0].mxu0 %v2863
    %v3068 = vpop.f32.mrb[0].mxu0
    %v3069 = vadd.f32 %v1581, %v3068
    %v3070 = vpop.f32.mrb[0].mxu0
    %3071 = vmatprep.mubr.f32.mxu0 %v2866
    %3072 = vmatmul.mubr.f32.gmra.mrb[0].mxu0 %v2865
    %v3073 = vpop.f32.mrb[0].mxu0
    %v3074 = vadd.f32 %v1586, %v3073
    %v3075 = vpop.f32.mrb[0].mxu0
    %3076 = vmatprep.mubr.f32.mxu0 %v2868
    %3077 = vmatmul.mubr.f32.gmra.mrb[0].mxu0 %v2867
    %v3078 = vpop.f32.mrb[0].mxu0
    %v3079 = vadd.f32 %v1591, %v3078
    %v3080 = vpop.f32.mrb[0].mxu0
    %3081 = vmatprep.mubr.f32.mxu0 %v2870
    %3082 = vmatmul.mubr.f32.gmra.mrb[0].mxu0 %v2869
    %v3083 = vpop.f32.mrb[0].mxu0
    %v3084 = vadd.f32 %v1596, %v3083
    %v3085 = vpop.f32.mrb[0].mxu0
    %3086 = vmatprep.mubr.f32.mxu0 %v2872
    %3087 = vmatmul.mubr.f32.gmra.mrb[0].mxu0 %v2871
    %v3088 = vpop.f32.mrb[0].mxu0
    %v3089 = vadd.f32 %v1601, %v3088
    %v3090 = vpop.f32.mrb[0].mxu0
    %3091 = vmatprep.mubr.f32.mxu0 %v2874
    %3092 = vmatmul.mubr.f32.gmra.mrb[0].mxu0 %v2873
    %v3093 = vpop.f32.mrb[0].mxu0
    %v3094 = vadd.f32 %v1606, %v3093
    %v3095 = vpop.f32.mrb[0].mxu0
    %3096 = vmatprep.mubr.f32.mxu0 %v2876
    %3097 = vmatmul.mubr.f32.gmra.mrb[0].mxu0 %v2875
    %v3098 = vpop.f32.mrb[0].mxu0
    %v3099 = vadd.f32 %v1611, %v3098
    %v3100 = vpop.f32.mrb[0].mxu0
    %3101 = vdwg.mxu0
    %3102 = vst [vmem:[#allocation22] sm:$0xff] %v2944
    %3103 = vst [vmem:[#allocation22 + $0x8] sm:$0xff] %v2949
    %3104 = vst [vmem:[#allocation22 + $0x10] sm:$0xff] %v2954
    %3105 = vst [vmem:[#allocation22 + $0x18] sm:$0xff] %v2959
    %3106 = vst [vmem:[#allocation22 + $0x20] sm:$0xff] %v2964
    %3107 = vst [vmem:[#allocation22 + $0x28] sm:$0xff] %v2969
    %3108 = vst [vmem:[#allocation22 + $0x30] sm:$0xff] %v2974
    %3109 = vst [vmem:[#allocation22 + $0x38] sm:$0xff] %v2979
    %3110 = vst [vmem:[#allocation22 + $0x40] sm:$0xff] %v2984
    %3111 = vst [vmem:[#allocation22 + $0x48] sm:$0xff] %v2989
    %3112 = vst [vmem:[#allocation22 + $0x50] sm:$0xff] %v2994
    %3113 = vst [vmem:[#allocation22 + $0x58] sm:$0xff] %v2999
    %3114 = vst [vmem:[#allocation22 + $0x60] sm:$0xff] %v3004
    %3115 = vst [vmem:[#allocation22 + $0x68] sm:$0xff] %v3009
    %3116 = vst [vmem:[#allocation22 + $0x70] sm:$0xff] %v3014
    %3117 = vst [vmem:[#allocation22 + $0x78] sm:$0xff] %v3019
    %3118 = vst [vmem:[#allocation22 + $0x80] sm:$0xff] %v3024
    %3119 = vst [vmem:[#allocation22 + $0x88] sm:$0xff] %v3029
    %3120 = vst [vmem:[#allocation22 + $0x90] sm:$0xff] %v3034
    %3121 = vst [vmem:[#allocation22 + $0x98] sm:$0xff] %v3039
    %3122 = vst [vmem:[#allocation22 + $0xa0] sm:$0xff] %v3044
    %3123 = vst [vmem:[#allocation22 + $0xa8] sm:$0xff] %v3049
    %3124 = vst [vmem:[#allocation22 + $0xb0] sm:$0xff] %v3054
    %3125 = vst [vmem:[#allocation22 + $0xb8] sm:$0xff] %v3059
    %3126 = vst [vmem:[#allocation22 + $0xc0] sm:$0xff] %v3064
    %3127 = vst [vmem:[#allocation22 + $0xc8] sm:$0xff] %v3069
    %3128 = vst [vmem:[#allocation22 + $0xd0] sm:$0xff] %v3074
    %3129 = vst [vmem:[#allocation22 + $0xd8] sm:$0xff] %v3079
    %3130 = vst [vmem:[#allocation22 + $0xe0] sm:$0xff] %v3084
    %3131 = vst [vmem:[#allocation22 + $0xe8] sm:$0xff] %v3089
    %3132 = vst [vmem:[#allocation22 + $0xf0] sm:$0xff] %v3094
    %3133 = vst [vmem:[#allocation22 + $0xf8] sm:$0xff] %v3099
    %3134 = vst [vmem:[#allocation23] sm:$0xff] %v2813
    %3135 = vst [vmem:[#allocation23 + $0x8] sm:$0xff] %v2814
    %3136 = vst [vmem:[#allocation23 + $0x10] sm:$0xff] %v2815
    %3137 = vst [vmem:[#allocation23 + $0x18] sm:$0xff] %v2816
    %3138 = vst [vmem:[#allocation23 + $0x20] sm:$0xff] %v2817
    %3139 = vst [vmem:[#allocation23 + $0x28] sm:$0xff] %v2818
    %3140 = vst [vmem:[#allocation23 + $0x30] sm:$0xff] %v2819
    %3141 = vst [vmem:[#allocation23 + $0x38] sm:$0xff] %v2820
    %3142 = vst [vmem:[#allocation23 + $0x40] sm:$0xff] %v2821
    %3143 = vst [vmem:[#allocation23 + $0x48] sm:$0xff] %v2822
    %3144 = vst [vmem:[#allocation23 + $0x50] sm:$0xff] %v2823
    %3145 = vst [vmem:[#allocation23 + $0x58] sm:$0xff] %v2824
    %3146 = vst [vmem:[#allocation23 + $0x60] sm:$0xff] %v2825
    %3147 = vst [vmem:[#allocation23 + $0x68] sm:$0xff] %v2826
    %3148 = vst [vmem:[#allocation23 + $0x70] sm:$0xff] %v2827
    %3149 = vst [vmem:[#allocation23 + $0x78] sm:$0xff] %v2828
    %3150 = vst [vmem:[#allocation23 + $0x80] sm:$0xff] %v2829
    %3151 = vst [vmem:[#allocation23 + $0x88] sm:$0xff] %v2830
    %3152 = vst [vmem:[#allocation23 + $0x90] sm:$0xff] %v2831
    %3153 = vst [vmem:[#allocation23 + $0x98] sm:$0xff] %v2832
    %3154 = vst [vmem:[#allocation23 + $0xa0] sm:$0xff] %v2833
    %3155 = vst [vmem:[#allocation23 + $0xa8] sm:$0xff] %v2834
    %3156 = vst [vmem:[#allocation23 + $0xb0] sm:$0xff] %v2835
    %3157 = vst [vmem:[#allocation23 + $0xb8] sm:$0xff] %v2836
    %3158 = vst [vmem:[#allocation23 + $0xc0] sm:$0xff] %v2837
    %3159 = vst [vmem:[#allocation23 + $0xc8] sm:$0xff] %v2838
    %3160 = vst [vmem:[#allocation23 + $0xd0] sm:$0xff] %v2839
    %3161 = vst [vmem:[#allocation23 + $0xd8] sm:$0xff] %v2840
    %3162 = vst [vmem:[#allocation23 + $0xe0] sm:$0xff] %v2841
    %3163 = vst [vmem:[#allocation23 + $0xe8] sm:$0xff] %v2842
    %3164 = vst [vmem:[#allocation23 + $0xf0] sm:$0xff] %v2843
    %3165 = vst [vmem:[#allocation23 + $0xf8] sm:$0xff] %v2844
    %3166 = vst [vmem:[#allocation23 + $0x100] sm:$0xff] %v2845
    %3167 = vst [vmem:[#allocation23 + $0x108] sm:$0xff] %v2846
    %3168 = vst [vmem:[#allocation23 + $0x110] sm:$0xff] %v2847
    %3169 = vst [vmem:[#allocation23 + $0x118] sm:$0xff] %v2848
    %3170 = vst [vmem:[#allocation23 + $0x120] sm:$0xff] %v2849
    %3171 = vst [vmem:[#allocation23 + $0x128] sm:$0xff] %v2850
    %3172 = vst [vmem:[#allocation23 + $0x130] sm:$0xff] %v2851
    %3173 = vst [vmem:[#allocation23 + $0x138] sm:$0xff] %v2852
    %3174 = vst [vmem:[#allocation23 + $0x140] sm:$0xff] %v2853
    %3175 = vst [vmem:[#allocation23 + $0x148] sm:$0xff] %v2854
    %3176 = vst [vmem:[#allocation23 + $0x150] sm:$0xff] %v2855
    %3177 = vst [vmem:[#allocation23 + $0x158] sm:$0xff] %v2856
    %3178 = vst [vmem:[#allocation23 + $0x160] sm:$0xff] %v2857
    %3179 = vst [vmem:[#allocation23 + $0x168] sm:$0xff] %v2858
    %3180 = vst [vmem:[#allocation23 + $0x170] sm:$0xff] %v2859
    %3181 = vst [vmem:[#allocation23 + $0x178] sm:$0xff] %v2860
    %3182 = vst [vmem:[#allocation23 + $0x180] sm:$0xff] %v2861
    %3183 = vst [vmem:[#allocation23 + $0x188] sm:$0xff] %v2862
    %3184 = vst [vmem:[#allocation23 + $0x190] sm:$0xff] %v2863
    %3185 = vst [vmem:[#allocation23 + $0x198] sm:$0xff] %v2864
    %3186 = vst [vmem:[#allocation23 + $0x1a0] sm:$0xff] %v2865
    %3187 = vst [vmem:[#allocation23 + $0x1a8] sm:$0xff] %v2866
    %3188 = vst [vmem:[#allocation23 + $0x1b0] sm:$0xff] %v2867
    %3189 = vst [vmem:[#allocation23 + $0x1b8] sm:$0xff] %v2868
    %3190 = vst [vmem:[#allocation23 + $0x1c0] sm:$0xff] %v2869
    %3191 = vst [vmem:[#allocation23 + $0x1c8] sm:$0xff] %v2870
    %3192 = vst [vmem:[#allocation23 + $0x1d0] sm:$0xff] %v2871
    %3193 = vst [vmem:[#allocation23 + $0x1d8] sm:$0xff] %v2872
    %3194 = vst [vmem:[#allocation23 + $0x1e0] sm:$0xff] %v2873
    %3195 = vst [vmem:[#allocation23 + $0x1e8] sm:$0xff] %v2874
    %3196 = vst [vmem:[#allocation23 + $0x1f0] sm:$0xff] %v2875
    %3197 = vst [vmem:[#allocation23 + $0x1f8] sm:$0xff] %v2876
    // Predicated region
    $region98: #{tpu_custom_call.1} parent=1 // pred_check
      _
    $region99: #{tpu_custom_call.1} parent=1 // pred_check_branch
      %3199 = sbr.rel (0) target = $region101
    $region100: #{tpu_custom_call.1} parent=1 // pred_region
      %s3201 = ssub.s32 4096, 4096
      %3202 = vsyncadd [#allocation4], %s3201
      %s3203 = sshll.u32 [#allocation22], 4
      %s3204 = int_to_ptr.vmem [resolvable:$true] %s3203
      %3209 = dma.vmem_to_hbm [thread:$0]  %s3204, 4096, %s12, [#allocation4], 128, 128, 8
    $region101: #{tpu_custom_call.1} parent=1 // pred_fallthru
      _
    // Predicated region
    $region102: #{tpu_custom_call.1} parent=1 // pred_check
      _
    $region103: #{tpu_custom_call.1} parent=1 // pred_check_branch
      %3211 = sbr.rel (0) target = $region105
    $region104: #{tpu_custom_call.1} parent=1 // pred_region
      %s3213 = ssub.s32 8192, 8192
      %3214 = vsyncadd [#allocation24], %s3213
      %s3215 = sshll.u32 [#allocation23], 4
      %s3216 = int_to_ptr.vmem [resolvable:$true] %s3215
      %3221 = dma.vmem_to_hbm [thread:$0]  %s3216, 8192, %s13, [#allocation24], 256, 256, 16
    $region105: #{tpu_custom_call.1} parent=1 // pred_fallthru
      _
    // Predicated region
    $region106: #{tpu_custom_call.1} parent=1 // pred_check
      _
    $region107: #{tpu_custom_call.1} parent=1 // pred_check_branch
      %3223 = sbr.rel (0) target = $region109
    $region108: #{tpu_custom_call.1} parent=1 // pred_region
      %3224 = dma.done [#allocation4], 4096
    $region109: #{tpu_custom_call.1} parent=1 // pred_fallthru
      _
    // Predicated region
    $region110: #{tpu_custom_call.1} parent=1 // pred_check
      _
    $region111: #{tpu_custom_call.1} parent=1 // pred_check_branch
      %3226 = sbr.rel (0) target = $region113
    $region112: #{tpu_custom_call.1} parent=1 // pred_region
      %3227 = dma.done [#allocation24], 8192
    $region113: #{tpu_custom_call.1} parent=1 // pred_fallthru
      _
    %3228 = vsyncpa [#allocation3], 1
    %3229 = vsyncpa [#allocation6], 1
    %3230 = vsyncpa [#allocation9], 1
    %3231 = vsyncpa [#allocation12], 1
    %3232 = vsyncpa [#allocation15], 1
    %3233 = vsyncpa [#allocation18], 1
    %3234 = vsyncpa [#allocation21], 1
    %3235 = vsyncpa [#allocation4], 1
    %3236 = vsyncpa [#allocation24], 1

</llo_original>
